<compile_context>
chip_gen: v5e
topology: v5e:2x2
jax: 0.10.0
libtpu: 0.0.40
codegen_flags: <defaults>
</compile_context>

<pallas_src>
import functools

import jax
import jax.numpy as jnp
from jax.experimental import pallas as pl
from jax.experimental.pallas import tpu as pltpu

KERNEL_POINTS = (
    (0.0, 0.0, 0.0),
    (0.7, 0.0, 0.0),
    (-0.7, 0.0, 0.0),
    (0.0, 0.7, 0.0),
    (0.0, 0.0, 0.7),
)
KSIZE = len(KERNEL_POINTS)  # kernel_size=5 in PointConv_SM

_VMEM = pltpu.MemorySpace.VMEM


def _pad8(c):
    return ((c + 7) // 8) * 8


def _vmem_specs(n):
    return [pl.BlockSpec(memory_space=_VMEM) for _ in range(n)]


# --------------------------- Pallas kernels ---------------------------------

def _pw_kernel(x_ref, w_ref, s_ref, o_ref, *, relu):
    # x:(Cin,BN)  w:(Cout,Cin) with BN scale folded in  s:(Cout,1)
    y = jnp.dot(w_ref[...], x_ref[...], preferred_element_type=jnp.float32) + s_ref[...]
    if relu:
        y = jnp.maximum(y, 0.0)
    o_ref[...] = y.astype(o_ref.dtype)


def pointwise_conv(x, w, shift, relu):
    return pl.pallas_call(
        functools.partial(_pw_kernel, relu=relu),
        out_shape=jax.ShapeDtypeStruct((w.shape[0], x.shape[1]), jnp.float32),
        in_specs=_vmem_specs(3),
        out_specs=pl.BlockSpec(memory_space=_VMEM),
    )(x, w, shift)


def _decoder_kernel(up_ref, skip_ref, wu_ref, ws_ref, s_ref, o_ref):
    # fused concat([up, skip]) + 1x1 conv (+folded BN) + ReLU
    y = (jnp.dot(wu_ref[...], up_ref[...], preferred_element_type=jnp.float32)
         + jnp.dot(ws_ref[...], skip_ref[...], preferred_element_type=jnp.float32)
         + s_ref[...])
    o_ref[...] = jnp.maximum(y, 0.0).astype(o_ref.dtype)


def decoder_conv(up, skip, wu, ws, shift):
    return pl.pallas_call(
        _decoder_kernel,
        out_shape=jax.ShapeDtypeStruct((wu.shape[0], up.shape[1]), jnp.float32),
        in_specs=_vmem_specs(5),
        out_specs=pl.BlockSpec(memory_space=_VMEM),
    )(up, skip, wu, ws, shift)


def _head_kernel(x_ref, w0_ref, s0_ref, w1_ref, s1_ref, o_ref):
    # tail0 (1x1 + BN + ReLU) -> Dropout(identity in eval) -> tail1 (1x1)
    h = jnp.maximum(
        jnp.dot(w0_ref[...], x_ref[...], preferred_element_type=jnp.float32) + s0_ref[...],
        0.0)
    y = jnp.dot(w1_ref[...], h, preferred_element_type=jnp.float32) + s1_ref[...]
    o_ref[...] = y.astype(o_ref.dtype)


def head_conv(x, w0, s0, w1, s1):
    return pl.pallas_call(
        _head_kernel,
        out_shape=jax.ShapeDtypeStruct((w1.shape[0], x.shape[1]), jnp.float32),
        in_specs=_vmem_specs(5),
        out_specs=pl.BlockSpec(memory_space=_VMEM),
    )(x, w0, s0, w1, s1)


def _make_block_kernel(n_layers, has_shortcut, tau):
    """Fully fused BasicBlock forward (pt-mask branch, body, tail, shortcut)."""

    def kernel(*refs):
        it = iter(refs)
        fea_ref = next(it)                       # (Cin_p, BN) f32
        wagg_ref = next(it)                      # (KSIZE, BN, BN) bf16
        pm0_w, pm0_s = next(it), next(it)
        pm1_w, pm1_s = next(it), next(it)
        pm2_w, pm2_s = next(it), next(it)
        body = [(next(it), next(it), next(it), next(it)) for _ in range(n_layers)]
        tail_w, tail_s = next(it), next(it)
        sc = (next(it), next(it)) if has_shortcut else None
        o_ref = next(it)

        fea = fea_ref[...]

        def kp_agg(h):
            # h: (C_p, BN) f32 with C_p % 8 == 0.  Stage-1 matmuls against the
            # precomputed gather*correlation matrices (contraction depth = BN),
            # bf16 operands, f32 accumulation; 8-aligned sublane concat.
            hb = h.astype(jnp.bfloat16)
            parts = [jnp.dot(hb, wagg_ref[s], preferred_element_type=jnp.float32)
                     for s in range(KSIZE)]
            return jnp.concatenate(parts, axis=0)        # (KSIZE*C_p, BN)

        # ---- point-mask branch: pm0 -> pm1 -> pm2 -> softmax over 2 channels
        h = jnp.maximum(
            jnp.dot(pm0_w[...], fea, preferred_element_type=jnp.float32) + pm0_s[...], 0.0)
        h = jnp.maximum(
            jnp.dot(pm1_w[...], kp_agg(h), preferred_element_type=jnp.float32) + pm1_s[...],
            0.0)
        p = jnp.dot(pm2_w[...], kp_agg(h), preferred_element_type=jnp.float32) + pm2_s[...]
        # softmax(p/tau, axis=channels)[1]  ==  sigmoid((p1 - p0)/tau)
        pt = 1.0 / (1.0 + jnp.exp((p[0:1, :] - p[1:2, :]) / tau))    # (1, BN)

        # ---- body layers with fused channel/point soft-masking -------------
        cur = fea
        buf = []
        for (w_ref, s_ref, a_ref, b_ref) in body:
            y = jnp.dot(w_ref[...], kp_agg(cur),
                        preferred_element_type=jnp.float32) + s_ref[...]
            y = jnp.maximum(y, 0.0)
            # out*a*pt + out*b == out*(a*pt + b)
            y = y * (a_ref[...] * pt + b_ref[...])
            buf.append(y)
            cur = y

        # ---- tail 1x1 conv over concat + shortcut + residual ReLU ----------
        cat = jnp.concatenate(buf, axis=0)               # (n_layers*Cout_p, BN)
        tail = jnp.dot(tail_w[...], cat, preferred_element_type=jnp.float32) + tail_s[...]
        if sc is not None:
            short = jnp.dot(sc[0][...], fea, preferred_element_type=jnp.float32) + sc[1][...]
        else:
            short = fea
        o_ref[...] = jnp.maximum(tail + short, 0.0).astype(o_ref.dtype)

    return kernel


def apply_block(prep, fea, wagg):
    cin_p, cout, cout_p = prep['cin_p'], prep['cout'], prep['cout_p']
    bn = fea.shape[1]
    if fea.shape[0] != cin_p:
        fea = jnp.pad(fea, ((0, cin_p - fea.shape[0]), (0, 0)))
    args = [fea, wagg,
            prep['pm0_w'], prep['pm0_s'],
            prep['pm1_w'], prep['pm1_s'],
            prep['pm2_w'], prep['pm2_s']]
    for lyr in prep['body']:
        args += [lyr['w'], lyr['s'], lyr['a'], lyr['b']]
    args += [prep['tail_w'], prep['tail_s']]
    has_sc = prep['sc_w'] is not None
    if has_sc:
        args += [prep['sc_w'], prep['sc_s']]
    kernel = _make_block_kernel(len(prep['body']), has_sc, prep['tau'])
    out = pl.pallas_call(
        kernel,
        out_shape=jax.ShapeDtypeStruct((cout_p, bn), jnp.float32),
        in_specs=_vmem_specs(len(args)),
        out_specs=pl.BlockSpec(memory_space=_VMEM),
    )(*args)
    return out[:cout]


# --------------------------- JAX glue ----------------------------------------

def build_wagg(xyz_c, knn_idx, radius):
    """Block-diagonal (KSIZE, B*n, B*n) gather*correlation matrices (bf16).

    wagg[s, b*n+m, b*n+t] = sum_k 1[idx[b,t,k]==m] * corr[b,s,t,k], so that
    (fea @ wagg[s])[c, b*n+t] equals the kernel-point-weighted neighbor
    aggregation sum_k fea[c, idx[b,t,k]] * corr[b,s,t,k].
    """
    B, _, n = xyz_c.shape
    kp = jnp.asarray(KERNEL_POINTS, jnp.float32)          # (KSIZE, 3)

    def one(xyz_b, idx_b):
        nb = xyz_b[:, idx_b]                              # (3, n, K)
        rel = (nb - xyz_b[:, :, None]) / radius           # (3, n, K)
        d = rel[None] - kp[:, :, None, None]              # (KSIZE, 3, n, K)
        dist = jnp.sqrt(jnp.sum(d * d, axis=1))           # (KSIZE, n, K)
        corr = jnp.maximum(1.0 - dist, 0.0)               # (KSIZE, n, K)
        onehot = jax.nn.one_hot(idx_b, n, dtype=jnp.float32)   # (n, K, n_src)
        return jnp.einsum('tkm,stk->smt', onehot, corr)   # (KSIZE, n_src, n)

    per_b = jax.vmap(one)(xyz_c, knn_idx)                 # (B, KSIZE, n, n)
    wagg = jnp.zeros((KSIZE, B * n, B * n), jnp.float32)
    for b in range(B):
        wagg = wagg.at[:, b * n:(b + 1) * n, b * n:(b + 1) * n].set(per_b[b])
    return wagg.astype(jnp.bfloat16)


def subsample_flat(fea, knn_idx, scale_factor, B, n):
    # fea:(C, B*n)  knn_idx:(B, n, K) with indices into [0, n)
    n_sub = n // scale_factor
    K = knn_idx.shape[-1]
    idx = knn_idx[:, :n_sub, :] + (jnp.arange(B) * n)[:, None, None]
    g = jnp.take(fea, idx.reshape(-1), axis=1).reshape(fea.shape[0], B * n_sub, K)
    return g.mean(axis=2)


def upsample_flat(fea, knn_idx, B, n_src):
    # fea:(C, B*n_src)  knn_idx:(B, n_tgt, 1) with indices into [0, n_src)
    idx = knn_idx[..., 0] + (jnp.arange(B) * n_src)[:, None]
    return jnp.take(fea, idx.reshape(-1), axis=1)


# --------------------------- raw parameters ----------------------------------

def init_bn(key, c):
    k1, k2, k3, k4 = jax.random.split(key, 4)
    return dict(
        gamma=(1.0 + 0.1 * jax.random.normal(k1, (c,))).astype(jnp.float32),
        beta=(0.1 * jax.random.normal(k2, (c,))).astype(jnp.float32),
        mean=(0.1 * jax.random.normal(k3, (c,))).astype(jnp.float32),
        var=(1.0 + 0.1 * jax.random.uniform(k4, (c,))).astype(jnp.float32),
    )


def init_basic_conv(key, cin, cout, n_neighbors, bias=False, bn=False):
    kw, kb, kbn = jax.random.split(key, 3)
    fan = cin * (1 if n_neighbors == 1 else KSIZE)
    std = 1.0 / (fan ** 0.5)
    if n_neighbors == 1:
        w = std * jax.random.normal(kw, (cout, cin))
    else:
        w = std * jax.random.normal(kw, (KSIZE, cout, cin))
    b = (0.1 * jax.random.normal(kb, (cout,))).astype(jnp.float32) if bias else None
    bnp = init_bn(kbn, cout) if bn else None
    return dict(w=w.astype(jnp.float32), bias=b, bn=bnp)


def init_basic_block(key, cin, cout, n_layers, n_neighbors):
    ks = iter(jax.random.split(key, n_layers + 8))
    body = [init_basic_conv(next(ks), cin if i == 0 else cout, cout,
                            n_neighbors, bias=False, bn=True)
            for i in range(n_layers)]
    pm0 = init_basic_conv(next(ks), cin, cin // 4, 1, bn=True)
    pm1 = init_basic_conv(next(ks), cin // 4, cin // 4, n_neighbors, bn=True)
    pm2 = init_basic_conv(next(ks), cin // 4, 2, n_neighbors, bn=False)
    ch_mask = jax.random.uniform(next(ks), (n_layers, cout, 2)).astype(jnp.float32)
    tail = init_basic_conv(next(ks), cout * n_layers, cout, 1, bias=True, bn=True)
    shortcut = (init_basic_conv(next(ks), cin, cout, 1, bias=False, bn=True)
                if cin != cout else None)
    return dict(body=body, pm0=pm0, pm1=pm1, pm2=pm2, ch_mask=ch_mask,
                tail=tail, shortcut=shortcut)


def init_model(key, d_in, num_classes, channels, layers, n_neighbors):
    nb = len(channels)
    ks = iter(jax.random.split(key, 8 + nb + nb))
    params = {'init': init_basic_conv(next(ks), d_in, channels[0], 1, bn=True)}
    params['encoder'] = [
        init_basic_block(next(ks), channels[0] if i == 0 else channels[i - 1],
                         channels[i], layers[i], n_neighbors)
        for i in range(nb)]
    params['decoder'] = [
        init_basic_conv(next(ks), channels[nb - 1 - i] + channels[nb - 2 - i],
                        channels[nb - 2 - i], 1, bn=True)
        for i in range(nb - 1)]
    params['tail0'] = init_basic_conv(next(ks), channels[0], 32, 1, bn=True)
    params['tail1'] = init_basic_conv(next(ks), 32, num_classes, 1, bn=False)
    return params


# --------------------------- kernel-ready parameter prep ---------------------

def _bn_fold(p):
    w = p['w']
    cout = w.shape[0] if w.ndim == 2 else w.shape[1]
    bias = p['bias'] if p['bias'] is not None else jnp.zeros((cout,), jnp.float32)
    if p['bn'] is None:
        scale = jnp.ones((cout,), jnp.float32)
        shift = bias
    else:
        bn = p['bn']
        scale = bn['gamma'] * jax.lax.rsqrt(bn['var'] + 1e-5)
        shift = bn['beta'] + scale * (bias - bn['mean'])
    return scale, shift


def prep_pw(p, cin_p=None, cout_p=None):
    """1x1 conv with BN scale folded into the weight; optional zero padding."""
    scale, shift = _bn_fold(p)
    w = p['w'] * scale[:, None]
    cout, cin = w.shape
    cin_p = cin if cin_p is None else cin_p
    cout_p = cout if cout_p is None else cout_p
    wp = jnp.zeros((cout_p, cin_p), jnp.float32).at[:cout, :cin].set(w)
    sp = jnp.zeros((cout_p, 1), jnp.float32).at[:cout, 0].set(shift)
    return wp, sp


def prep_kp(p, cin_p, cout_p):
    """(KSIZE,Cout,Cin) kernel-point weights -> flat, padded (Cout_p, KSIZE*Cin_p)."""
    scale, shift = _bn_fold(p)
    w = p['w'] * scale[None, :, None]
    _, cout, cin = w.shape
    wf = jnp.zeros((cout_p, KSIZE * cin_p), jnp.float32)
    for s in range(KSIZE):
        wf = wf.at[:cout, s * cin_p:s * cin_p + cin].set(w[s])
    sp = jnp.zeros((cout_p, 1), jnp.float32).at[:cout, 0].set(shift)
    return wf, sp


def prep_tail(p, cout, cout_p, n_layers):
    scale, shift = _bn_fold(p)
    w = p['w'] * scale[:, None]                              # (Cout, Cout*L)
    wp = jnp.zeros((cout_p, n_layers * cout_p), jnp.float32)
    for i in range(n_layers):
        wp = wp.at[:cout, i * cout_p:i * cout_p + cout].set(
            w[:, i * cout:(i + 1) * cout])
    sp = jnp.zeros((cout_p, 1), jnp.float32).at[:cout, 0].set(shift)
    return wp, sp


def prep_block(p, cin, cout, tau=1.0):
    cin_p, cout_p = _pad8(cin), _pad8(cout)
    cq_p = _pad8(cin // 4)
    out = dict(cin_p=cin_p, cout=cout, cout_p=cout_p, tau=tau)
    out['pm0_w'], out['pm0_s'] = prep_pw(p['pm0'], cin_p, cq_p)
    out['pm1_w'], out['pm1_s'] = prep_kp(p['pm1'], cq_p, cq_p)
    out['pm2_w'], out['pm2_s'] = prep_kp(p['pm2'], cq_p, 2)
    ch = jax.nn.softmax(p['ch_mask'] / tau, axis=-1)         # (L, Cout, 2)
    body = []
    for i, bp in enumerate(p['body']):
        ci_p = cin_p if i == 0 else cout_p
        w, s = prep_kp(bp, ci_p, cout_p)
        a = jnp.zeros((cout_p, 1), jnp.float32).at[:cout, 0].set(ch[i, :, 1])
        b = jnp.zeros((cout_p, 1), jnp.float32).at[:cout, 0].set(ch[i, :, 0])
        body.append(dict(w=w, s=s, a=a, b=b))
    out['body'] = body
    out['tail_w'], out['tail_s'] = prep_tail(p['tail'], cout, cout_p, len(p['body']))
    if p['shortcut'] is not None:
        out['sc_w'], out['sc_s'] = prep_pw(p['shortcut'], cin_p, cout_p)
    else:
        out['sc_w'], out['sc_s'] = None, None
    return out


# --------------------------- forward pass ------------------------------------

def apply_model(params, x, knn_idx, channels, ratio, radius):
    B, d_in, N = x.shape
    nb = len(channels)
    xyz = x[:, :3, :]

    # lane-dense layout: (C, B*N)
    x2 = jnp.transpose(x, (1, 0, 2)).reshape(d_in, B * N)

    w_i, s_i = prep_pw(params['init'])
    fea = pointwise_conv(x2, w_i, s_i, relu=True)            # (C0, B*N)

    n_pts = [N]
    for i in range(1, nb):
        n_pts.append(n_pts[-1] // ratio[i - 1])

    fea_list = []
    for i in range(nb):
        if i > 0:
            fea = subsample_flat(fea_list[-1], knn_idx[i - 1], ratio[i - 1],
                                 B, n_pts[i - 1])
        # NOTE: matches the reference `xyz[..., :fea.shape[2]]` truncation.
        wagg = build_wagg(xyz[:, :, :n_pts[i]], knn_idx[i], radius * (2 ** i))
        cin = channels[0] if i == 0 else channels[i - 1]
        prep = prep_block(params['encoder'][i], cin, channels[i])
        fea = apply_block(prep, fea, wagg)
        fea_list.append(fea)

    for i in range(nb - 1):
        up = upsample_flat(fea_list[-1], knn_idx[nb + i], B, n_pts[nb - 1 - i])
        skip = fea_list[nb - 2 - i]
        wd, sd = prep_pw(params['decoder'][i])
        c_hi = channels[nb - 1 - i]
        fea = decoder_conv(up, skip, wd[:, :c_hi], wd[:, c_hi:], sd)
        fea_list.append(fea)

    w0, s0 = prep_pw(params['tail0'])
    w1, s1 = prep_pw(params['tail1'])
    out2 = head_conv(fea_list[-1], w0, s0, w1, s1)           # (num_classes, B*N)
    nc = out2.shape[0]
    return jnp.transpose(out2.reshape(nc, B, N), (1, 0, 2))  # (B, nc, N)


# --------------------------- main ---------------------------------------------

if __name__ == "__main__":
    # small configuration consistent with SMPointSeg's constructor
    B, N, K = 2, 64, 8
    d_in, num_classes = 6, 5
    channels = [16, 32]
    layers = [2, 2]
    ratio = [4, 4]
    radius = 0.5

    key = jax.random.PRNGKey(0)
    kx, k0, k1, k2, kp = jax.random.split(key, 5)

    xyz = jax.random.uniform(kx, (B, 3, N), jnp.float32)
    feats = 0.5 * jax.random.normal(kx, (B, d_in - 3, N), jnp.float32)
    x = jnp.concatenate([xyz, feats], axis=1)                # (B, d_in, N)

    n1 = N // ratio[0]
    knn_idx = (
        jax.random.randint(k0, (B, N, K), 0, N),             # level-0 neighbors
        jax.random.randint(k1, (B, n1, K), 0, n1),           # level-1 neighbors
        jax.random.randint(k2, (B, N, 1), 0, n1),            # upsampling indices
    )

    params = init_model(kp, d_in, num_classes, channels, layers, n_neighbors=K)

    fwd = jax.jit(functools.partial(apply_model, channels=channels,
                                    ratio=ratio, radius=radius))
    out = fwd(params, x, knn_idx)
    out = jax.block_until_ready(out)

    assert out.shape == (B, num_classes, N)
    assert bool(jnp.all(jnp.isfinite(out)))
    print("KERNEL_OK")
</pallas_src>

<mosaic_0001>
module attributes {stable_mosaic.version = 11 : i64} {
  func.func @_pw_kernel(%arg0: memref<6x128xf32, #tpu.memory_space<vmem>>, %arg1: memref<16x6xf32, #tpu.memory_space<vmem>>, %arg2: memref<16x1xf32, #tpu.memory_space<vmem>>, %arg3: memref<16x128xf32, #tpu.memory_space<vmem>>) attributes {dimension_semantics = [], scalar_prefetch = 0 : i64, scratch_operands = 0 : i64, tpu.core_type = #tpu.core_type<tc>} {
    %c0 = arith.constant 0 : index
    %c0_0 = arith.constant 0 : index
    %0 = vector.load %arg1[%c0, %c0_0] : memref<16x6xf32, #tpu.memory_space<vmem>>, vector<16x6xf32>
    %c0_1 = arith.constant 0 : index
    %c0_2 = arith.constant 0 : index
    %1 = vector.load %arg0[%c0_1, %c0_2] : memref<6x128xf32, #tpu.memory_space<vmem>>, vector<6x128xf32>
    %cst = arith.constant dense<0.000000e+00> : vector<16x128xf32>
    %2 = tpu.matmul %0, %1, %cst {dimension_numbers = #tpu.dot_dimension_numbers<[1], [0], [0], [1], [0, 0, 1, 1], [], []>} : vector<16x6xf32>, vector<6x128xf32>, vector<16x128xf32> -> vector<16x128xf32>
    %c0_3 = arith.constant 0 : index
    %c0_4 = arith.constant 0 : index
    %3 = vector.load %arg2[%c0_3, %c0_4] : memref<16x1xf32, #tpu.memory_space<vmem>>, vector<16x1xf32>
    %4 = vector.broadcast %3 : vector<16x1xf32> to vector<16x128xf32>
    %5 = arith.addf %2, %4 : vector<16x128xf32>
    %cst_5 = arith.constant 0.000000e+00 : f32
    %6 = vector.broadcast %cst_5 : f32 to vector<16x128xf32>
    %7 = arith.maximumf %5, %6 : vector<16x128xf32>
    %c0_6 = arith.constant 0 : index
    %c0_7 = arith.constant 0 : index
    %8 = vector.load %arg3[%c0_6, %c0_7] : memref<16x128xf32, #tpu.memory_space<vmem>>, vector<16x128xf32>
    tpu.vector_store %arg3[%c0_6, %c0_7], %7 {strides = array<i32>} : memref<16x128xf32, #tpu.memory_space<vmem>>, vector<16x128xf32>,
    return
  }
}

module attributes {stable_mosaic.version = 11 : i64} {
  func.func @kernel(%arg0: memref<16x128xf32, #tpu.memory_space<vmem>>, %arg1: memref<5x128x128xbf16, #tpu.memory_space<vmem>>, %arg2: memref<8x16xf32, #tpu.memory_space<vmem>>, %arg3: memref<8x1xf32, #tpu.memory_space<vmem>>, %arg4: memref<8x40xf32, #tpu.memory_space<vmem>>, %arg5: memref<8x1xf32, #tpu.memory_space<vmem>>, %arg6: memref<2x40xf32, #tpu.memory_space<vmem>>, %arg7: memref<2x1xf32, #tpu.memory_space<vmem>>, %arg8: memref<16x80xf32, #tpu.memory_space<vmem>>, %arg9: memref<16x1xf32, #tpu.memory_space<vmem>>, %arg10: memref<16x1xf32, #tpu.memory_space<vmem>>, %arg11: memref<16x1xf32, #tpu.memory_space<vmem>>, %arg12: memref<16x80xf32, #tpu.memory_space<vmem>>, %arg13: memref<16x1xf32, #tpu.memory_space<vmem>>, %arg14: memref<16x1xf32, #tpu.memory_space<vmem>>, %arg15: memref<16x1xf32, #tpu.memory_space<vmem>>, %arg16: memref<16x32xf32, #tpu.memory_space<vmem>>, %arg17: memref<16x1xf32, #tpu.memory_space<vmem>>, %arg18: memref<16x128xf32, #tpu.memory_space<vmem>>) attributes {dimension_semantics = [], scalar_prefetch = 0 : i64, scratch_operands = 0 : i64, tpu.core_type = #tpu.core_type<tc>} {
    %c0 = arith.constant 0 : index
    %c0_0 = arith.constant 0 : index
    %0 = vector.load %arg0[%c0, %c0_0] : memref<16x128xf32, #tpu.memory_space<vmem>>, vector<16x128xf32>
    %c0_1 = arith.constant 0 : index
    %c0_2 = arith.constant 0 : index
    %1 = vector.load %arg2[%c0_1, %c0_2] : memref<8x16xf32, #tpu.memory_space<vmem>>, vector<8x16xf32>
    %cst = arith.constant dense<0.000000e+00> : vector<8x128xf32>
    %2 = tpu.matmul %1, %0, %cst {dimension_numbers = #tpu.dot_dimension_numbers<[1], [0], [0], [1], [0, 0, 1, 1], [], []>} : vector<8x16xf32>, vector<16x128xf32>, vector<8x128xf32> -> vector<8x128xf32>
    %c0_3 = arith.constant 0 : index
    %c0_4 = arith.constant 0 : index
    %3 = vector.load %arg3[%c0_3, %c0_4] : memref<8x1xf32, #tpu.memory_space<vmem>>, vector<8x1xf32>
    %4 = vector.broadcast %3 : vector<8x1xf32> to vector<8x128xf32>
    %5 = arith.addf %2, %4 : vector<8x128xf32>
    %cst_5 = arith.constant 0.000000e+00 : f32
    %6 = vector.broadcast %cst_5 : f32 to vector<8x128xf32>
    %7 = arith.maximumf %5, %6 : vector<8x128xf32>
    %c0_6 = arith.constant 0 : index
    %c0_7 = arith.constant 0 : index
    %8 = vector.load %arg4[%c0_6, %c0_7] : memref<8x40xf32, #tpu.memory_space<vmem>>, vector<8x40xf32>
    %9 = arith.truncf %7 : vector<8x128xf32> to vector<8x128xbf16>
    %c0_8 = arith.constant 0 : index
    %c0_9 = arith.constant 0 : index
    %c0_10 = arith.constant 0 : index
    %10 = vector.load %arg1[%c0_8, %c0_9, %c0_10] : memref<5x128x128xbf16, #tpu.memory_space<vmem>>, vector<1x128x128xbf16>
    %11 = vector.shape_cast %10 : vector<1x128x128xbf16> to vector<128x128xbf16>
    %cst_11 = arith.constant dense<0.000000e+00> : vector<8x128xf32>
    %12 = tpu.matmul %9, %11, %cst_11 {dimension_numbers = #tpu.dot_dimension_numbers<[1], [0], [0], [1], [0, 0, 1, 1], [], []>} : vector<8x128xbf16>, vector<128x128xbf16>, vector<8x128xf32> -> vector<8x128xf32>
    %c1 = arith.constant 1 : index
    %c0_12 = arith.constant 0 : index
    %c0_13 = arith.constant 0 : index
    %13 = vector.load %arg1[%c1, %c0_12, %c0_13] : memref<5x128x128xbf16, #tpu.memory_space<vmem>>, vector<1x128x128xbf16>
    %14 = vector.shape_cast %13 : vector<1x128x128xbf16> to vector<128x128xbf16>
    %cst_14 = arith.constant dense<0.000000e+00> : vector<8x128xf32>
    %15 = tpu.matmul %9, %14, %cst_14 {dimension_numbers = #tpu.dot_dimension_numbers<[1], [0], [0], [1], [0, 0, 1, 1], [], []>} : vector<8x128xbf16>, vector<128x128xbf16>, vector<8x128xf32> -> vector<8x128xf32>
    %c2 = arith.constant 2 : index
    %c0_15 = arith.constant 0 : index
    %c0_16 = arith.constant 0 : index
    %16 = vector.load %arg1[%c2, %c0_15, %c0_16] : memref<5x128x128xbf16, #tpu.memory_space<vmem>>, vector<1x128x128xbf16>
    %17 = vector.shape_cast %16 : vector<1x128x128xbf16> to vector<128x128xbf16>
    %cst_17 = arith.constant dense<0.000000e+00> : vector<8x128xf32>
    %18 = tpu.matmul %9, %17, %cst_17 {dimension_numbers = #tpu.dot_dimension_numbers<[1], [0], [0], [1], [0, 0, 1, 1], [], []>} : vector<8x128xbf16>, vector<128x128xbf16>, vector<8x128xf32> -> vector<8x128xf32>
    %c3 = arith.constant 3 : index
    %c0_18 = arith.constant 0 : index
    %c0_19 = arith.constant 0 : index
    %19 = vector.load %arg1[%c3, %c0_18, %c0_19] : memref<5x128x128xbf16, #tpu.memory_space<vmem>>, vector<1x128x128xbf16>
    %20 = vector.shape_cast %19 : vector<1x128x128xbf16> to vector<128x128xbf16>
    %cst_20 = arith.constant dense<0.000000e+00> : vector<8x128xf32>
    %21 = tpu.matmul %9, %20, %cst_20 {dimension_numbers = #tpu.dot_dimension_numbers<[1], [0], [0], [1], [0, 0, 1, 1], [], []>} : vector<8x128xbf16>, vector<128x128xbf16>, vector<8x128xf32> -> vector<8x128xf32>
    %c4 = arith.constant 4 : index
    %c0_21 = arith.constant 0 : index
    %c0_22 = arith.constant 0 : index
    %22 = vector.load %arg1[%c4, %c0_21, %c0_22] : memref<5x128x128xbf16, #tpu.memory_space<vmem>>, vector<1x128x128xbf16>
    %23 = vector.shape_cast %22 : vector<1x128x128xbf16> to vector<128x128xbf16>
    %cst_23 = arith.constant dense<0.000000e+00> : vector<8x128xf32>
    %24 = tpu.matmul %9, %23, %cst_23 {dimension_numbers = #tpu.dot_dimension_numbers<[1], [0], [0], [1], [0, 0, 1, 1], [], []>} : vector<8x128xbf16>, vector<128x128xbf16>, vector<8x128xf32> -> vector<8x128xf32>
    %25 = tpu.concatenate %12, %15, %18, %21, %24 in 0 : vector<8x128xf32>, vector<8x128xf32>, vector<8x128xf32>, vector<8x128xf32>, vector<8x128xf32> -> vector<40x128xf32>
    %cst_24 = arith.constant dense<0.000000e+00> : vector<8x128xf32>
    %26 = tpu.matmul %8, %25, %cst_24 {dimension_numbers = #tpu.dot_dimension_numbers<[1], [0], [0], [1], [0, 0, 1, 1], [], []>} : vector<8x40xf32>, vector<40x128xf32>, vector<8x128xf32> -> vector<8x128xf32>
    %c0_25 = arith.constant 0 : index
    %c0_26 = arith.constant 0 : index
    %27 = vector.load %arg5[%c0_25, %c0_26] : memref<8x1xf32, #tpu.memory_space<vmem>>, vector<8x1xf32>
    %28 = vector.broadcast %27 : vector<8x1xf32> to vector<8x128xf32>
    %29 = arith.addf %26, %28 : vector<8x128xf32>
    %cst_27 = arith.constant 0.000000e+00 : f32
    %30 = vector.broadcast %cst_27 : f32 to vector<8x128xf32>
    %31 = arith.maximumf %29, %30 : vector<8x128xf32>
    %c0_28 = arith.constant 0 : index
    %c0_29 = arith.constant 0 : index
    %32 = vector.load %arg6[%c0_28, %c0_29] : memref<2x40xf32, #tpu.memory_space<vmem>>, vector<2x40xf32>
    %33 = arith.truncf %31 : vector<8x128xf32> to vector<8x128xbf16>
    %c0_30 = arith.constant 0 : index
    %c0_31 = arith.constant 0 : index
    %c0_32 = arith.constant 0 : index
    %34 = vector.load %arg1[%c0_30, %c0_31, %c0_32] : memref<5x128x128xbf16, #tpu.memory_space<vmem>>, vector<1x128x128xbf16>
    %35 = vector.shape_cast %34 : vector<1x128x128xbf16> to vector<128x128xbf16>
    %cst_33 = arith.constant dense<0.000000e+00> : vector<8x128xf32>
    %36 = tpu.matmul %33, %35, %cst_33 {dimension_numbers = #tpu.dot_dimension_numbers<[1], [0], [0], [1], [0, 0, 1, 1], [], []>} : vector<8x128xbf16>, vector<128x128xbf16>, vector<8x128xf32> -> vector<8x128xf32>
    %c1_34 = arith.constant 1 : index
    %c0_35 = arith.constant 0 : index
    %c0_36 = arith.constant 0 : index
    %37 = vector.load %arg1[%c1_34, %c0_35, %c0_36] : memref<5x128x128xbf16, #tpu.memory_space<vmem>>, vector<1x128x128xbf16>
    %38 = vector.shape_cast %37 : vector<1x128x128xbf16> to vector<128x128xbf16>
    %cst_37 = arith.constant dense<0.000000e+00> : vector<8x128xf32>
    %39 = tpu.matmul %33, %38, %cst_37 {dimension_numbers = #tpu.dot_dimension_numbers<[1], [0], [0], [1], [0, 0, 1, 1], [], []>} : vector<8x128xbf16>, vector<128x128xbf16>, vector<8x128xf32> -> vector<8x128xf32>
    %c2_38 = arith.constant 2 : index
    %c0_39 = arith.constant 0 : index
    %c0_40 = arith.constant 0 : index
    %40 = vector.load %arg1[%c2_38, %c0_39, %c0_40] : memref<5x128x128xbf16, #tpu.memory_space<vmem>>, vector<1x128x128xbf16>
    %41 = vector.shape_cast %40 : vector<1x128x128xbf16> to vector<128x128xbf16>
    %cst_41 = arith.constant dense<0.000000e+00> : vector<8x128xf32>
    %42 = tpu.matmul %33, %41, %cst_41 {dimension_numbers = #tpu.dot_dimension_numbers<[1], [0], [0], [1], [0, 0, 1, 1], [], []>} : vector<8x128xbf16>, vector<128x128xbf16>, vector<8x128xf32> -> vector<8x128xf32>
    %c3_42 = arith.constant 3 : index
    %c0_43 = arith.constant 0 : index
    %c0_44 = arith.constant 0 : index
    %43 = vector.load %arg1[%c3_42, %c0_43, %c0_44] : memref<5x128x128xbf16, #tpu.memory_space<vmem>>, vector<1x128x128xbf16>
    %44 = vector.shape_cast %43 : vector<1x128x128xbf16> to vector<128x128xbf16>
    %cst_45 = arith.constant dense<0.000000e+00> : vector<8x128xf32>
    %45 = tpu.matmul %33, %44, %cst_45 {dimension_numbers = #tpu.dot_dimension_numbers<[1], [0], [0], [1], [0, 0, 1, 1], [], []>} : vector<8x128xbf16>, vector<128x128xbf16>, vector<8x128xf32> -> vector<8x128xf32>
    %c4_46 = arith.constant 4 : index
    %c0_47 = arith.constant 0 : index
    %c0_48 = arith.constant 0 : index
    %46 = vector.load %arg1[%c4_46, %c0_47, %c0_48] : memref<5x128x128xbf16, #tpu.memory_space<vmem>>, vector<1x128x128xbf16>
    %47 = vector.shape_cast %46 : vector<1x128x128xbf16> to vector<128x128xbf16>
    %cst_49 = arith.constant dense<0.000000e+00> : vector<8x128xf32>
    %48 = tpu.matmul %33, %47, %cst_49 {dimension_numbers = #tpu.dot_dimension_numbers<[1], [0], [0], [1], [0, 0, 1, 1], [], []>} : vector<8x128xbf16>, vector<128x128xbf16>, vector<8x128xf32> -> vector<8x128xf32>
    %49 = tpu.concatenate %36, %39, %42, %45, %48 in 0 : vector<8x128xf32>, vector<8x128xf32>, vector<8x128xf32>, vector<8x128xf32>, vector<8x128xf32> -> vector<40x128xf32>
    %cst_50 = arith.constant dense<0.000000e+00> : vector<2x128xf32>
    %50 = tpu.matmul %32, %49, %cst_50 {dimension_numbers = #tpu.dot_dimension_numbers<[1], [0], [0], [1], [0, 0, 1, 1], [], []>} : vector<2x40xf32>, vector<40x128xf32>, vector<2x128xf32> -> vector<2x128xf32>
    %c0_51 = arith.constant 0 : index
    %c0_52 = arith.constant 0 : index
    %51 = vector.load %arg7[%c0_51, %c0_52] : memref<2x1xf32, #tpu.memory_space<vmem>>, vector<2x1xf32>
    %52 = vector.broadcast %51 : vector<2x1xf32> to vector<2x128xf32>
    %53 = arith.addf %50, %52 : vector<2x128xf32>
    %54 = vector.extract_strided_slice %53 {offsets = [0, 0], sizes = [1, 128], strides = [1, 1]} : vector<2x128xf32> to vector<1x128xf32>
    %55 = vector.extract_strided_slice %53 {offsets = [1, 0], sizes = [1, 128], strides = [1, 1]} : vector<2x128xf32> to vector<1x128xf32>
    %56 = arith.subf %54, %55 : vector<1x128xf32>
    %cst_53 = arith.constant 1.000000e+00 : f32
    %57 = vector.broadcast %cst_53 : f32 to vector<1x128xf32>
    %58 = arith.divf %56, %57 : vector<1x128xf32>
    %59 = math.exp %58 : vector<1x128xf32>
    %cst_54 = arith.constant 1.000000e+00 : f32
    %60 = vector.broadcast %cst_54 : f32 to vector<1x128xf32>
    %61 = arith.addf %60, %59 : vector<1x128xf32>
    %cst_55 = arith.constant 1.000000e+00 : f32
    %62 = vector.broadcast %cst_55 : f32 to vector<1x128xf32>
    %63 = arith.divf %62, %61 : vector<1x128xf32>
    %c0_56 = arith.constant 0 : index
    %c0_57 = arith.constant 0 : index
    %64 = vector.load %arg8[%c0_56, %c0_57] : memref<16x80xf32, #tpu.memory_space<vmem>>, vector<16x80xf32>
    %65 = arith.truncf %0 : vector<16x128xf32> to vector<16x128xbf16>
    %c0_58 = arith.constant 0 : index
    %c0_59 = arith.constant 0 : index
    %c0_60 = arith.constant 0 : index
    %66 = vector.load %arg1[%c0_58, %c0_59, %c0_60] : memref<5x128x128xbf16, #tpu.memory_space<vmem>>, vector<1x128x128xbf16>
    %67 = vector.shape_cast %66 : vector<1x128x128xbf16> to vector<128x128xbf16>
    %cst_61 = arith.constant dense<0.000000e+00> : vector<16x128xf32>
    %68 = tpu.matmul %65, %67, %cst_61 {dimension_numbers = #tpu.dot_dimension_numbers<[1], [0], [0], [1], [0, 0, 1, 1], [], []>} : vector<16x128xbf16>, vector<128x128xbf16>, vector<16x128xf32> -> vector<16x128xf32>
    %c1_62 = arith.constant 1 : index
    %c0_63 = arith.constant 0 : index
    %c0_64 = arith.constant 0 : index
    %69 = vector.load %arg1[%c1_62, %c0_63, %c0_64] : memref<5x128x128xbf16, #tpu.memory_space<vmem>>, vector<1x128x128xbf16>
    %70 = vector.shape_cast %69 : vector<1x128x128xbf16> to vector<128x128xbf16>
    %cst_65 = arith.constant dense<0.000000e+00> : vector<16x128xf32>
    %71 = tpu.matmul %65, %70, %cst_65 {dimension_numbers = #tpu.dot_dimension_numbers<[1], [0], [0], [1], [0, 0, 1, 1], [], []>} : vector<16x128xbf16>, vector<128x128xbf16>, vector<16x128xf32> -> vector<16x128xf32>
    %c2_66 = arith.constant 2 : index
    %c0_67 = arith.constant 0 : index
    %c0_68 = arith.constant 0 : index
    %72 = vector.load %arg1[%c2_66, %c0_67, %c0_68] : memref<5x128x128xbf16, #tpu.memory_space<vmem>>, vector<1x128x128xbf16>
    %73 = vector.shape_cast %72 : vector<1x128x128xbf16> to vector<128x128xbf16>
    %cst_69 = arith.constant dense<0.000000e+00> : vector<16x128xf32>
    %74 = tpu.matmul %65, %73, %cst_69 {dimension_numbers = #tpu.dot_dimension_numbers<[1], [0], [0], [1], [0, 0, 1, 1], [], []>} : vector<16x128xbf16>, vector<128x128xbf16>, vector<16x128xf32> -> vector<16x128xf32>
    %c3_70 = arith.constant 3 : index
    %c0_71 = arith.constant 0 : index
    %c0_72 = arith.constant 0 : index
    %75 = vector.load %arg1[%c3_70, %c0_71, %c0_72] : memref<5x128x128xbf16, #tpu.memory_space<vmem>>, vector<1x128x128xbf16>
    %76 = vector.shape_cast %75 : vector<1x128x128xbf16> to vector<128x128xbf16>
    %cst_73 = arith.constant dense<0.000000e+00> : vector<16x128xf32>
    %77 = tpu.matmul %65, %76, %cst_73 {dimension_numbers = #tpu.dot_dimension_numbers<[1], [0], [0], [1], [0, 0, 1, 1], [], []>} : vector<16x128xbf16>, vector<128x128xbf16>, vector<16x128xf32> -> vector<16x128xf32>
    %c4_74 = arith.constant 4 : index
    %c0_75 = arith.constant 0 : index
    %c0_76 = arith.constant 0 : index
    %78 = vector.load %arg1[%c4_74, %c0_75, %c0_76] : memref<5x128x128xbf16, #tpu.memory_space<vmem>>, vector<1x128x128xbf16>
    %79 = vector.shape_cast %78 : vector<1x128x128xbf16> to vector<128x128xbf16>
    %cst_77 = arith.constant dense<0.000000e+00> : vector<16x128xf32>
    %80 = tpu.matmul %65, %79, %cst_77 {dimension_numbers = #tpu.dot_dimension_numbers<[1], [0], [0], [1], [0, 0, 1, 1], [], []>} : vector<16x128xbf16>, vector<128x128xbf16>, vector<16x128xf32> -> vector<16x128xf32>
    %81 = tpu.concatenate %68, %71, %74, %77, %80 in 0 : vector<16x128xf32>, vector<16x128xf32>, vector<16x128xf32>, vector<16x128xf32>, vector<16x128xf32> -> vector<80x128xf32>
    %cst_78 = arith.constant dense<0.000000e+00> : vector<16x128xf32>
    %82 = tpu.matmul %64, %81, %cst_78 {dimension_numbers = #tpu.dot_dimension_numbers<[1], [0], [0], [1], [0, 0, 1, 1], [], []>} : vector<16x80xf32>, vector<80x128xf32>, vector<16x128xf32> -> vector<16x128xf32>
    %c0_79 = arith.constant 0 : index
    %c0_80 = arith.constant 0 : index
    %83 = vector.load %arg9[%c0_79, %c0_80] : memref<16x1xf32, #tpu.memory_space<vmem>>, vector<16x1xf32>
    %84 = vector.broadcast %83 : vector<16x1xf32> to vector<16x128xf32>
    %85 = arith.addf %82, %84 : vector<16x128xf32>
    %cst_81 = arith.constant 0.000000e+00 : f32
    %86 = vector.broadcast %cst_81 : f32 to vector<16x128xf32>
    %87 = arith.maximumf %85, %86 : vector<16x128xf32>
    %c0_82 = arith.constant 0 : index
    %c0_83 = arith.constant 0 : index
    %88 = vector.load %arg10[%c0_82, %c0_83] : memref<16x1xf32, #tpu.memory_space<vmem>>, vector<16x1xf32>
    %89 = vector.broadcast %88 : vector<16x1xf32> to vector<16x128xf32>
    %90 = vector.broadcast %63 : vector<1x128xf32> to vector<16x128xf32>
    %91 = arith.mulf %89, %90 : vector<16x128xf32>
    %c0_84 = arith.constant 0 : index
    %c0_85 = arith.constant 0 : index
    %92 = vector.load %arg11[%c0_84, %c0_85] : memref<16x1xf32, #tpu.memory_space<vmem>>, vector<16x1xf32>
    %93 = vector.broadcast %92 : vector<16x1xf32> to vector<16x128xf32>
    %94 = arith.addf %91, %93 : vector<16x128xf32>
    %95 = arith.mulf %87, %94 : vector<16x128xf32>
    %c0_86 = arith.constant 0 : index
    %c0_87 = arith.constant 0 : index
    %96 = vector.load %arg12[%c0_86, %c0_87] : memref<16x80xf32, #tpu.memory_space<vmem>>, vector<16x80xf32>
    %97 = arith.truncf %95 : vector<16x128xf32> to vector<16x128xbf16>
    %c0_88 = arith.constant 0 : index
    %c0_89 = arith.constant 0 : index
    %c0_90 = arith.constant 0 : index
    %98 = vector.load %arg1[%c0_88, %c0_89, %c0_90] : memref<5x128x128xbf16, #tpu.memory_space<vmem>>, vector<1x128x128xbf16>
    %99 = vector.shape_cast %98 : vector<1x128x128xbf16> to vector<128x128xbf16>
    %cst_91 = arith.constant dense<0.000000e+00> : vector<16x128xf32>
    %100 = tpu.matmul %97, %99, %cst_91 {dimension_numbers = #tpu.dot_dimension_numbers<[1], [0], [0], [1], [0, 0, 1, 1], [], []>} : vector<16x128xbf16>, vector<128x128xbf16>, vector<16x128xf32> -> vector<16x128xf32>
    %c1_92 = arith.constant 1 : index
    %c0_93 = arith.constant 0 : index
    %c0_94 = arith.constant 0 : index
    %101 = vector.load %arg1[%c1_92, %c0_93, %c0_94] : memref<5x128x128xbf16, #tpu.memory_space<vmem>>, vector<1x128x128xbf16>
    %102 = vector.shape_cast %101 : vector<1x128x128xbf16> to vector<128x128xbf16>
    %cst_95 = arith.constant dense<0.000000e+00> : vector<16x128xf32>
    %103 = tpu.matmul %97, %102, %cst_95 {dimension_numbers = #tpu.dot_dimension_numbers<[1], [0], [0], [1], [0, 0, 1, 1], [], []>} : vector<16x128xbf16>, vector<128x128xbf16>, vector<16x128xf32> -> vector<16x128xf32>
    %c2_96 = arith.constant 2 : index
    %c0_97 = arith.constant 0 : index
    %c0_98 = arith.constant 0 : index
    %104 = vector.load %arg1[%c2_96, %c0_97, %c0_98] : memref<5x128x128xbf16, #tpu.memory_space<vmem>>, vector<1x128x128xbf16>
    %105 = vector.shape_cast %104 : vector<1x128x128xbf16> to vector<128x128xbf16>
    %cst_99 = arith.constant dense<0.000000e+00> : vector<16x128xf32>
    %106 = tpu.matmul %97, %105, %cst_99 {dimension_numbers = #tpu.dot_dimension_numbers<[1], [0], [0], [1], [0, 0, 1, 1], [], []>} : vector<16x128xbf16>, vector<128x128xbf16>, vector<16x128xf32> -> vector<16x128xf32>
    %c3_100 = arith.constant 3 : index
    %c0_101 = arith.constant 0 : index
    %c0_102 = arith.constant 0 : index
    %107 = vector.load %arg1[%c3_100, %c0_101, %c0_102] : memref<5x128x128xbf16, #tpu.memory_space<vmem>>, vector<1x128x128xbf16>
    %108 = vector.shape_cast %107 : vector<1x128x128xbf16> to vector<128x128xbf16>
    %cst_103 = arith.constant dense<0.000000e+00> : vector<16x128xf32>
    %109 = tpu.matmul %97, %108, %cst_103 {dimension_numbers = #tpu.dot_dimension_numbers<[1], [0], [0], [1], [0, 0, 1, 1], [], []>} : vector<16x128xbf16>, vector<128x128xbf16>, vector<16x128xf32> -> vector<16x128xf32>
    %c4_104 = arith.constant 4 : index
    %c0_105 = arith.constant 0 : index
    %c0_106 = arith.constant 0 : index
    %110 = vector.load %arg1[%c4_104, %c0_105, %c0_106] : memref<5x128x128xbf16, #tpu.memory_space<vmem>>, vector<1x128x128xbf16>
    %111 = vector.shape_cast %110 : vector<1x128x128xbf16> to vector<128x128xbf16>
    %cst_107 = arith.constant dense<0.000000e+00> : vector<16x128xf32>
    %112 = tpu.matmul %97, %111, %cst_107 {dimension_numbers = #tpu.dot_dimension_numbers<[1], [0], [0], [1], [0, 0, 1, 1], [], []>} : vector<16x128xbf16>, vector<128x128xbf16>, vector<16x128xf32> -> vector<16x128xf32>
    %113 = tpu.concatenate %100, %103, %106, %109, %112 in 0 : vector<16x128xf32>, vector<16x128xf32>, vector<16x128xf32>, vector<16x128xf32>, vector<16x128xf32> -> vector<80x128xf32>
    %cst_108 = arith.constant dense<0.000000e+00> : vector<16x128xf32>
    %114 = tpu.matmul %96, %113, %cst_108 {dimension_numbers = #tpu.dot_dimension_numbers<[1], [0], [0], [1], [0, 0, 1, 1], [], []>} : vector<16x80xf32>, vector<80x128xf32>, vector<16x128xf32> -> vector<16x128xf32>
    %c0_109 = arith.constant 0 : index
    %c0_110 = arith.constant 0 : index
    %115 = vector.load %arg13[%c0_109, %c0_110] : memref<16x1xf32, #tpu.memory_space<vmem>>, vector<16x1xf32>
    %116 = vector.broadcast %115 : vector<16x1xf32> to vector<16x128xf32>
    %117 = arith.addf %114, %116 : vector<16x128xf32>
    %cst_111 = arith.constant 0.000000e+00 : f32
    %118 = vector.broadcast %cst_111 : f32 to vector<16x128xf32>
    %119 = arith.maximumf %117, %118 : vector<16x128xf32>
    %c0_112 = arith.constant 0 : index
    %c0_113 = arith.constant 0 : index
    %120 = vector.load %arg14[%c0_112, %c0_113] : memref<16x1xf32, #tpu.memory_space<vmem>>, vector<16x1xf32>
    %121 = vector.broadcast %120 : vector<16x1xf32> to vector<16x128xf32>
    %122 = vector.broadcast %63 : vector<1x128xf32> to vector<16x128xf32>
    %123 = arith.mulf %121, %122 : vector<16x128xf32>
    %c0_114 = arith.constant 0 : index
    %c0_115 = arith.constant 0 : index
    %124 = vector.load %arg15[%c0_114, %c0_115] : memref<16x1xf32, #tpu.memory_space<vmem>>, vector<16x1xf32>
    %125 = vector.broadcast %124 : vector<16x1xf32> to vector<16x128xf32>
    %126 = arith.addf %123, %125 : vector<16x128xf32>
    %127 = arith.mulf %119, %126 : vector<16x128xf32>
    %128 = tpu.concatenate %95, %127 in 0 : vector<16x128xf32>, vector<16x128xf32> -> vector<32x128xf32>
    %c0_116 = arith.constant 0 : index
    %c0_117 = arith.constant 0 : index
    %129 = vector.load %arg16[%c0_116, %c0_117] : memref<16x32xf32, #tpu.memory_space<vmem>>, vector<16x32xf32>
    %cst_118 = arith.constant dense<0.000000e+00> : vector<16x128xf32>
    %130 = tpu.matmul %129, %128, %cst_118 {dimension_numbers = #tpu.dot_dimension_numbers<[1], [0], [0], [1], [0, 0, 1, 1], [], []>} : vector<16x32xf32>, vector<32x128xf32>, vector<16x128xf32> -> vector<16x128xf32>
    %c0_119 = arith.constant 0 : index
    %c0_120 = arith.constant 0 : index
    %131 = vector.load %arg17[%c0_119, %c0_120] : memref<16x1xf32, #tpu.memory_space<vmem>>, vector<16x1xf32>
    %132 = vector.broadcast %131 : vector<16x1xf32> to vector<16x128xf32>
    %133 = arith.addf %130, %132 : vector<16x128xf32>
    %134 = arith.addf %133, %0 : vector<16x128xf32>
    %cst_121 = arith.constant 0.000000e+00 : f32
    %135 = vector.broadcast %cst_121 : f32 to vector<16x128xf32>
    %136 = arith.maximumf %134, %135 : vector<16x128xf32>
    %c0_122 = arith.constant 0 : index
    %c0_123 = arith.constant 0 : index
    %137 = vector.load %arg18[%c0_122, %c0_123] : memref<16x128xf32, #tpu.memory_space<vmem>>, vector<16x128xf32>
    tpu.vector_store %arg18[%c0_122, %c0_123], %136 {strides = array<i32>} : memref<16x128xf32, #tpu.memory_space<vmem>>, vector<16x128xf32>,
    return
  }
}

module attributes {stable_mosaic.version = 11 : i64} {
  func.func @kernel(%arg0: memref<16x32xf32, #tpu.memory_space<vmem>>, %arg1: memref<5x32x32xbf16, #tpu.memory_space<vmem>>, %arg2: memref<8x16xf32, #tpu.memory_space<vmem>>, %arg3: memref<8x1xf32, #tpu.memory_space<vmem>>, %arg4: memref<8x40xf32, #tpu.memory_space<vmem>>, %arg5: memref<8x1xf32, #tpu.memory_space<vmem>>, %arg6: memref<2x40xf32, #tpu.memory_space<vmem>>, %arg7: memref<2x1xf32, #tpu.memory_space<vmem>>, %arg8: memref<32x80xf32, #tpu.memory_space<vmem>>, %arg9: memref<32x1xf32, #tpu.memory_space<vmem>>, %arg10: memref<32x1xf32, #tpu.memory_space<vmem>>, %arg11: memref<32x1xf32, #tpu.memory_space<vmem>>, %arg12: memref<32x160xf32, #tpu.memory_space<vmem>>, %arg13: memref<32x1xf32, #tpu.memory_space<vmem>>, %arg14: memref<32x1xf32, #tpu.memory_space<vmem>>, %arg15: memref<32x1xf32, #tpu.memory_space<vmem>>, %arg16: memref<32x64xf32, #tpu.memory_space<vmem>>, %arg17: memref<32x1xf32, #tpu.memory_space<vmem>>, %arg18: memref<32x16xf32, #tpu.memory_space<vmem>>, %arg19: memref<32x1xf32, #tpu.memory_space<vmem>>, %arg20: memref<32x32xf32, #tpu.memory_space<vmem>>) attributes {dimension_semantics = [], scalar_prefetch = 0 : i64, scratch_operands = 0 : i64, tpu.core_type = #tpu.core_type<tc>} {
    %c0 = arith.constant 0 : index
    %c0_0 = arith.constant 0 : index
    %0 = vector.load %arg0[%c0, %c0_0] : memref<16x32xf32, #tpu.memory_space<vmem>>, vector<16x32xf32>
    %c0_1 = arith.constant 0 : index
    %c0_2 = arith.constant 0 : index
    %1 = vector.load %arg2[%c0_1, %c0_2] : memref<8x16xf32, #tpu.memory_space<vmem>>, vector<8x16xf32>
    %cst = arith.constant dense<0.000000e+00> : vector<8x32xf32>
    %2 = tpu.matmul %1, %0, %cst {dimension_numbers = #tpu.dot_dimension_numbers<[1], [0], [0], [1], [0, 0, 1, 1], [], []>} : vector<8x16xf32>, vector<16x32xf32>, vector<8x32xf32> -> vector<8x32xf32>
    %c0_3 = arith.constant 0 : index
    %c0_4 = arith.constant 0 : index
    %3 = vector.load %arg3[%c0_3, %c0_4] : memref<8x1xf32, #tpu.memory_space<vmem>>, vector<8x1xf32>
    %4 = vector.broadcast %3 : vector<8x1xf32> to vector<8x32xf32>
    %5 = arith.addf %2, %4 : vector<8x32xf32>
    %cst_5 = arith.constant 0.000000e+00 : f32
    %6 = vector.broadcast %cst_5 : f32 to vector<8x32xf32>
    %7 = arith.maximumf %5, %6 : vector<8x32xf32>
    %c0_6 = arith.constant 0 : index
    %c0_7 = arith.constant 0 : index
    %8 = vector.load %arg4[%c0_6, %c0_7] : memref<8x40xf32, #tpu.memory_space<vmem>>, vector<8x40xf32>
    %9 = arith.truncf %7 : vector<8x32xf32> to vector<8x32xbf16>
    %c0_8 = arith.constant 0 : index
    %c0_9 = arith.constant 0 : index
    %c0_10 = arith.constant 0 : index
    %10 = vector.load %arg1[%c0_8, %c0_9, %c0_10] : memref<5x32x32xbf16, #tpu.memory_space<vmem>>, vector<1x32x32xbf16>
    %11 = vector.shape_cast %10 : vector<1x32x32xbf16> to vector<32x32xbf16>
    %cst_11 = arith.constant dense<0.000000e+00> : vector<8x32xf32>
    %12 = tpu.matmul %9, %11, %cst_11 {dimension_numbers = #tpu.dot_dimension_numbers<[1], [0], [0], [1], [0, 0, 1, 1], [], []>} : vector<8x32xbf16>, vector<32x32xbf16>, vector<8x32xf32> -> vector<8x32xf32>
    %c1 = arith.constant 1 : index
    %c0_12 = arith.constant 0 : index
    %c0_13 = arith.constant 0 : index
    %13 = vector.load %arg1[%c1, %c0_12, %c0_13] : memref<5x32x32xbf16, #tpu.memory_space<vmem>>, vector<1x32x32xbf16>
    %14 = vector.shape_cast %13 : vector<1x32x32xbf16> to vector<32x32xbf16>
    %cst_14 = arith.constant dense<0.000000e+00> : vector<8x32xf32>
    %15 = tpu.matmul %9, %14, %cst_14 {dimension_numbers = #tpu.dot_dimension_numbers<[1], [0], [0], [1], [0, 0, 1, 1], [], []>} : vector<8x32xbf16>, vector<32x32xbf16>, vector<8x32xf32> -> vector<8x32xf32>
    %c2 = arith.constant 2 : index
    %c0_15 = arith.constant 0 : index
    %c0_16 = arith.constant 0 : index
    %16 = vector.load %arg1[%c2, %c0_15, %c0_16] : memref<5x32x32xbf16, #tpu.memory_space<vmem>>, vector<1x32x32xbf16>
    %17 = vector.shape_cast %16 : vector<1x32x32xbf16> to vector<32x32xbf16>
    %cst_17 = arith.constant dense<0.000000e+00> : vector<8x32xf32>
    %18 = tpu.matmul %9, %17, %cst_17 {dimension_numbers = #tpu.dot_dimension_numbers<[1], [0], [0], [1], [0, 0, 1, 1], [], []>} : vector<8x32xbf16>, vector<32x32xbf16>, vector<8x32xf32> -> vector<8x32xf32>
    %c3 = arith.constant 3 : index
    %c0_18 = arith.constant 0 : index
    %c0_19 = arith.constant 0 : index
    %19 = vector.load %arg1[%c3, %c0_18, %c0_19] : memref<5x32x32xbf16, #tpu.memory_space<vmem>>, vector<1x32x32xbf16>
    %20 = vector.shape_cast %19 : vector<1x32x32xbf16> to vector<32x32xbf16>
    %cst_20 = arith.constant dense<0.000000e+00> : vector<8x32xf32>
    %21 = tpu.matmul %9, %20, %cst_20 {dimension_numbers = #tpu.dot_dimension_numbers<[1], [0], [0], [1], [0, 0, 1, 1], [], []>} : vector<8x32xbf16>, vector<32x32xbf16>, vector<8x32xf32> -> vector<8x32xf32>
    %c4 = arith.constant 4 : index
    %c0_21 = arith.constant 0 : index
    %c0_22 = arith.constant 0 : index
    %22 = vector.load %arg1[%c4, %c0_21, %c0_22] : memref<5x32x32xbf16, #tpu.memory_space<vmem>>, vector<1x32x32xbf16>
    %23 = vector.shape_cast %22 : vector<1x32x32xbf16> to vector<32x32xbf16>
    %cst_23 = arith.constant dense<0.000000e+00> : vector<8x32xf32>
    %24 = tpu.matmul %9, %23, %cst_23 {dimension_numbers = #tpu.dot_dimension_numbers<[1], [0], [0], [1], [0, 0, 1, 1], [], []>} : vector<8x32xbf16>, vector<32x32xbf16>, vector<8x32xf32> -> vector<8x32xf32>
    %25 = tpu.concatenate %12, %15, %18, %21, %24 in 0 : vector<8x32xf32>, vector<8x32xf32>, vector<8x32xf32>, vector<8x32xf32>, vector<8x32xf32> -> vector<40x32xf32>
    %cst_24 = arith.constant dense<0.000000e+00> : vector<8x32xf32>
    %26 = tpu.matmul %8, %25, %cst_24 {dimension_numbers = #tpu.dot_dimension_numbers<[1], [0], [0], [1], [0, 0, 1, 1], [], []>} : vector<8x40xf32>, vector<40x32xf32>, vector<8x32xf32> -> vector<8x32xf32>
    %c0_25 = arith.constant 0 : index
    %c0_26 = arith.constant 0 : index
    %27 = vector.load %arg5[%c0_25, %c0_26] : memref<8x1xf32, #tpu.memory_space<vmem>>, vector<8x1xf32>
    %28 = vector.broadcast %27 : vector<8x1xf32> to vector<8x32xf32>
    %29 = arith.addf %26, %28 : vector<8x32xf32>
    %cst_27 = arith.constant 0.000000e+00 : f32
    %30 = vector.broadcast %cst_27 : f32 to vector<8x32xf32>
    %31 = arith.maximumf %29, %30 : vector<8x32xf32>
    %c0_28 = arith.constant 0 : index
    %c0_29 = arith.constant 0 : index
    %32 = vector.load %arg6[%c0_28, %c0_29] : memref<2x40xf32, #tpu.memory_space<vmem>>, vector<2x40xf32>
    %33 = arith.truncf %31 : vector<8x32xf32> to vector<8x32xbf16>
    %c0_30 = arith.constant 0 : index
    %c0_31 = arith.constant 0 : index
    %c0_32 = arith.constant 0 : index
    %34 = vector.load %arg1[%c0_30, %c0_31, %c0_32] : memref<5x32x32xbf16, #tpu.memory_space<vmem>>, vector<1x32x32xbf16>
    %35 = vector.shape_cast %34 : vector<1x32x32xbf16> to vector<32x32xbf16>
    %cst_33 = arith.constant dense<0.000000e+00> : vector<8x32xf32>
    %36 = tpu.matmul %33, %35, %cst_33 {dimension_numbers = #tpu.dot_dimension_numbers<[1], [0], [0], [1], [0, 0, 1, 1], [], []>} : vector<8x32xbf16>, vector<32x32xbf16>, vector<8x32xf32> -> vector<8x32xf32>
    %c1_34 = arith.constant 1 : index
    %c0_35 = arith.constant 0 : index
    %c0_36 = arith.constant 0 : index
    %37 = vector.load %arg1[%c1_34, %c0_35, %c0_36] : memref<5x32x32xbf16, #tpu.memory_space<vmem>>, vector<1x32x32xbf16>
    %38 = vector.shape_cast %37 : vector<1x32x32xbf16> to vector<32x32xbf16>
    %cst_37 = arith.constant dense<0.000000e+00> : vector<8x32xf32>
    %39 = tpu.matmul %33, %38, %cst_37 {dimension_numbers = #tpu.dot_dimension_numbers<[1], [0], [0], [1], [0, 0, 1, 1], [], []>} : vector<8x32xbf16>, vector<32x32xbf16>, vector<8x32xf32> -> vector<8x32xf32>
    %c2_38 = arith.constant 2 : index
    %c0_39 = arith.constant 0 : index
    %c0_40 = arith.constant 0 : index
    %40 = vector.load %arg1[%c2_38, %c0_39, %c0_40] : memref<5x32x32xbf16, #tpu.memory_space<vmem>>, vector<1x32x32xbf16>
    %41 = vector.shape_cast %40 : vector<1x32x32xbf16> to vector<32x32xbf16>
    %cst_41 = arith.constant dense<0.000000e+00> : vector<8x32xf32>
    %42 = tpu.matmul %33, %41, %cst_41 {dimension_numbers = #tpu.dot_dimension_numbers<[1], [0], [0], [1], [0, 0, 1, 1], [], []>} : vector<8x32xbf16>, vector<32x32xbf16>, vector<8x32xf32> -> vector<8x32xf32>
    %c3_42 = arith.constant 3 : index
    %c0_43 = arith.constant 0 : index
    %c0_44 = arith.constant 0 : index
    %43 = vector.load %arg1[%c3_42, %c0_43, %c0_44] : memref<5x32x32xbf16, #tpu.memory_space<vmem>>, vector<1x32x32xbf16>
    %44 = vector.shape_cast %43 : vector<1x32x32xbf16> to vector<32x32xbf16>
    %cst_45 = arith.constant dense<0.000000e+00> : vector<8x32xf32>
    %45 = tpu.matmul %33, %44, %cst_45 {dimension_numbers = #tpu.dot_dimension_numbers<[1], [0], [0], [1], [0, 0, 1, 1], [], []>} : vector<8x32xbf16>, vector<32x32xbf16>, vector<8x32xf32> -> vector<8x32xf32>
    %c4_46 = arith.constant 4 : index
    %c0_47 = arith.constant 0 : index
    %c0_48 = arith.constant 0 : index
    %46 = vector.load %arg1[%c4_46, %c0_47, %c0_48] : memref<5x32x32xbf16, #tpu.memory_space<vmem>>, vector<1x32x32xbf16>
    %47 = vector.shape_cast %46 : vector<1x32x32xbf16> to vector<32x32xbf16>
    %cst_49 = arith.constant dense<0.000000e+00> : vector<8x32xf32>
    %48 = tpu.matmul %33, %47, %cst_49 {dimension_numbers = #tpu.dot_dimension_numbers<[1], [0], [0], [1], [0, 0, 1, 1], [], []>} : vector<8x32xbf16>, vector<32x32xbf16>, vector<8x32xf32> -> vector<8x32xf32>
    %49 = tpu.concatenate %36, %39, %42, %45, %48 in 0 : vector<8x32xf32>, vector<8x32xf32>, vector<8x32xf32>, vector<8x32xf32>, vector<8x32xf32> -> vector<40x32xf32>
    %cst_50 = arith.constant dense<0.000000e+00> : vector<2x32xf32>
    %50 = tpu.matmul %32, %49, %cst_50 {dimension_numbers = #tpu.dot_dimension_numbers<[1], [0], [0], [1], [0, 0, 1, 1], [], []>} : vector<2x40xf32>, vector<40x32xf32>, vector<2x32xf32> -> vector<2x32xf32>
    %c0_51 = arith.constant 0 : index
    %c0_52 = arith.constant 0 : index
    %51 = vector.load %arg7[%c0_51, %c0_52] : memref<2x1xf32, #tpu.memory_space<vmem>>, vector<2x1xf32>
    %52 = vector.broadcast %51 : vector<2x1xf32> to vector<2x32xf32>
    %53 = arith.addf %50, %52 : vector<2x32xf32>
    %54 = vector.extract_strided_slice %53 {offsets = [0, 0], sizes = [1, 32], strides = [1, 1]} : vector<2x32xf32> to vector<1x32xf32>
    %55 = vector.extract_strided_slice %53 {offsets = [1, 0], sizes = [1, 32], strides = [1, 1]} : vector<2x32xf32> to vector<1x32xf32>
    %56 = arith.subf %54, %55 : vector<1x32xf32>
    %cst_53 = arith.constant 1.000000e+00 : f32
    %57 = vector.broadcast %cst_53 : f32 to vector<1x32xf32>
    %58 = arith.divf %56, %57 : vector<1x32xf32>
    %59 = math.exp %58 : vector<1x32xf32>
    %cst_54 = arith.constant 1.000000e+00 : f32
    %60 = vector.broadcast %cst_54 : f32 to vector<1x32xf32>
    %61 = arith.addf %60, %59 : vector<1x32xf32>
    %cst_55 = arith.constant 1.000000e+00 : f32
    %62 = vector.broadcast %cst_55 : f32 to vector<1x32xf32>
    %63 = arith.divf %62, %61 : vector<1x32xf32>
    %c0_56 = arith.constant 0 : index
    %c0_57 = arith.constant 0 : index
    %64 = vector.load %arg8[%c0_56, %c0_57] : memref<32x80xf32, #tpu.memory_space<vmem>>, vector<32x80xf32>
    %65 = arith.truncf %0 : vector<16x32xf32> to vector<16x32xbf16>
    %c0_58 = arith.constant 0 : index
    %c0_59 = arith.constant 0 : index
    %c0_60 = arith.constant 0 : index
    %66 = vector.load %arg1[%c0_58, %c0_59, %c0_60] : memref<5x32x32xbf16, #tpu.memory_space<vmem>>, vector<1x32x32xbf16>
    %67 = vector.shape_cast %66 : vector<1x32x32xbf16> to vector<32x32xbf16>
    %cst_61 = arith.constant dense<0.000000e+00> : vector<16x32xf32>
    %68 = tpu.matmul %65, %67, %cst_61 {dimension_numbers = #tpu.dot_dimension_numbers<[1], [0], [0], [1], [0, 0, 1, 1], [], []>} : vector<16x32xbf16>, vector<32x32xbf16>, vector<16x32xf32> -> vector<16x32xf32>
    %c1_62 = arith.constant 1 : index
    %c0_63 = arith.constant 0 : index
    %c0_64 = arith.constant 0 : index
    %69 = vector.load %arg1[%c1_62, %c0_63, %c0_64] : memref<5x32x32xbf16, #tpu.memory_space<vmem>>, vector<1x32x32xbf16>
    %70 = vector.shape_cast %69 : vector<1x32x32xbf16> to vector<32x32xbf16>
    %cst_65 = arith.constant dense<0.000000e+00> : vector<16x32xf32>
    %71 = tpu.matmul %65, %70, %cst_65 {dimension_numbers = #tpu.dot_dimension_numbers<[1], [0], [0], [1], [0, 0, 1, 1], [], []>} : vector<16x32xbf16>, vector<32x32xbf16>, vector<16x32xf32> -> vector<16x32xf32>
    %c2_66 = arith.constant 2 : index
    %c0_67 = arith.constant 0 : index
    %c0_68 = arith.constant 0 : index
    %72 = vector.load %arg1[%c2_66, %c0_67, %c0_68] : memref<5x32x32xbf16, #tpu.memory_space<vmem>>, vector<1x32x32xbf16>
    %73 = vector.shape_cast %72 : vector<1x32x32xbf16> to vector<32x32xbf16>
    %cst_69 = arith.constant dense<0.000000e+00> : vector<16x32xf32>
    %74 = tpu.matmul %65, %73, %cst_69 {dimension_numbers = #tpu.dot_dimension_numbers<[1], [0], [0], [1], [0, 0, 1, 1], [], []>} : vector<16x32xbf16>, vector<32x32xbf16>, vector<16x32xf32> -> vector<16x32xf32>
    %c3_70 = arith.constant 3 : index
    %c0_71 = arith.constant 0 : index
    %c0_72 = arith.constant 0 : index
    %75 = vector.load %arg1[%c3_70, %c0_71, %c0_72] : memref<5x32x32xbf16, #tpu.memory_space<vmem>>, vector<1x32x32xbf16>
    %76 = vector.shape_cast %75 : vector<1x32x32xbf16> to vector<32x32xbf16>
    %cst_73 = arith.constant dense<0.000000e+00> : vector<16x32xf32>
    %77 = tpu.matmul %65, %76, %cst_73 {dimension_numbers = #tpu.dot_dimension_numbers<[1], [0], [0], [1], [0, 0, 1, 1], [], []>} : vector<16x32xbf16>, vector<32x32xbf16>, vector<16x32xf32> -> vector<16x32xf32>
    %c4_74 = arith.constant 4 : index
    %c0_75 = arith.constant 0 : index
    %c0_76 = arith.constant 0 : index
    %78 = vector.load %arg1[%c4_74, %c0_75, %c0_76] : memref<5x32x32xbf16, #tpu.memory_space<vmem>>, vector<1x32x32xbf16>
    %79 = vector.shape_cast %78 : vector<1x32x32xbf16> to vector<32x32xbf16>
    %cst_77 = arith.constant dense<0.000000e+00> : vector<16x32xf32>
    %80 = tpu.matmul %65, %79, %cst_77 {dimension_numbers = #tpu.dot_dimension_numbers<[1], [0], [0], [1], [0, 0, 1, 1], [], []>} : vector<16x32xbf16>, vector<32x32xbf16>, vector<16x32xf32> -> vector<16x32xf32>
    %81 = tpu.concatenate %68, %71, %74, %77, %80 in 0 : vector<16x32xf32>, vector<16x32xf32>, vector<16x32xf32>, vector<16x32xf32>, vector<16x32xf32> -> vector<80x32xf32>
    %cst_78 = arith.constant dense<0.000000e+00> : vector<32x32xf32>
    %82 = tpu.matmul %64, %81, %cst_78 {dimension_numbers = #tpu.dot_dimension_numbers<[1], [0], [0], [1], [0, 0, 1, 1], [], []>} : vector<32x80xf32>, vector<80x32xf32>, vector<32x32xf32> -> vector<32x32xf32>
    %c0_79 = arith.constant 0 : index
    %c0_80 = arith.constant 0 : index
    %83 = vector.load %arg9[%c0_79, %c0_80] : memref<32x1xf32, #tpu.memory_space<vmem>>, vector<32x1xf32>
    %84 = vector.broadcast %83 : vector<32x1xf32> to vector<32x32xf32>
    %85 = arith.addf %82, %84 : vector<32x32xf32>
    %cst_81 = arith.constant 0.000000e+00 : f32
    %86 = vector.broadcast %cst_81 : f32 to vector<32x32xf32>
    %87 = arith.maximumf %85, %86 : vector<32x32xf32>
    %c0_82 = arith.constant 0 : index
    %c0_83 = arith.constant 0 : index
    %88 = vector.load %arg10[%c0_82, %c0_83] : memref<32x1xf32, #tpu.memory_space<vmem>>, vector<32x1xf32>
    %89 = vector.broadcast %88 : vector<32x1xf32> to vector<32x32xf32>
    %90 = vector.broadcast %63 : vector<1x32xf32> to vector<32x32xf32>
    %91 = arith.mulf %89, %90 : vector<32x32xf32>
    %c0_84 = arith.constant 0 : index
    %c0_85 = arith.constant 0 : index
    %92 = vector.load %arg11[%c0_84, %c0_85] : memref<32x1xf32, #tpu.memory_space<vmem>>, vector<32x1xf32>
    %93 = vector.broadcast %92 : vector<32x1xf32> to vector<32x32xf32>
    %94 = arith.addf %91, %93 : vector<32x32xf32>
    %95 = arith.mulf %87, %94 : vector<32x32xf32>
    %c0_86 = arith.constant 0 : index
    %c0_87 = arith.constant 0 : index
    %96 = vector.load %arg12[%c0_86, %c0_87] : memref<32x160xf32, #tpu.memory_space<vmem>>, vector<32x160xf32>
    %97 = arith.truncf %95 : vector<32x32xf32> to vector<32x32xbf16>
    %c0_88 = arith.constant 0 : index
    %c0_89 = arith.constant 0 : index
    %c0_90 = arith.constant 0 : index
    %98 = vector.load %arg1[%c0_88, %c0_89, %c0_90] : memref<5x32x32xbf16, #tpu.memory_space<vmem>>, vector<1x32x32xbf16>
    %99 = vector.shape_cast %98 : vector<1x32x32xbf16> to vector<32x32xbf16>
    %cst_91 = arith.constant dense<0.000000e+00> : vector<32x32xf32>
    %100 = tpu.matmul %97, %99, %cst_91 {dimension_numbers = #tpu.dot_dimension_numbers<[1], [0], [0], [1], [0, 0, 1, 1], [], []>} : vector<32x32xbf16>, vector<32x32xbf16>, vector<32x32xf32> -> vector<32x32xf32>
    %c1_92 = arith.constant 1 : index
    %c0_93 = arith.constant 0 : index
    %c0_94 = arith.constant 0 : index
    %101 = vector.load %arg1[%c1_92, %c0_93, %c0_94] : memref<5x32x32xbf16, #tpu.memory_space<vmem>>, vector<1x32x32xbf16>
    %102 = vector.shape_cast %101 : vector<1x32x32xbf16> to vector<32x32xbf16>
    %cst_95 = arith.constant dense<0.000000e+00> : vector<32x32xf32>
    %103 = tpu.matmul %97, %102, %cst_95 {dimension_numbers = #tpu.dot_dimension_numbers<[1], [0], [0], [1], [0, 0, 1, 1], [], []>} : vector<32x32xbf16>, vector<32x32xbf16>, vector<32x32xf32> -> vector<32x32xf32>
    %c2_96 = arith.constant 2 : index
    %c0_97 = arith.constant 0 : index
    %c0_98 = arith.constant 0 : index
    %104 = vector.load %arg1[%c2_96, %c0_97, %c0_98] : memref<5x32x32xbf16, #tpu.memory_space<vmem>>, vector<1x32x32xbf16>
    %105 = vector.shape_cast %104 : vector<1x32x32xbf16> to vector<32x32xbf16>
    %cst_99 = arith.constant dense<0.000000e+00> : vector<32x32xf32>
    %106 = tpu.matmul %97, %105, %cst_99 {dimension_numbers = #tpu.dot_dimension_numbers<[1], [0], [0], [1], [0, 0, 1, 1], [], []>} : vector<32x32xbf16>, vector<32x32xbf16>, vector<32x32xf32> -> vector<32x32xf32>
    %c3_100 = arith.constant 3 : index
    %c0_101 = arith.constant 0 : index
    %c0_102 = arith.constant 0 : index
    %107 = vector.load %arg1[%c3_100, %c0_101, %c0_102] : memref<5x32x32xbf16, #tpu.memory_space<vmem>>, vector<1x32x32xbf16>
    %108 = vector.shape_cast %107 : vector<1x32x32xbf16> to vector<32x32xbf16>
    %cst_103 = arith.constant dense<0.000000e+00> : vector<32x32xf32>
    %109 = tpu.matmul %97, %108, %cst_103 {dimension_numbers = #tpu.dot_dimension_numbers<[1], [0], [0], [1], [0, 0, 1, 1], [], []>} : vector<32x32xbf16>, vector<32x32xbf16>, vector<32x32xf32> -> vector<32x32xf32>
    %c4_104 = arith.constant 4 : index
    %c0_105 = arith.constant 0 : index
    %c0_106 = arith.constant 0 : index
    %110 = vector.load %arg1[%c4_104, %c0_105, %c0_106] : memref<5x32x32xbf16, #tpu.memory_space<vmem>>, vector<1x32x32xbf16>
    %111 = vector.shape_cast %110 : vector<1x32x32xbf16> to vector<32x32xbf16>
    %cst_107 = arith.constant dense<0.000000e+00> : vector<32x32xf32>
    %112 = tpu.matmul %97, %111, %cst_107 {dimension_numbers = #tpu.dot_dimension_numbers<[1], [0], [0], [1], [0, 0, 1, 1], [], []>} : vector<32x32xbf16>, vector<32x32xbf16>, vector<32x32xf32> -> vector<32x32xf32>
    %113 = tpu.concatenate %100, %103, %106, %109, %112 in 0 : vector<32x32xf32>, vector<32x32xf32>, vector<32x32xf32>, vector<32x32xf32>, vector<32x32xf32> -> vector<160x32xf32>
    %cst_108 = arith.constant dense<0.000000e+00> : vector<32x32xf32>
    %114 = tpu.matmul %96, %113, %cst_108 {dimension_numbers = #tpu.dot_dimension_numbers<[1], [0], [0], [1], [0, 0, 1, 1], [], []>} : vector<32x160xf32>, vector<160x32xf32>, vector<32x32xf32> -> vector<32x32xf32>
    %c0_109 = arith.constant 0 : index
    %c0_110 = arith.constant 0 : index
    %115 = vector.load %arg13[%c0_109, %c0_110] : memref<32x1xf32, #tpu.memory_space<vmem>>, vector<32x1xf32>
    %116 = vector.broadcast %115 : vector<32x1xf32> to vector<32x32xf32>
    %117 = arith.addf %114, %116 : vector<32x32xf32>
    %cst_111 = arith.constant 0.000000e+00 : f32
    %118 = vector.broadcast %cst_111 : f32 to vector<32x32xf32>
    %119 = arith.maximumf %117, %118 : vector<32x32xf32>
    %c0_112 = arith.constant 0 : index
    %c0_113 = arith.constant 0 : index
    %120 = vector.load %arg14[%c0_112, %c0_113] : memref<32x1xf32, #tpu.memory_space<vmem>>, vector<32x1xf32>
    %121 = vector.broadcast %120 : vector<32x1xf32> to vector<32x32xf32>
    %122 = vector.broadcast %63 : vector<1x32xf32> to vector<32x32xf32>
    %123 = arith.mulf %121, %122 : vector<32x32xf32>
    %c0_114 = arith.constant 0 : index
    %c0_115 = arith.constant 0 : index
    %124 = vector.load %arg15[%c0_114, %c0_115] : memref<32x1xf32, #tpu.memory_space<vmem>>, vector<32x1xf32>
    %125 = vector.broadcast %124 : vector<32x1xf32> to vector<32x32xf32>
    %126 = arith.addf %123, %125 : vector<32x32xf32>
    %127 = arith.mulf %119, %126 : vector<32x32xf32>
    %128 = tpu.concatenate %95, %127 in 0 : vector<32x32xf32>, vector<32x32xf32> -> vector<64x32xf32>
    %c0_116 = arith.constant 0 : index
    %c0_117 = arith.constant 0 : index
    %129 = vector.load %arg16[%c0_116, %c0_117] : memref<32x64xf32, #tpu.memory_space<vmem>>, vector<32x64xf32>
    %cst_118 = arith.constant dense<0.000000e+00> : vector<32x32xf32>
    %130 = tpu.matmul %129, %128, %cst_118 {dimension_numbers = #tpu.dot_dimension_numbers<[1], [0], [0], [1], [0, 0, 1, 1], [], []>} : vector<32x64xf32>, vector<64x32xf32>, vector<32x32xf32> -> vector<32x32xf32>
    %c0_119 = arith.constant 0 : index
    %c0_120 = arith.constant 0 : index
    %131 = vector.load %arg17[%c0_119, %c0_120] : memref<32x1xf32, #tpu.memory_space<vmem>>, vector<32x1xf32>
    %132 = vector.broadcast %131 : vector<32x1xf32> to vector<32x32xf32>
    %133 = arith.addf %130, %132 : vector<32x32xf32>
    %c0_121 = arith.constant 0 : index
    %c0_122 = arith.constant 0 : index
    %134 = vector.load %arg18[%c0_121, %c0_122] : memref<32x16xf32, #tpu.memory_space<vmem>>, vector<32x16xf32>
    %cst_123 = arith.constant dense<0.000000e+00> : vector<32x32xf32>
    %135 = tpu.matmul %134, %0, %cst_123 {dimension_numbers = #tpu.dot_dimension_numbers<[1], [0], [0], [1], [0, 0, 1, 1], [], []>} : vector<32x16xf32>, vector<16x32xf32>, vector<32x32xf32> -> vector<32x32xf32>
    %c0_124 = arith.constant 0 : index
    %c0_125 = arith.constant 0 : index
    %136 = vector.load %arg19[%c0_124, %c0_125] : memref<32x1xf32, #tpu.memory_space<vmem>>, vector<32x1xf32>
    %137 = vector.broadcast %136 : vector<32x1xf32> to vector<32x32xf32>
    %138 = arith.addf %135, %137 : vector<32x32xf32>
    %139 = arith.addf %133, %138 : vector<32x32xf32>
    %cst_126 = arith.constant 0.000000e+00 : f32
    %140 = vector.broadcast %cst_126 : f32 to vector<32x32xf32>
    %141 = arith.maximumf %139, %140 : vector<32x32xf32>
    %c0_127 = arith.constant 0 : index
    %c0_128 = arith.constant 0 : index
    %142 = vector.load %arg20[%c0_127, %c0_128] : memref<32x32xf32, #tpu.memory_space<vmem>>, vector<32x32xf32>
    tpu.vector_store %arg20[%c0_127, %c0_128], %141 {strides = array<i32>} : memref<32x32xf32, #tpu.memory_space<vmem>>, vector<32x32xf32>,
    return
  }
}

module attributes {stable_mosaic.version = 11 : i64} {
  func.func @_head_kernel(%arg0: memref<16x128xf32, #tpu.memory_space<vmem>>, %arg1: memref<32x16xf32, #tpu.memory_space<vmem>>, %arg2: memref<32x1xf32, #tpu.memory_space<vmem>>, %arg3: memref<5x32xf32, #tpu.memory_space<vmem>>, %arg4: memref<5x1xf32, #tpu.memory_space<vmem>>, %arg5: memref<5x128xf32, #tpu.memory_space<vmem>>) attributes {dimension_semantics = [], scalar_prefetch = 0 : i64, scratch_operands = 0 : i64, tpu.core_type = #tpu.core_type<tc>} {
    %c0 = arith.constant 0 : index
    %c0_0 = arith.constant 0 : index
    %0 = vector.load %arg1[%c0, %c0_0] : memref<32x16xf32, #tpu.memory_space<vmem>>, vector<32x16xf32>
    %c0_1 = arith.constant 0 : index
    %c0_2 = arith.constant 0 : index
    %1 = vector.load %arg0[%c0_1, %c0_2] : memref<16x128xf32, #tpu.memory_space<vmem>>, vector<16x128xf32>
    %cst = arith.constant dense<0.000000e+00> : vector<32x128xf32>
    %2 = tpu.matmul %0, %1, %cst {dimension_numbers = #tpu.dot_dimension_numbers<[1], [0], [0], [1], [0, 0, 1, 1], [], []>} : vector<32x16xf32>, vector<16x128xf32>, vector<32x128xf32> -> vector<32x128xf32>
    %c0_3 = arith.constant 0 : index
    %c0_4 = arith.constant 0 : index
    %3 = vector.load %arg2[%c0_3, %c0_4] : memref<32x1xf32, #tpu.memory_space<vmem>>, vector<32x1xf32>
    %4 = vector.broadcast %3 : vector<32x1xf32> to vector<32x128xf32>
    %5 = arith.addf %2, %4 : vector<32x128xf32>
    %cst_5 = arith.constant 0.000000e+00 : f32
    %6 = vector.broadcast %cst_5 : f32 to vector<32x128xf32>
    %7 = arith.maximumf %5, %6 : vector<32x128xf32>
    %c0_6 = arith.constant 0 : index
    %c0_7 = arith.constant 0 : index
    %8 = vector.load %arg3[%c0_6, %c0_7] : memref<5x32xf32, #tpu.memory_space<vmem>>, vector<5x32xf32>
    %cst_8 = arith.constant dense<0.000000e+00> : vector<5x128xf32>
    %9 = tpu.matmul %8, %7, %cst_8 {dimension_numbers = #tpu.dot_dimension_numbers<[1], [0], [0], [1], [0, 0, 1, 1], [], []>} : vector<5x32xf32>, vector<32x128xf32>, vector<5x128xf32> -> vector<5x128xf32>
    %c0_9 = arith.constant 0 : index
    %c0_10 = arith.constant 0 : index
    %10 = vector.load %arg4[%c0_9, %c0_10] : memref<5x1xf32, #tpu.memory_space<vmem>>, vector<5x1xf32>
    %11 = vector.broadcast %10 : vector<5x1xf32> to vector<5x128xf32>
    %12 = arith.addf %9, %11 : vector<5x128xf32>
    %c0_11 = arith.constant 0 : index
    %c0_12 = arith.constant 0 : index
    %13 = vector.load %arg5[%c0_11, %c0_12] : memref<5x128xf32, #tpu.memory_space<vmem>>, vector<5x128xf32>
    tpu.vector_store %arg5[%c0_11, %c0_12], %12 {strides = array<i32>} : memref<5x128xf32, #tpu.memory_space<vmem>>, vector<5x128xf32>,
    return
  }
}

module attributes {stable_mosaic.version = 11 : i64} {
  func.func @_decoder_kernel(%arg0: memref<32x128xf32, #tpu.memory_space<vmem>>, %arg1: memref<16x128xf32, #tpu.memory_space<vmem>>, %arg2: memref<16x32xf32, #tpu.memory_space<vmem>>, %arg3: memref<16x16xf32, #tpu.memory_space<vmem>>, %arg4: memref<16x1xf32, #tpu.memory_space<vmem>>, %arg5: memref<16x128xf32, #tpu.memory_space<vmem>>) attributes {dimension_semantics = [], scalar_prefetch = 0 : i64, scratch_operands = 0 : i64, tpu.core_type = #tpu.core_type<tc>} {
    %c0 = arith.constant 0 : index
    %c0_0 = arith.constant 0 : index
    %0 = vector.load %arg2[%c0, %c0_0] : memref<16x32xf32, #tpu.memory_space<vmem>>, vector<16x32xf32>
    %c0_1 = arith.constant 0 : index
    %c0_2 = arith.constant 0 : index
    %1 = vector.load %arg0[%c0_1, %c0_2] : memref<32x128xf32, #tpu.memory_space<vmem>>, vector<32x128xf32>
    %cst = arith.constant dense<0.000000e+00> : vector<16x128xf32>
    %2 = tpu.matmul %0, %1, %cst {dimension_numbers = #tpu.dot_dimension_numbers<[1], [0], [0], [1], [0, 0, 1, 1], [], []>} : vector<16x32xf32>, vector<32x128xf32>, vector<16x128xf32> -> vector<16x128xf32>
    %c0_3 = arith.constant 0 : index
    %c0_4 = arith.constant 0 : index
    %3 = vector.load %arg3[%c0_3, %c0_4] : memref<16x16xf32, #tpu.memory_space<vmem>>, vector<16x16xf32>
    %c0_5 = arith.constant 0 : index
    %c0_6 = arith.constant 0 : index
    %4 = vector.load %arg1[%c0_5, %c0_6] : memref<16x128xf32, #tpu.memory_space<vmem>>, vector<16x128xf32>
    %cst_7 = arith.constant dense<0.000000e+00> : vector<16x128xf32>
    %5 = tpu.matmul %3, %4, %cst_7 {dimension_numbers = #tpu.dot_dimension_numbers<[1], [0], [0], [1], [0, 0, 1, 1], [], []>} : vector<16x16xf32>, vector<16x128xf32>, vector<16x128xf32> -> vector<16x128xf32>
    %6 = arith.addf %2, %5 : vector<16x128xf32>
    %c0_8 = arith.constant 0 : index
    %c0_9 = arith.constant 0 : index
    %7 = vector.load %arg4[%c0_8, %c0_9] : memref<16x1xf32, #tpu.memory_space<vmem>>, vector<16x1xf32>
    %8 = vector.broadcast %7 : vector<16x1xf32> to vector<16x128xf32>
    %9 = arith.addf %6, %8 : vector<16x128xf32>
    %cst_10 = arith.constant 0.000000e+00 : f32
    %10 = vector.broadcast %cst_10 : f32 to vector<16x128xf32>
    %11 = arith.maximumf %9, %10 : vector<16x128xf32>
    %c0_11 = arith.constant 0 : index
    %c0_12 = arith.constant 0 : index
    %12 = vector.load %arg5[%c0_11, %c0_12] : memref<16x128xf32, #tpu.memory_space<vmem>>, vector<16x128xf32>
    tpu.vector_store %arg5[%c0_11, %c0_12], %11 {strides = array<i32>} : memref<16x128xf32, #tpu.memory_space<vmem>>, vector<16x128xf32>,
    return
  }
}

</mosaic_0001>

<llo_original>
// kernel: apply_model.5
$region0: #{apply_model.5}
  #allocation0 [shape = 'u32[]', space=smem, size = 0x4, offset = 0x4, fixed_abs, tag = 'smem constant byte address 0x4 - core index']
  #allocation1 [shape = 'u32[72,128]{1,0:T(1,128)}', space=vmem, size = 0x9000, scoped, tag = 'internal scratch']
  %s0 = inlined_call_operand.vmem [shape: f32[6,128], index: 0, kind: input, shape index: {}]
  %s1 = inlined_call_operand.vmem [shape: f32[16,6], index: 1, kind: input, shape index: {}]
  %s2 = inlined_call_operand.vmem [shape: f32[16,1], index: 2, kind: input, shape index: {}]
  %s3 = inlined_call_operand.vmem [shape: f32[16,128], index: 3, kind: output, shape index: {}]
  %s4 = sld [smem:[#allocation0]]
  $region22: #{apply_model.5} parent=0
    _
  %s6 = ssub.s32 1, %s4
  %s7 = scalar_select 0, %s6, %s4
  // Predicated region
  $region2: #{apply_model.5} parent=0 // pred_check
    _
  $region3: #{apply_model.5} parent=0 // pred_check_branch
    %9 = sbr.rel (0) target = $region5
  $region4: #{apply_model.5} parent=0 // pred_region
    _
  $region5: #{apply_model.5} parent=0 // pred_fallthru
    _
  // Predicated region
  $region6: #{apply_model.5} parent=0 // pred_check
    _
  $region7: #{apply_model.5} parent=0 // pred_check_branch
    %11 = sbr.rel (0) target = $region9
  $region8: #{apply_model.5} parent=0 // pred_region
    _
  $region9: #{apply_model.5} parent=0 // pred_fallthru
    _
  // Predicated region
  $region10: #{apply_model.5} parent=0 // pred_check
    _
  $region11: #{apply_model.5} parent=0 // pred_check_branch
    %13 = sbr.rel (0) target = $region13
  $region12: #{apply_model.5} parent=0 // pred_region
    _
  $region13: #{apply_model.5} parent=0 // pred_fallthru
    _
  %v14 = vld [vmem:[%s1] sm:$0xff]
  %v15 = vld [vmem:[%s1 + $0x8] sm:$0xff]
  %v16 = vld [vmem:[%s0] sm:$0x3f]
  %v17 = vld [vmem:[%s2] sm:$0xff]
  %v18 = vld [vmem:[%s2 + $0x8] sm:$0xff]
  %20 = vset.pattern.permute.xlu0 0
  %21 = vperm.xlu0 %20, %v17
  %v22 = vpop.permute.xlu0 %21
  %25 = vset.pattern.permute.xlu0 0
  %26 = vperm.xlu0 %25, %v18
  %v27 = vpop.permute.xlu0 %26
  %vm29 = vcmask 48128
  %v31 = vsel %vm29, %v14, 0
  %v34 = vsel %vm29, %v15, 0
  %vm36 = vcmask 1045504
  %v38 = vsel %vm36, %v16, 0
  %40 = vmatpush.msra.mxu0 0.0
  %41 = vmatpush.msra.mxu0 0.0
  %42 = vmatpush.msra.mxu0 0.0
  %43 = vmatpush.msra.mxu0 0.0
  %44 = vmatpush.msra.mxu0 0.0
  %45 = vmatpush.msra.mxu0 0.0
  %46 = vmatpush.msra.mxu0 0.0
  %47 = vmatpush.msra.mxu0 0.0
  %48 = vmatpush.msra.mxu0 0.0
  %49 = vmatpush.msra.mxu0 0.0
  %50 = vmatpush.msra.mxu0 0.0
  %51 = vmatpush.msra.mxu0 0.0
  %52 = vmatpush.msra.mxu0 0.0
  %53 = vmatpush.msra.mxu0 0.0
  %54 = vmatpush.msra.mxu0 0.0
  %55 = vmatpush.msra.mxu0 %v38
  %56 = vmatmul.f32.gmra.mxu0 %v31
  %v57 = vpop.f32.mrf.mxu0
  %v58 = vadd.f32 %v22, %v57
  %59 = vmatmul.f32.gmra.mxu0 %v34
  %v60 = vpop.f32.mrf.mxu0
  %v61 = vadd.f32 %v27, %v60
  %62 = vdwg.mxu0
  %v63 = vmax.f32 %v58, 0.0
  %v64 = vmax.f32 %v61, 0.0
  %65 = vst [vmem:[%s3] sm:$0xff] %v63
  %66 = vst [vmem:[%s3 + $0x8] sm:$0xff] %v64
  // Predicated region
  $region14: #{apply_model.5} parent=0 // pred_check
    _
  $region15: #{apply_model.5} parent=0 // pred_check_branch
    %68 = sbr.rel (0) target = $region17
  $region16: #{apply_model.5} parent=0 // pred_region
    _
  $region17: #{apply_model.5} parent=0 // pred_fallthru
    _
  // Predicated region
  $region18: #{apply_model.5} parent=0 // pred_check
    _
  $region19: #{apply_model.5} parent=0 // pred_check_branch
    %70 = sbr.rel (0) target = $region21
  $region20: #{apply_model.5} parent=0 // pred_region
    _
  $region21: #{apply_model.5} parent=0 // pred_fallthru
    _

// kernel: apply_model.6
$region0: #{apply_model.6}
  #allocation0 [shape = 'u32[]', space=smem, size = 0x4, offset = 0x4, fixed_abs, tag = 'smem constant byte address 0x4 - core index']
  #allocation1 [shape = 'u32[72,128]{1,0:T(1,128)}', space=vmem, size = 0x9000, scoped, tag = 'internal scratch']
  %s0 = inlined_call_operand.vmem [shape: f32[16,128], index: 0, kind: input, shape index: {}]
  %s1 = inlined_call_operand.vmem [shape: bf16[5,128,128], index: 1, kind: input, shape index: {}]
  %s2 = inlined_call_operand.vmem [shape: f32[8,16], index: 2, kind: input, shape index: {}]
  %s3 = inlined_call_operand.vmem [shape: f32[8,1], index: 3, kind: input, shape index: {}]
  %s4 = inlined_call_operand.vmem [shape: f32[8,40], index: 4, kind: input, shape index: {}]
  %s5 = inlined_call_operand.vmem [shape: f32[8,1], index: 5, kind: input, shape index: {}]
  %s6 = inlined_call_operand.vmem [shape: f32[2,40], index: 6, kind: input, shape index: {}]
  %s7 = inlined_call_operand.vmem [shape: f32[2,1], index: 7, kind: input, shape index: {}]
  %s8 = inlined_call_operand.vmem [shape: f32[16,80], index: 8, kind: input, shape index: {}]
  %s9 = inlined_call_operand.vmem [shape: f32[16,1], index: 9, kind: input, shape index: {}]
  %s10 = inlined_call_operand.vmem [shape: f32[16,1], index: 10, kind: input, shape index: {}]
  %s11 = inlined_call_operand.vmem [shape: f32[16,1], index: 11, kind: input, shape index: {}]
  %s12 = inlined_call_operand.vmem [shape: f32[16,80], index: 12, kind: input, shape index: {}]
  %s13 = inlined_call_operand.vmem [shape: f32[16,1], index: 13, kind: input, shape index: {}]
  %s14 = inlined_call_operand.vmem [shape: f32[16,1], index: 14, kind: input, shape index: {}]
  %s15 = inlined_call_operand.vmem [shape: f32[16,1], index: 15, kind: input, shape index: {}]
  %s16 = inlined_call_operand.vmem [shape: f32[16,32], index: 16, kind: input, shape index: {}]
  %s17 = inlined_call_operand.vmem [shape: f32[16,1], index: 17, kind: input, shape index: {}]
  %s18 = inlined_call_operand.vmem [shape: f32[16,128], index: 18, kind: output, shape index: {}]
  %s19 = sld [smem:[#allocation0]]
  $region82: #{apply_model.6} parent=0
    _
  %s21 = ssub.s32 1, %s19
  %s22 = scalar_select 0, %s21, %s19
  // Predicated region
  $region2: #{apply_model.6} parent=0 // pred_check
    _
  $region3: #{apply_model.6} parent=0 // pred_check_branch
    %24 = sbr.rel (0) target = $region5
  $region4: #{apply_model.6} parent=0 // pred_region
    _
  $region5: #{apply_model.6} parent=0 // pred_fallthru
    _
  // Predicated region
  $region6: #{apply_model.6} parent=0 // pred_check
    _
  $region7: #{apply_model.6} parent=0 // pred_check_branch
    %26 = sbr.rel (0) target = $region9
  $region8: #{apply_model.6} parent=0 // pred_region
    _
  $region9: #{apply_model.6} parent=0 // pred_fallthru
    _
  // Predicated region
  $region10: #{apply_model.6} parent=0 // pred_check
    _
  $region11: #{apply_model.6} parent=0 // pred_check_branch
    %28 = sbr.rel (0) target = $region13
  $region12: #{apply_model.6} parent=0 // pred_region
    _
  $region13: #{apply_model.6} parent=0 // pred_fallthru
    _
  // Predicated region
  $region14: #{apply_model.6} parent=0 // pred_check
    _
  $region15: #{apply_model.6} parent=0 // pred_check_branch
    %30 = sbr.rel (0) target = $region17
  $region16: #{apply_model.6} parent=0 // pred_region
    _
  $region17: #{apply_model.6} parent=0 // pred_fallthru
    _
  // Predicated region
  $region18: #{apply_model.6} parent=0 // pred_check
    _
  $region19: #{apply_model.6} parent=0 // pred_check_branch
    %32 = sbr.rel (0) target = $region21
  $region20: #{apply_model.6} parent=0 // pred_region
    _
  $region21: #{apply_model.6} parent=0 // pred_fallthru
    _
  // Predicated region
  $region22: #{apply_model.6} parent=0 // pred_check
    _
  $region23: #{apply_model.6} parent=0 // pred_check_branch
    %34 = sbr.rel (0) target = $region25
  $region24: #{apply_model.6} parent=0 // pred_region
    _
  $region25: #{apply_model.6} parent=0 // pred_fallthru
    _
  // Predicated region
  $region26: #{apply_model.6} parent=0 // pred_check
    _
  $region27: #{apply_model.6} parent=0 // pred_check_branch
    %36 = sbr.rel (0) target = $region29
  $region28: #{apply_model.6} parent=0 // pred_region
    _
  $region29: #{apply_model.6} parent=0 // pred_fallthru
    _
  // Predicated region
  $region30: #{apply_model.6} parent=0 // pred_check
    _
  $region31: #{apply_model.6} parent=0 // pred_check_branch
    %38 = sbr.rel (0) target = $region33
  $region32: #{apply_model.6} parent=0 // pred_region
    _
  $region33: #{apply_model.6} parent=0 // pred_fallthru
    _
  // Predicated region
  $region34: #{apply_model.6} parent=0 // pred_check
    _
  $region35: #{apply_model.6} parent=0 // pred_check_branch
    %40 = sbr.rel (0) target = $region37
  $region36: #{apply_model.6} parent=0 // pred_region
    _
  $region37: #{apply_model.6} parent=0 // pred_fallthru
    _
  // Predicated region
  $region38: #{apply_model.6} parent=0 // pred_check
    _
  $region39: #{apply_model.6} parent=0 // pred_check_branch
    %42 = sbr.rel (0) target = $region41
  $region40: #{apply_model.6} parent=0 // pred_region
    _
  $region41: #{apply_model.6} parent=0 // pred_fallthru
    _
  // Predicated region
  $region42: #{apply_model.6} parent=0 // pred_check
    _
  $region43: #{apply_model.6} parent=0 // pred_check_branch
    %44 = sbr.rel (0) target = $region45
  $region44: #{apply_model.6} parent=0 // pred_region
    _
  $region45: #{apply_model.6} parent=0 // pred_fallthru
    _
  // Predicated region
  $region46: #{apply_model.6} parent=0 // pred_check
    _
  $region47: #{apply_model.6} parent=0 // pred_check_branch
    %46 = sbr.rel (0) target = $region49
  $region48: #{apply_model.6} parent=0 // pred_region
    _
  $region49: #{apply_model.6} parent=0 // pred_fallthru
    _
  // Predicated region
  $region50: #{apply_model.6} parent=0 // pred_check
    _
  $region51: #{apply_model.6} parent=0 // pred_check_branch
    %48 = sbr.rel (0) target = $region53
  $region52: #{apply_model.6} parent=0 // pred_region
    _
  $region53: #{apply_model.6} parent=0 // pred_fallthru
    _
  // Predicated region
  $region54: #{apply_model.6} parent=0 // pred_check
    _
  $region55: #{apply_model.6} parent=0 // pred_check_branch
    %50 = sbr.rel (0) target = $region57
  $region56: #{apply_model.6} parent=0 // pred_region
    _
  $region57: #{apply_model.6} parent=0 // pred_fallthru
    _
  // Predicated region
  $region58: #{apply_model.6} parent=0 // pred_check
    _
  $region59: #{apply_model.6} parent=0 // pred_check_branch
    %52 = sbr.rel (0) target = $region61
  $region60: #{apply_model.6} parent=0 // pred_region
    _
  $region61: #{apply_model.6} parent=0 // pred_fallthru
    _
  // Predicated region
  $region62: #{apply_model.6} parent=0 // pred_check
    _
  $region63: #{apply_model.6} parent=0 // pred_check_branch
    %54 = sbr.rel (0) target = $region65
  $region64: #{apply_model.6} parent=0 // pred_region
    _
  $region65: #{apply_model.6} parent=0 // pred_fallthru
    _
  // Predicated region
  $region66: #{apply_model.6} parent=0 // pred_check
    _
  $region67: #{apply_model.6} parent=0 // pred_check_branch
    %56 = sbr.rel (0) target = $region69
  $region68: #{apply_model.6} parent=0 // pred_region
    _
  $region69: #{apply_model.6} parent=0 // pred_fallthru
    _
  // Predicated region
  $region70: #{apply_model.6} parent=0 // pred_check
    _
  $region71: #{apply_model.6} parent=0 // pred_check_branch
    %58 = sbr.rel (0) target = $region73
  $region72: #{apply_model.6} parent=0 // pred_region
    _
  $region73: #{apply_model.6} parent=0 // pred_fallthru
    _
  %v59 = vld [vmem:[%s0] sm:$0xff]
  %v60 = vld [vmem:[%s0 + $0x8] sm:$0xff]
  %v61 = vld [vmem:[%s2] sm:$0xff]
  %v62 = vld [vmem:[%s3] sm:$0xff]
  %64 = vset.pattern.permute.xlu0 0
  %65 = vperm.xlu0 %64, %v62
  %v66 = vpop.permute.xlu0 %65
  %vm68 = vcmask 130048
  %v70 = vsel %vm68, %v61, 0
  %72 = vmatpush.msra.mxu0 0.0
  %73 = vmatpush.msra.mxu0 0.0
  %74 = vmatpush.msra.mxu0 0.0
  %75 = vmatpush.msra.mxu0 0.0
  %76 = vmatpush.msra.mxu0 0.0
  %77 = vmatpush.msra.mxu0 0.0
  %78 = vmatpush.msra.mxu0 0.0
  %79 = vmatpush.msra.mxu0 0.0
  %80 = vmatpush.msra.mxu0 0.0
  %81 = vmatpush.msra.mxu0 0.0
  %82 = vmatpush.msra.mxu0 0.0
  %83 = vmatpush.msra.mxu0 0.0
  %84 = vmatpush.msra.mxu0 0.0
  %85 = vmatpush.msra.mxu0 0.0
  %86 = vmatpush.msra.mxu0 %v60
  %87 = vmatpush.msra.mxu0 %v59
  %88 = vmatmul.f32.gmra.mxu0 %v70
  %v89 = vpop.f32.mrf.mxu0
  %v90 = vadd.f32 %v66, %v89
  %91 = vdwg.mxu0
  %v92 = vmax.f32 %v90, 0.0
  %v93 = vld [vmem:[%s4] sm:$0xff]
  %v94 = vpack.c.bf16 %v92, %v92
  %v95 = vld [vmem:[%s1] sm:$0xf]
  %v96 = vld [vmem:[%s1 + $0x4] sm:$0xf]
  %v97 = vld [vmem:[%s1 + $0x8] sm:$0xf]
  %v98 = vld [vmem:[%s1 + $0xc] sm:$0xf]
  %v99 = vld [vmem:[%s1 + $0x10] sm:$0xf]
  %v100 = vld [vmem:[%s1 + $0x14] sm:$0xf]
  %v101 = vld [vmem:[%s1 + $0x18] sm:$0xf]
  %v102 = vld [vmem:[%s1 + $0x1c] sm:$0xf]
  %v103 = vld [vmem:[%s1 + $0x20] sm:$0xf]
  %v104 = vld [vmem:[%s1 + $0x24] sm:$0xf]
  %v105 = vld [vmem:[%s1 + $0x28] sm:$0xf]
  %v106 = vld [vmem:[%s1 + $0x2c] sm:$0xf]
  %v107 = vld [vmem:[%s1 + $0x30] sm:$0xf]
  %v108 = vld [vmem:[%s1 + $0x34] sm:$0xf]
  %v109 = vld [vmem:[%s1 + $0x38] sm:$0xf]
  %v110 = vld [vmem:[%s1 + $0x3c] sm:$0xf]
  %v127 = vunpack.c.l.b16 %v95
  %v128 = vunpack.c.l.b16 %v96
  %v129 = vunpack.c.l.b16 %v97
  %v130 = vunpack.c.l.b16 %v98
  %v131 = vunpack.c.l.b16 %v99
  %v132 = vunpack.c.l.b16 %v100
  %v133 = vunpack.c.l.b16 %v101
  %v134 = vunpack.c.l.b16 %v102
  %v135 = vunpack.c.l.b16 %v103
  %v136 = vunpack.c.l.b16 %v104
  %v137 = vunpack.c.l.b16 %v105
  %v138 = vunpack.c.l.b16 %v106
  %v139 = vunpack.c.l.b16 %v107
  %v140 = vunpack.c.l.b16 %v108
  %v141 = vunpack.c.l.b16 %v109
  %v142 = vunpack.c.l.b16 %v110
  %v143 = vpack.c.b16 %v128, %v127
  %v144 = vpack.c.b16 %v130, %v129
  %v145 = vpack.c.b16 %v132, %v131
  %v146 = vpack.c.b16 %v134, %v133
  %v147 = vpack.c.b16 %v136, %v135
  %v148 = vpack.c.b16 %v138, %v137
  %v149 = vpack.c.b16 %v140, %v139
  %v150 = vpack.c.b16 %v142, %v141
  %159 = vmatpush.bf16.msra.mxu0 %v150
  %160 = vmatpush.bf16.msra.mxu0 %v149
  %161 = vmatpush.bf16.msra.mxu0 %v148
  %162 = vmatpush.bf16.msra.mxu0 %v147
  %163 = vmatpush.bf16.msra.mxu0 %v146
  %164 = vmatpush.bf16.msra.mxu0 %v145
  %165 = vmatpush.bf16.msra.mxu0 %v144
  %166 = vmatpush.bf16.msra.mxu0 %v143
  %167 = vmatmul.bf16.gmra.mxu0 %v94
  %v168 = vpop.f32.mrf.mxu0
  %v169 = vadd.f32 0.0, %v168
  %v170 = vpop.f32.mrf.mxu0
  %171 = vdwg.mxu0
  %s172 = scalar_lea.vmem %s1, 64
  %v173 = vld [vmem:[%s172] sm:$0xf]
  %v174 = vld [vmem:[%s172 + $0x4] sm:$0xf]
  %v175 = vld [vmem:[%s172 + $0x8] sm:$0xf]
  %v176 = vld [vmem:[%s172 + $0xc] sm:$0xf]
  %v177 = vld [vmem:[%s172 + $0x10] sm:$0xf]
  %v178 = vld [vmem:[%s172 + $0x14] sm:$0xf]
  %v179 = vld [vmem:[%s172 + $0x18] sm:$0xf]
  %v180 = vld [vmem:[%s172 + $0x1c] sm:$0xf]
  %v181 = vld [vmem:[%s172 + $0x20] sm:$0xf]
  %v182 = vld [vmem:[%s172 + $0x24] sm:$0xf]
  %v183 = vld [vmem:[%s172 + $0x28] sm:$0xf]
  %v184 = vld [vmem:[%s172 + $0x2c] sm:$0xf]
  %v185 = vld [vmem:[%s172 + $0x30] sm:$0xf]
  %v186 = vld [vmem:[%s172 + $0x34] sm:$0xf]
  %v187 = vld [vmem:[%s172 + $0x38] sm:$0xf]
  %v188 = vld [vmem:[%s172 + $0x3c] sm:$0xf]
  %v205 = vunpack.c.l.b16 %v173
  %v206 = vunpack.c.l.b16 %v174
  %v207 = vunpack.c.l.b16 %v175
  %v208 = vunpack.c.l.b16 %v176
  %v209 = vunpack.c.l.b16 %v177
  %v210 = vunpack.c.l.b16 %v178
  %v211 = vunpack.c.l.b16 %v179
  %v212 = vunpack.c.l.b16 %v180
  %v213 = vunpack.c.l.b16 %v181
  %v214 = vunpack.c.l.b16 %v182
  %v215 = vunpack.c.l.b16 %v183
  %v216 = vunpack.c.l.b16 %v184
  %v217 = vunpack.c.l.b16 %v185
  %v218 = vunpack.c.l.b16 %v186
  %v219 = vunpack.c.l.b16 %v187
  %v220 = vunpack.c.l.b16 %v188
  %v221 = vpack.c.b16 %v206, %v205
  %v222 = vpack.c.b16 %v208, %v207
  %v223 = vpack.c.b16 %v210, %v209
  %v224 = vpack.c.b16 %v212, %v211
  %v225 = vpack.c.b16 %v214, %v213
  %v226 = vpack.c.b16 %v216, %v215
  %v227 = vpack.c.b16 %v218, %v217
  %v228 = vpack.c.b16 %v220, %v219
  %237 = vmatpush.bf16.msra.mxu0 %v228
  %238 = vmatpush.bf16.msra.mxu0 %v227
  %239 = vmatpush.bf16.msra.mxu0 %v226
  %240 = vmatpush.bf16.msra.mxu0 %v225
  %241 = vmatpush.bf16.msra.mxu0 %v224
  %242 = vmatpush.bf16.msra.mxu0 %v223
  %243 = vmatpush.bf16.msra.mxu0 %v222
  %244 = vmatpush.bf16.msra.mxu0 %v221
  %245 = vmatmul.bf16.gmra.mxu0 %v94
  %v246 = vpop.f32.mrf.mxu0
  %v247 = vadd.f32 0.0, %v246
  %v248 = vpop.f32.mrf.mxu0
  %249 = vdwg.mxu0
  %s250 = scalar_lea.vmem %s1, 128
  %v251 = vld [vmem:[%s250] sm:$0xf]
  %v252 = vld [vmem:[%s250 + $0x4] sm:$0xf]
  %v253 = vld [vmem:[%s250 + $0x8] sm:$0xf]
  %v254 = vld [vmem:[%s250 + $0xc] sm:$0xf]
  %v255 = vld [vmem:[%s250 + $0x10] sm:$0xf]
  %v256 = vld [vmem:[%s250 + $0x14] sm:$0xf]
  %v257 = vld [vmem:[%s250 + $0x18] sm:$0xf]
  %v258 = vld [vmem:[%s250 + $0x1c] sm:$0xf]
  %v259 = vld [vmem:[%s250 + $0x20] sm:$0xf]
  %v260 = vld [vmem:[%s250 + $0x24] sm:$0xf]
  %v261 = vld [vmem:[%s250 + $0x28] sm:$0xf]
  %v262 = vld [vmem:[%s250 + $0x2c] sm:$0xf]
  %v263 = vld [vmem:[%s250 + $0x30] sm:$0xf]
  %v264 = vld [vmem:[%s250 + $0x34] sm:$0xf]
  %v265 = vld [vmem:[%s250 + $0x38] sm:$0xf]
  %v266 = vld [vmem:[%s250 + $0x3c] sm:$0xf]
  %v283 = vunpack.c.l.b16 %v251
  %v284 = vunpack.c.l.b16 %v252
  %v285 = vunpack.c.l.b16 %v253
  %v286 = vunpack.c.l.b16 %v254
  %v287 = vunpack.c.l.b16 %v255
  %v288 = vunpack.c.l.b16 %v256
  %v289 = vunpack.c.l.b16 %v257
  %v290 = vunpack.c.l.b16 %v258
  %v291 = vunpack.c.l.b16 %v259
  %v292 = vunpack.c.l.b16 %v260
  %v293 = vunpack.c.l.b16 %v261
  %v294 = vunpack.c.l.b16 %v262
  %v295 = vunpack.c.l.b16 %v263
  %v296 = vunpack.c.l.b16 %v264
  %v297 = vunpack.c.l.b16 %v265
  %v298 = vunpack.c.l.b16 %v266
  %v299 = vpack.c.b16 %v284, %v283
  %v300 = vpack.c.b16 %v286, %v285
  %v301 = vpack.c.b16 %v288, %v287
  %v302 = vpack.c.b16 %v290, %v289
  %v303 = vpack.c.b16 %v292, %v291
  %v304 = vpack.c.b16 %v294, %v293
  %v305 = vpack.c.b16 %v296, %v295
  %v306 = vpack.c.b16 %v298, %v297
  %315 = vmatpush.bf16.msra.mxu0 %v306
  %316 = vmatpush.bf16.msra.mxu0 %v305
  %317 = vmatpush.bf16.msra.mxu0 %v304
  %318 = vmatpush.bf16.msra.mxu0 %v303
  %319 = vmatpush.bf16.msra.mxu0 %v302
  %320 = vmatpush.bf16.msra.mxu0 %v301
  %321 = vmatpush.bf16.msra.mxu0 %v300
  %322 = vmatpush.bf16.msra.mxu0 %v299
  %323 = vmatmul.bf16.gmra.mxu0 %v94
  %v324 = vpop.f32.mrf.mxu0
  %v325 = vadd.f32 0.0, %v324
  %v326 = vpop.f32.mrf.mxu0
  %327 = vdwg.mxu0
  %s328 = scalar_lea.vmem %s1, 192
  %v329 = vld [vmem:[%s328] sm:$0xf]
  %v330 = vld [vmem:[%s328 + $0x4] sm:$0xf]
  %v331 = vld [vmem:[%s328 + $0x8] sm:$0xf]
  %v332 = vld [vmem:[%s328 + $0xc] sm:$0xf]
  %v333 = vld [vmem:[%s328 + $0x10] sm:$0xf]
  %v334 = vld [vmem:[%s328 + $0x14] sm:$0xf]
  %v335 = vld [vmem:[%s328 + $0x18] sm:$0xf]
  %v336 = vld [vmem:[%s328 + $0x1c] sm:$0xf]
  %v337 = vld [vmem:[%s328 + $0x20] sm:$0xf]
  %v338 = vld [vmem:[%s328 + $0x24] sm:$0xf]
  %v339 = vld [vmem:[%s328 + $0x28] sm:$0xf]
  %v340 = vld [vmem:[%s328 + $0x2c] sm:$0xf]
  %v341 = vld [vmem:[%s328 + $0x30] sm:$0xf]
  %v342 = vld [vmem:[%s328 + $0x34] sm:$0xf]
  %v343 = vld [vmem:[%s328 + $0x38] sm:$0xf]
  %v344 = vld [vmem:[%s328 + $0x3c] sm:$0xf]
  %v361 = vunpack.c.l.b16 %v329
  %v362 = vunpack.c.l.b16 %v330
  %v363 = vunpack.c.l.b16 %v331
  %v364 = vunpack.c.l.b16 %v332
  %v365 = vunpack.c.l.b16 %v333
  %v366 = vunpack.c.l.b16 %v334
  %v367 = vunpack.c.l.b16 %v335
  %v368 = vunpack.c.l.b16 %v336
  %v369 = vunpack.c.l.b16 %v337
  %v370 = vunpack.c.l.b16 %v338
  %v371 = vunpack.c.l.b16 %v339
  %v372 = vunpack.c.l.b16 %v340
  %v373 = vunpack.c.l.b16 %v341
  %v374 = vunpack.c.l.b16 %v342
  %v375 = vunpack.c.l.b16 %v343
  %v376 = vunpack.c.l.b16 %v344
  %v377 = vpack.c.b16 %v362, %v361
  %v378 = vpack.c.b16 %v364, %v363
  %v379 = vpack.c.b16 %v366, %v365
  %v380 = vpack.c.b16 %v368, %v367
  %v381 = vpack.c.b16 %v370, %v369
  %v382 = vpack.c.b16 %v372, %v371
  %v383 = vpack.c.b16 %v374, %v373
  %v384 = vpack.c.b16 %v376, %v375
  %393 = vmatpush.bf16.msra.mxu0 %v384
  %394 = vmatpush.bf16.msra.mxu0 %v383
  %395 = vmatpush.bf16.msra.mxu0 %v382
  %396 = vmatpush.bf16.msra.mxu0 %v381
  %397 = vmatpush.bf16.msra.mxu0 %v380
  %398 = vmatpush.bf16.msra.mxu0 %v379
  %399 = vmatpush.bf16.msra.mxu0 %v378
  %400 = vmatpush.bf16.msra.mxu0 %v377
  %401 = vmatmul.bf16.gmra.mxu0 %v94
  %v402 = vpop.f32.mrf.mxu0
  %v403 = vadd.f32 0.0, %v402
  %v404 = vpop.f32.mrf.mxu0
  %405 = vdwg.mxu0
  %s406 = scalar_lea.vmem %s1, 256
  %v407 = vld [vmem:[%s406] sm:$0xf]
  %v408 = vld [vmem:[%s406 + $0x4] sm:$0xf]
  %v409 = vld [vmem:[%s406 + $0x8] sm:$0xf]
  %v410 = vld [vmem:[%s406 + $0xc] sm:$0xf]
  %v411 = vld [vmem:[%s406 + $0x10] sm:$0xf]
  %v412 = vld [vmem:[%s406 + $0x14] sm:$0xf]
  %v413 = vld [vmem:[%s406 + $0x18] sm:$0xf]
  %v414 = vld [vmem:[%s406 + $0x1c] sm:$0xf]
  %v415 = vld [vmem:[%s406 + $0x20] sm:$0xf]
  %v416 = vld [vmem:[%s406 + $0x24] sm:$0xf]
  %v417 = vld [vmem:[%s406 + $0x28] sm:$0xf]
  %v418 = vld [vmem:[%s406 + $0x2c] sm:$0xf]
  %v419 = vld [vmem:[%s406 + $0x30] sm:$0xf]
  %v420 = vld [vmem:[%s406 + $0x34] sm:$0xf]
  %v421 = vld [vmem:[%s406 + $0x38] sm:$0xf]
  %v422 = vld [vmem:[%s406 + $0x3c] sm:$0xf]
  %v439 = vunpack.c.l.b16 %v407
  %v440 = vunpack.c.l.b16 %v408
  %v441 = vunpack.c.l.b16 %v409
  %v442 = vunpack.c.l.b16 %v410
  %v443 = vunpack.c.l.b16 %v411
  %v444 = vunpack.c.l.b16 %v412
  %v445 = vunpack.c.l.b16 %v413
  %v446 = vunpack.c.l.b16 %v414
  %v447 = vunpack.c.l.b16 %v415
  %v448 = vunpack.c.l.b16 %v416
  %v449 = vunpack.c.l.b16 %v417
  %v450 = vunpack.c.l.b16 %v418
  %v451 = vunpack.c.l.b16 %v419
  %v452 = vunpack.c.l.b16 %v420
  %v453 = vunpack.c.l.b16 %v421
  %v454 = vunpack.c.l.b16 %v422
  %v455 = vpack.c.b16 %v440, %v439
  %v456 = vpack.c.b16 %v442, %v441
  %v457 = vpack.c.b16 %v444, %v443
  %v458 = vpack.c.b16 %v446, %v445
  %v459 = vpack.c.b16 %v448, %v447
  %v460 = vpack.c.b16 %v450, %v449
  %v461 = vpack.c.b16 %v452, %v451
  %v462 = vpack.c.b16 %v454, %v453
  %471 = vmatpush.bf16.msra.mxu0 %v462
  %472 = vmatpush.bf16.msra.mxu0 %v461
  %473 = vmatpush.bf16.msra.mxu0 %v460
  %474 = vmatpush.bf16.msra.mxu0 %v459
  %475 = vmatpush.bf16.msra.mxu0 %v458
  %476 = vmatpush.bf16.msra.mxu0 %v457
  %477 = vmatpush.bf16.msra.mxu0 %v456
  %478 = vmatpush.bf16.msra.mxu0 %v455
  %479 = vmatmul.bf16.gmra.mxu0 %v94
  %v480 = vpop.f32.mrf.mxu0
  %v481 = vadd.f32 0.0, %v480
  %v482 = vpop.f32.mrf.mxu0
  %483 = vdwg.mxu0
  %v484 = vld [vmem:[%s5] sm:$0xff]
  %486 = vset.pattern.permute.xlu0 0
  %487 = vperm.xlu0 %486, %v484
  %v488 = vpop.permute.xlu0 %487
  %vm490 = vcmask 326656
  %v492 = vsel %vm490, %v93, 0
  %494 = vmatpush.msra.mxu0 0.0
  %495 = vmatpush.msra.mxu0 0.0
  %496 = vmatpush.msra.mxu0 0.0
  %497 = vmatpush.msra.mxu0 0.0
  %498 = vmatpush.msra.mxu0 0.0
  %499 = vmatpush.msra.mxu0 0.0
  %500 = vmatpush.msra.mxu0 0.0
  %501 = vmatpush.msra.mxu0 0.0
  %502 = vmatpush.msra.mxu0 0.0
  %503 = vmatpush.msra.mxu0 0.0
  %504 = vmatpush.msra.mxu0 0.0
  %505 = vmatpush.msra.mxu0 %v481
  %506 = vmatpush.msra.mxu0 %v403
  %507 = vmatpush.msra.mxu0 %v325
  %508 = vmatpush.msra.mxu0 %v247
  %509 = vmatpush.msra.mxu0 %v169
  %510 = vmatmul.f32.gmra.mxu0 %v492
  %v511 = vpop.f32.mrf.mxu0
  %v512 = vadd.f32 %v488, %v511
  %513 = vdwg.mxu0
  %v514 = vmax.f32 %v512, 0.0
  %v515 = vld [vmem:[%s6] sm:$0x3]
  %v516 = vpack.c.bf16 %v514, %v514
  %517 = vmatpush.bf16.msra.mxu0 %v150
  %518 = vmatpush.bf16.msra.mxu0 %v149
  %519 = vmatpush.bf16.msra.mxu0 %v148
  %520 = vmatpush.bf16.msra.mxu0 %v147
  %521 = vmatpush.bf16.msra.mxu0 %v146
  %522 = vmatpush.bf16.msra.mxu0 %v145
  %523 = vmatpush.bf16.msra.mxu0 %v144
  %524 = vmatpush.bf16.msra.mxu0 %v143
  %525 = vmatmul.bf16.gmra.mxu0 %v516
  %v526 = vpop.f32.mrf.mxu0
  %v527 = vadd.f32 0.0, %v526
  %v528 = vpop.f32.mrf.mxu0
  %529 = vdwg.mxu0
  %530 = vmatpush.bf16.msra.mxu0 %v228
  %531 = vmatpush.bf16.msra.mxu0 %v227
  %532 = vmatpush.bf16.msra.mxu0 %v226
  %533 = vmatpush.bf16.msra.mxu0 %v225
  %534 = vmatpush.bf16.msra.mxu0 %v224
  %535 = vmatpush.bf16.msra.mxu0 %v223
  %536 = vmatpush.bf16.msra.mxu0 %v222
  %537 = vmatpush.bf16.msra.mxu0 %v221
  %538 = vmatmul.bf16.gmra.mxu0 %v516
  %v539 = vpop.f32.mrf.mxu0
  %v540 = vadd.f32 0.0, %v539
  %v541 = vpop.f32.mrf.mxu0
  %542 = vdwg.mxu0
  %543 = vmatpush.bf16.msra.mxu0 %v306
  %544 = vmatpush.bf16.msra.mxu0 %v305
  %545 = vmatpush.bf16.msra.mxu0 %v304
  %546 = vmatpush.bf16.msra.mxu0 %v303
  %547 = vmatpush.bf16.msra.mxu0 %v302
  %548 = vmatpush.bf16.msra.mxu0 %v301
  %549 = vmatpush.bf16.msra.mxu0 %v300
  %550 = vmatpush.bf16.msra.mxu0 %v299
  %551 = vmatmul.bf16.gmra.mxu0 %v516
  %v552 = vpop.f32.mrf.mxu0
  %v553 = vadd.f32 0.0, %v552
  %v554 = vpop.f32.mrf.mxu0
  %555 = vdwg.mxu0
  %556 = vmatpush.bf16.msra.mxu0 %v384
  %557 = vmatpush.bf16.msra.mxu0 %v383
  %558 = vmatpush.bf16.msra.mxu0 %v382
  %559 = vmatpush.bf16.msra.mxu0 %v381
  %560 = vmatpush.bf16.msra.mxu0 %v380
  %561 = vmatpush.bf16.msra.mxu0 %v379
  %562 = vmatpush.bf16.msra.mxu0 %v378
  %563 = vmatpush.bf16.msra.mxu0 %v377
  %564 = vmatmul.bf16.gmra.mxu0 %v516
  %v565 = vpop.f32.mrf.mxu0
  %v566 = vadd.f32 0.0, %v565
  %v567 = vpop.f32.mrf.mxu0
  %568 = vdwg.mxu0
  %569 = vmatpush.bf16.msra.mxu0 %v462
  %570 = vmatpush.bf16.msra.mxu0 %v461
  %571 = vmatpush.bf16.msra.mxu0 %v460
  %572 = vmatpush.bf16.msra.mxu0 %v459
  %573 = vmatpush.bf16.msra.mxu0 %v458
  %574 = vmatpush.bf16.msra.mxu0 %v457
  %575 = vmatpush.bf16.msra.mxu0 %v456
  %576 = vmatpush.bf16.msra.mxu0 %v455
  %577 = vmatmul.bf16.gmra.mxu0 %v516
  %v578 = vpop.f32.mrf.mxu0
  %v579 = vadd.f32 0.0, %v578
  %v580 = vpop.f32.mrf.mxu0
  %581 = vdwg.mxu0
  %v582 = vld [vmem:[%s7] sm:$0x3]
  %584 = vset.pattern.permute.xlu0 0
  %585 = vperm.xlu0 %584, %v582
  %v586 = vpop.permute.xlu0 %585
  %v589 = vsel %vm490, %v515, 0
  %591 = vmatpush.msra.mxu0 0.0
  %592 = vmatpush.msra.mxu0 0.0
  %593 = vmatpush.msra.mxu0 0.0
  %594 = vmatpush.msra.mxu0 0.0
  %595 = vmatpush.msra.mxu0 0.0
  %596 = vmatpush.msra.mxu0 0.0
  %597 = vmatpush.msra.mxu0 0.0
  %598 = vmatpush.msra.mxu0 0.0
  %599 = vmatpush.msra.mxu0 0.0
  %600 = vmatpush.msra.mxu0 0.0
  %601 = vmatpush.msra.mxu0 0.0
  %602 = vmatpush.msra.mxu0 %v579
  %603 = vmatpush.msra.mxu0 %v566
  %604 = vmatpush.msra.mxu0 %v553
  %605 = vmatpush.msra.mxu0 %v540
  %606 = vmatpush.msra.mxu0 %v527
  %607 = vmatmul.f32.gmra.mxu0 %v589
  %v608 = vpop.f32.mrf.mxu0
  %v609 = vadd.f32 %v586, %v608
  %610 = vdwg.mxu0
  %v612 = vrot.slane %v609, 1
  %v614 = vsub.f32 %v609, %v612
  %v615 = vmul.f32 %v614, 1.442695
  %v616 = vpow.pop %v615
  %v617 = vadd.f32 %v616, 1.0
  %v618 = vrcp.pop %v617
  %v619 = vmul.f32 %v617, %v618
  %v620 = vsub.f32 1.0, %v619
  %v621 = vmul.f32 %v618, %v620
  %v622 = vadd.f32 %v618, %v621
  %vm623 = vweird.f32 %v617
  %vm624 = vweird.f32 %v618
  %vm625 = vmor %vm623, %vm624
  %v626 = vsel %vm625, %v618, %v622
  %v627 = vand.u32 2147483647, %v617
  %vm628 = vcmp.eq.f32.partialorder %v627, 8.507059e+37
  %v629 = vand.u32 %v617, 2147483648
  %v630 = vor.u32 1.1754944e-38, %v629
  %v631 = vsel %vm628, %v630, %v626
  %v632 = vmul.f32 1.0, %v631
  %v633 = vld [vmem:[%s8] sm:$0xff]
  %v634 = vld [vmem:[%s8 + $0x8] sm:$0xff]
  %v635 = vpack.c.bf16 %v60, %v59
  %636 = vmatpush.bf16.msra.mxu0 %v150
  %637 = vmatpush.bf16.msra.mxu0 %v149
  %638 = vmatpush.bf16.msra.mxu0 %v148
  %639 = vmatpush.bf16.msra.mxu0 %v147
  %640 = vmatpush.bf16.msra.mxu0 %v146
  %641 = vmatpush.bf16.msra.mxu0 %v145
  %642 = vmatpush.bf16.msra.mxu0 %v144
  %643 = vmatpush.bf16.msra.mxu0 %v143
  %644 = vmatmul.bf16.gmra.mxu0 %v635
  %v645 = vpop.f32.mrf.mxu0
  %v646 = vadd.f32 0.0, %v645
  %v647 = vpop.f32.mrf.mxu0
  %v648 = vadd.f32 0.0, %v647
  %649 = vdwg.mxu0
  %650 = vmatpush.bf16.msra.mxu0 %v228
  %651 = vmatpush.bf16.msra.mxu0 %v227
  %652 = vmatpush.bf16.msra.mxu0 %v226
  %653 = vmatpush.bf16.msra.mxu0 %v225
  %654 = vmatpush.bf16.msra.mxu0 %v224
  %655 = vmatpush.bf16.msra.mxu0 %v223
  %656 = vmatpush.bf16.msra.mxu0 %v222
  %657 = vmatpush.bf16.msra.mxu0 %v221
  %658 = vmatmul.bf16.gmra.mxu0 %v635
  %v659 = vpop.f32.mrf.mxu0
  %v660 = vadd.f32 0.0, %v659
  %v661 = vpop.f32.mrf.mxu0
  %v662 = vadd.f32 0.0, %v661
  %663 = vdwg.mxu0
  %664 = vmatpush.bf16.msra.mxu0 %v306
  %665 = vmatpush.bf16.msra.mxu0 %v305
  %666 = vmatpush.bf16.msra.mxu0 %v304
  %667 = vmatpush.bf16.msra.mxu0 %v303
  %668 = vmatpush.bf16.msra.mxu0 %v302
  %669 = vmatpush.bf16.msra.mxu0 %v301
  %670 = vmatpush.bf16.msra.mxu0 %v300
  %671 = vmatpush.bf16.msra.mxu0 %v299
  %672 = vmatmul.bf16.gmra.mxu0 %v635
  %v673 = vpop.f32.mrf.mxu0
  %v674 = vadd.f32 0.0, %v673
  %v675 = vpop.f32.mrf.mxu0
  %v676 = vadd.f32 0.0, %v675
  %677 = vdwg.mxu0
  %678 = vmatpush.bf16.msra.mxu0 %v384
  %679 = vmatpush.bf16.msra.mxu0 %v383
  %680 = vmatpush.bf16.msra.mxu0 %v382
  %681 = vmatpush.bf16.msra.mxu0 %v381
  %682 = vmatpush.bf16.msra.mxu0 %v380
  %683 = vmatpush.bf16.msra.mxu0 %v379
  %684 = vmatpush.bf16.msra.mxu0 %v378
  %685 = vmatpush.bf16.msra.mxu0 %v377
  %686 = vmatmul.bf16.gmra.mxu0 %v635
  %v687 = vpop.f32.mrf.mxu0
  %v688 = vadd.f32 0.0, %v687
  %v689 = vpop.f32.mrf.mxu0
  %v690 = vadd.f32 0.0, %v689
  %691 = vdwg.mxu0
  %692 = vmatpush.bf16.msra.mxu0 %v462
  %693 = vmatpush.bf16.msra.mxu0 %v461
  %694 = vmatpush.bf16.msra.mxu0 %v460
  %695 = vmatpush.bf16.msra.mxu0 %v459
  %696 = vmatpush.bf16.msra.mxu0 %v458
  %697 = vmatpush.bf16.msra.mxu0 %v457
  %698 = vmatpush.bf16.msra.mxu0 %v456
  %699 = vmatpush.bf16.msra.mxu0 %v455
  %700 = vmatmul.bf16.gmra.mxu0 %v635
  %v701 = vpop.f32.mrf.mxu0
  %v702 = vadd.f32 0.0, %v701
  %v703 = vpop.f32.mrf.mxu0
  %v704 = vadd.f32 0.0, %v703
  %705 = vdwg.mxu0
  %v706 = vld [vmem:[%s9] sm:$0xff]
  %v707 = vld [vmem:[%s9 + $0x8] sm:$0xff]
  %709 = vset.pattern.permute.xlu0 0
  %710 = vperm.xlu0 %709, %v706
  %v711 = vpop.permute.xlu0 %710
  %714 = vset.pattern.permute.xlu0 0
  %715 = vperm.xlu0 %714, %v707
  %v716 = vpop.permute.xlu0 %715
  %vm718 = vcmask 654336
  %v720 = vsel %vm718, %v633, 0
  %v723 = vsel %vm718, %v634, 0
  %725 = vmatpush.msra.mxu0 0.0
  %726 = vmatpush.msra.mxu0 0.0
  %727 = vmatpush.msra.mxu0 0.0
  %728 = vmatpush.msra.mxu0 0.0
  %729 = vmatpush.msra.mxu0 0.0
  %730 = vmatpush.msra.mxu0 0.0
  %731 = vmatpush.msra.mxu0 %v704
  %732 = vmatpush.msra.mxu0 %v702
  %733 = vmatpush.msra.mxu0 %v690
  %734 = vmatpush.msra.mxu0 %v688
  %735 = vmatpush.msra.mxu0 %v676
  %736 = vmatpush.msra.mxu0 %v674
  %737 = vmatpush.msra.mxu0 %v662
  %738 = vmatpush.msra.mxu0 %v660
  %739 = vmatpush.msra.mxu0 %v648
  %740 = vmatpush.msra.mxu0 %v646
  %741 = vmatmul.f32.gmra.mxu0 %v720
  %v742 = vpop.f32.mrf.mxu0
  %v743 = vadd.f32 %v711, %v742
  %744 = vmatmul.f32.gmra.mxu0 %v723
  %v745 = vpop.f32.mrf.mxu0
  %v746 = vadd.f32 %v716, %v745
  %747 = vdwg.mxu0
  %v748 = vmax.f32 %v743, 0.0
  %v749 = vmax.f32 %v746, 0.0
  %v750 = vld [vmem:[%s10] sm:$0xff]
  %v751 = vld [vmem:[%s10 + $0x8] sm:$0xff]
  %753 = vset.pattern.permute.xlu0 0
  %754 = vperm.xlu0 %753, %v750
  %v755 = vpop.permute.xlu0 %754
  %758 = vset.pattern.permute.xlu0 0
  %759 = vperm.xlu0 %758, %v751
  %v760 = vpop.permute.xlu0 %759
  %v762 = vperm.slane %v632, 0
  %v763 = vmul.f32 %v755, %v762
  %v764 = vmul.f32 %v760, %v762
  %v765 = vld [vmem:[%s11] sm:$0xff]
  %v766 = vld [vmem:[%s11 + $0x8] sm:$0xff]
  %768 = vset.pattern.permute.xlu0 0
  %769 = vperm.xlu0 %768, %v765
  %v770 = vpop.permute.xlu0 %769
  %773 = vset.pattern.permute.xlu0 0
  %774 = vperm.xlu0 %773, %v766
  %v775 = vpop.permute.xlu0 %774
  %v777 = vadd.f32 %v763, %v770
  %v778 = vadd.f32 %v764, %v775
  %v779 = vmul.f32 %v748, %v777
  %v780 = vmul.f32 %v749, %v778
  %v781 = vld [vmem:[%s12] sm:$0xff]
  %v782 = vld [vmem:[%s12 + $0x8] sm:$0xff]
  %v783 = vpack.c.bf16 %v780, %v779
  %784 = vmatpush.bf16.msra.mxu0 %v150
  %785 = vmatpush.bf16.msra.mxu0 %v149
  %786 = vmatpush.bf16.msra.mxu0 %v148
  %787 = vmatpush.bf16.msra.mxu0 %v147
  %788 = vmatpush.bf16.msra.mxu0 %v146
  %789 = vmatpush.bf16.msra.mxu0 %v145
  %790 = vmatpush.bf16.msra.mxu0 %v144
  %791 = vmatpush.bf16.msra.mxu0 %v143
  %792 = vmatmul.bf16.gmra.mxu0 %v783
  %v793 = vpop.f32.mrf.mxu0
  %v794 = vadd.f32 0.0, %v793
  %v795 = vpop.f32.mrf.mxu0
  %v796 = vadd.f32 0.0, %v795
  %797 = vdwg.mxu0
  %798 = vmatpush.bf16.msra.mxu0 %v228
  %799 = vmatpush.bf16.msra.mxu0 %v227
  %800 = vmatpush.bf16.msra.mxu0 %v226
  %801 = vmatpush.bf16.msra.mxu0 %v225
  %802 = vmatpush.bf16.msra.mxu0 %v224
  %803 = vmatpush.bf16.msra.mxu0 %v223
  %804 = vmatpush.bf16.msra.mxu0 %v222
  %805 = vmatpush.bf16.msra.mxu0 %v221
  %806 = vmatmul.bf16.gmra.mxu0 %v783
  %v807 = vpop.f32.mrf.mxu0
  %v808 = vadd.f32 0.0, %v807
  %v809 = vpop.f32.mrf.mxu0
  %v810 = vadd.f32 0.0, %v809
  %811 = vdwg.mxu0
  %812 = vmatpush.bf16.msra.mxu0 %v306
  %813 = vmatpush.bf16.msra.mxu0 %v305
  %814 = vmatpush.bf16.msra.mxu0 %v304
  %815 = vmatpush.bf16.msra.mxu0 %v303
  %816 = vmatpush.bf16.msra.mxu0 %v302
  %817 = vmatpush.bf16.msra.mxu0 %v301
  %818 = vmatpush.bf16.msra.mxu0 %v300
  %819 = vmatpush.bf16.msra.mxu0 %v299
  %820 = vmatmul.bf16.gmra.mxu0 %v783
  %v821 = vpop.f32.mrf.mxu0
  %v822 = vadd.f32 0.0, %v821
  %v823 = vpop.f32.mrf.mxu0
  %v824 = vadd.f32 0.0, %v823
  %825 = vdwg.mxu0
  %826 = vmatpush.bf16.msra.mxu0 %v384
  %827 = vmatpush.bf16.msra.mxu0 %v383
  %828 = vmatpush.bf16.msra.mxu0 %v382
  %829 = vmatpush.bf16.msra.mxu0 %v381
  %830 = vmatpush.bf16.msra.mxu0 %v380
  %831 = vmatpush.bf16.msra.mxu0 %v379
  %832 = vmatpush.bf16.msra.mxu0 %v378
  %833 = vmatpush.bf16.msra.mxu0 %v377
  %834 = vmatmul.bf16.gmra.mxu0 %v783
  %v835 = vpop.f32.mrf.mxu0
  %v836 = vadd.f32 0.0, %v835
  %v837 = vpop.f32.mrf.mxu0
  %v838 = vadd.f32 0.0, %v837
  %839 = vdwg.mxu0
  %840 = vmatpush.bf16.msra.mxu0 %v462
  %841 = vmatpush.bf16.msra.mxu0 %v461
  %842 = vmatpush.bf16.msra.mxu0 %v460
  %843 = vmatpush.bf16.msra.mxu0 %v459
  %844 = vmatpush.bf16.msra.mxu0 %v458
  %845 = vmatpush.bf16.msra.mxu0 %v457
  %846 = vmatpush.bf16.msra.mxu0 %v456
  %847 = vmatpush.bf16.msra.mxu0 %v455
  %848 = vmatmul.bf16.gmra.mxu0 %v783
  %v849 = vpop.f32.mrf.mxu0
  %v850 = vadd.f32 0.0, %v849
  %v851 = vpop.f32.mrf.mxu0
  %v852 = vadd.f32 0.0, %v851
  %853 = vdwg.mxu0
  %v854 = vld [vmem:[%s13] sm:$0xff]
  %v855 = vld [vmem:[%s13 + $0x8] sm:$0xff]
  %857 = vset.pattern.permute.xlu0 0
  %858 = vperm.xlu0 %857, %v854
  %v859 = vpop.permute.xlu0 %858
  %862 = vset.pattern.permute.xlu0 0
  %863 = vperm.xlu0 %862, %v855
  %v864 = vpop.permute.xlu0 %863
  %v867 = vsel %vm718, %v781, 0
  %v870 = vsel %vm718, %v782, 0
  %872 = vmatpush.msra.mxu0 0.0
  %873 = vmatpush.msra.mxu0 0.0
  %874 = vmatpush.msra.mxu0 0.0
  %875 = vmatpush.msra.mxu0 0.0
  %876 = vmatpush.msra.mxu0 0.0
  %877 = vmatpush.msra.mxu0 0.0
  %878 = vmatpush.msra.mxu0 %v852
  %879 = vmatpush.msra.mxu0 %v850
  %880 = vmatpush.msra.mxu0 %v838
  %881 = vmatpush.msra.mxu0 %v836
  %882 = vmatpush.msra.mxu0 %v824
  %883 = vmatpush.msra.mxu0 %v822
  %884 = vmatpush.msra.mxu0 %v810
  %885 = vmatpush.msra.mxu0 %v808
  %886 = vmatpush.msra.mxu0 %v796
  %887 = vmatpush.msra.mxu0 %v794
  %888 = vmatmul.f32.gmra.mxu0 %v867
  %v889 = vpop.f32.mrf.mxu0
  %v890 = vadd.f32 %v859, %v889
  %891 = vmatmul.f32.gmra.mxu0 %v870
  %v892 = vpop.f32.mrf.mxu0
  %v893 = vadd.f32 %v864, %v892
  %894 = vdwg.mxu0
  %v895 = vmax.f32 %v890, 0.0
  %v896 = vmax.f32 %v893, 0.0
  %v897 = vld [vmem:[%s14] sm:$0xff]
  %v898 = vld [vmem:[%s14 + $0x8] sm:$0xff]
  %900 = vset.pattern.permute.xlu0 0
  %901 = vperm.xlu0 %900, %v897
  %v902 = vpop.permute.xlu0 %901
  %905 = vset.pattern.permute.xlu0 0
  %906 = vperm.xlu0 %905, %v898
  %v907 = vpop.permute.xlu0 %906
  %v909 = vmul.f32 %v902, %v762
  %v910 = vmul.f32 %v907, %v762
  %v911 = vld [vmem:[%s15] sm:$0xff]
  %v912 = vld [vmem:[%s15 + $0x8] sm:$0xff]
  %914 = vset.pattern.permute.xlu0 0
  %915 = vperm.xlu0 %914, %v911
  %v916 = vpop.permute.xlu0 %915
  %919 = vset.pattern.permute.xlu0 0
  %920 = vperm.xlu0 %919, %v912
  %v921 = vpop.permute.xlu0 %920
  %v923 = vadd.f32 %v909, %v916
  %v924 = vadd.f32 %v910, %v921
  %v925 = vmul.f32 %v895, %v923
  %v926 = vmul.f32 %v896, %v924
  %v927 = vld [vmem:[%s16] sm:$0xff]
  %v928 = vld [vmem:[%s16 + $0x8] sm:$0xff]
  %v929 = vld [vmem:[%s17] sm:$0xff]
  %v930 = vld [vmem:[%s17 + $0x8] sm:$0xff]
  %932 = vset.pattern.permute.xlu0 0
  %933 = vperm.xlu0 %932, %v929
  %v934 = vpop.permute.xlu0 %933
  %937 = vset.pattern.permute.xlu0 0
  %938 = vperm.xlu0 %937, %v930
  %v939 = vpop.permute.xlu0 %938
  %vm941 = vcmask 261120
  %v943 = vsel %vm941, %v927, 0
  %v946 = vsel %vm941, %v928, 0
  %948 = vmatpush.msra.mxu0 0.0
  %949 = vmatpush.msra.mxu0 0.0
  %950 = vmatpush.msra.mxu0 0.0
  %951 = vmatpush.msra.mxu0 0.0
  %952 = vmatpush.msra.mxu0 0.0
  %953 = vmatpush.msra.mxu0 0.0
  %954 = vmatpush.msra.mxu0 0.0
  %955 = vmatpush.msra.mxu0 0.0
  %956 = vmatpush.msra.mxu0 0.0
  %957 = vmatpush.msra.mxu0 0.0
  %958 = vmatpush.msra.mxu0 0.0
  %959 = vmatpush.msra.mxu0 0.0
  %960 = vmatpush.msra.mxu0 %v926
  %961 = vmatpush.msra.mxu0 %v925
  %962 = vmatpush.msra.mxu0 %v780
  %963 = vmatpush.msra.mxu0 %v779
  %964 = vmatmul.f32.gmra.mxu0 %v943
  %v965 = vpop.f32.mrf.mxu0
  %v966 = vadd.f32 %v934, %v965
  %967 = vmatmul.f32.gmra.mxu0 %v946
  %v968 = vpop.f32.mrf.mxu0
  %v969 = vadd.f32 %v939, %v968
  %970 = vdwg.mxu0
  %v971 = vadd.f32 %v966, %v59
  %v972 = vadd.f32 %v969, %v60
  %v973 = vmax.f32 %v971, 0.0
  %v974 = vmax.f32 %v972, 0.0
  %975 = vst [vmem:[%s18] sm:$0xff] %v973
  %976 = vst [vmem:[%s18 + $0x8] sm:$0xff] %v974
  // Predicated region
  $region74: #{apply_model.6} parent=0 // pred_check
    _
  $region75: #{apply_model.6} parent=0 // pred_check_branch
    %978 = sbr.rel (0) target = $region77
  $region76: #{apply_model.6} parent=0 // pred_region
    _
  $region77: #{apply_model.6} parent=0 // pred_fallthru
    _
  // Predicated region
  $region78: #{apply_model.6} parent=0 // pred_check
    _
  $region79: #{apply_model.6} parent=0 // pred_check_branch
    %980 = sbr.rel (0) target = $region81
  $region80: #{apply_model.6} parent=0 // pred_region
    _
  $region81: #{apply_model.6} parent=0 // pred_fallthru
    _

// kernel: apply_model.9
$region0: #{apply_model.9}
  #allocation0 [shape = 'u32[]', space=smem, size = 0x4, offset = 0x4, fixed_abs, tag = 'smem constant byte address 0x4 - core index']
  #allocation1 [shape = 'u32[72,128]{1,0:T(1,128)}', space=vmem, size = 0x9000, scoped, tag = 'internal scratch']
  %s0 = inlined_call_operand.vmem [shape: f32[16,128], index: 0, kind: input, shape index: {}]
  %s1 = inlined_call_operand.vmem [shape: f32[32,16], index: 1, kind: input, shape index: {}]
  %s2 = inlined_call_operand.vmem [shape: f32[32,1], index: 2, kind: input, shape index: {}]
  %s3 = inlined_call_operand.vmem [shape: f32[5,32], index: 3, kind: input, shape index: {}]
  %s4 = inlined_call_operand.vmem [shape: f32[5,1], index: 4, kind: input, shape index: {}]
  %s5 = inlined_call_operand.vmem [shape: f32[5,128], index: 5, kind: output, shape index: {}]
  %s6 = sld [smem:[#allocation0]]
  $region30: #{apply_model.9} parent=0
    _
  %s8 = ssub.s32 1, %s6
  %s9 = scalar_select 0, %s8, %s6
  // Predicated region
  $region2: #{apply_model.9} parent=0 // pred_check
    _
  $region3: #{apply_model.9} parent=0 // pred_check_branch
    %11 = sbr.rel (0) target = $region5
  $region4: #{apply_model.9} parent=0 // pred_region
    _
  $region5: #{apply_model.9} parent=0 // pred_fallthru
    _
  // Predicated region
  $region6: #{apply_model.9} parent=0 // pred_check
    _
  $region7: #{apply_model.9} parent=0 // pred_check_branch
    %13 = sbr.rel (0) target = $region9
  $region8: #{apply_model.9} parent=0 // pred_region
    _
  $region9: #{apply_model.9} parent=0 // pred_fallthru
    _
  // Predicated region
  $region10: #{apply_model.9} parent=0 // pred_check
    _
  $region11: #{apply_model.9} parent=0 // pred_check_branch
    %15 = sbr.rel (0) target = $region13
  $region12: #{apply_model.9} parent=0 // pred_region
    _
  $region13: #{apply_model.9} parent=0 // pred_fallthru
    _
  // Predicated region
  $region14: #{apply_model.9} parent=0 // pred_check
    _
  $region15: #{apply_model.9} parent=0 // pred_check_branch
    %17 = sbr.rel (0) target = $region17
  $region16: #{apply_model.9} parent=0 // pred_region
    _
  $region17: #{apply_model.9} parent=0 // pred_fallthru
    _
  // Predicated region
  $region18: #{apply_model.9} parent=0 // pred_check
    _
  $region19: #{apply_model.9} parent=0 // pred_check_branch
    %19 = sbr.rel (0) target = $region21
  $region20: #{apply_model.9} parent=0 // pred_region
    _
  $region21: #{apply_model.9} parent=0 // pred_fallthru
    _
  %v20 = vld [vmem:[%s1] sm:$0xff]
  %v21 = vld [vmem:[%s1 + $0x8] sm:$0xff]
  %v22 = vld [vmem:[%s1 + $0x10] sm:$0xff]
  %v23 = vld [vmem:[%s1 + $0x18] sm:$0xff]
  %v24 = vld [vmem:[%s0] sm:$0xff]
  %v25 = vld [vmem:[%s0 + $0x8] sm:$0xff]
  %v26 = vld [vmem:[%s2] sm:$0xff]
  %v27 = vld [vmem:[%s2 + $0x8] sm:$0xff]
  %v28 = vld [vmem:[%s2 + $0x10] sm:$0xff]
  %v29 = vld [vmem:[%s2 + $0x18] sm:$0xff]
  %31 = vset.pattern.permute.xlu0 0
  %32 = vperm.xlu0 %31, %v26
  %v33 = vpop.permute.xlu0 %32
  %36 = vset.pattern.permute.xlu0 0
  %37 = vperm.xlu0 %36, %v27
  %v38 = vpop.permute.xlu0 %37
  %41 = vset.pattern.permute.xlu0 0
  %42 = vperm.xlu0 %41, %v28
  %v43 = vpop.permute.xlu0 %42
  %46 = vset.pattern.permute.xlu0 0
  %47 = vperm.xlu0 %46, %v29
  %v48 = vpop.permute.xlu0 %47
  %vm50 = vcmask 130048
  %v52 = vsel %vm50, %v20, 0
  %v55 = vsel %vm50, %v21, 0
  %v58 = vsel %vm50, %v22, 0
  %v61 = vsel %vm50, %v23, 0
  %63 = vmatpush.msra.mxu0 0.0
  %64 = vmatpush.msra.mxu0 0.0
  %65 = vmatpush.msra.mxu0 0.0
  %66 = vmatpush.msra.mxu0 0.0
  %67 = vmatpush.msra.mxu0 0.0
  %68 = vmatpush.msra.mxu0 0.0
  %69 = vmatpush.msra.mxu0 0.0
  %70 = vmatpush.msra.mxu0 0.0
  %71 = vmatpush.msra.mxu0 0.0
  %72 = vmatpush.msra.mxu0 0.0
  %73 = vmatpush.msra.mxu0 0.0
  %74 = vmatpush.msra.mxu0 0.0
  %75 = vmatpush.msra.mxu0 0.0
  %76 = vmatpush.msra.mxu0 0.0
  %77 = vmatpush.msra.mxu0 %v25
  %78 = vmatpush.msra.mxu0 %v24
  %79 = vmatmul.f32.gmra.mxu0 %v52
  %v80 = vpop.f32.mrf.mxu0
  %v81 = vadd.f32 %v33, %v80
  %82 = vmatmul.f32.gmra.mxu0 %v55
  %v83 = vpop.f32.mrf.mxu0
  %v84 = vadd.f32 %v38, %v83
  %85 = vmatmul.f32.gmra.mxu0 %v58
  %v86 = vpop.f32.mrf.mxu0
  %v87 = vadd.f32 %v43, %v86
  %88 = vmatmul.f32.gmra.mxu0 %v61
  %v89 = vpop.f32.mrf.mxu0
  %v90 = vadd.f32 %v48, %v89
  %91 = vdwg.mxu0
  %v92 = vmax.f32 %v81, 0.0
  %v93 = vmax.f32 %v84, 0.0
  %v94 = vmax.f32 %v87, 0.0
  %v95 = vmax.f32 %v90, 0.0
  %v96 = vld [vmem:[%s3] sm:$0x1f]
  %v97 = vld [vmem:[%s4] sm:$0x1f]
  %99 = vset.pattern.permute.xlu0 0
  %100 = vperm.xlu0 %99, %v97
  %v101 = vpop.permute.xlu0 %100
  %vm103 = vcmask 261120
  %v105 = vsel %vm103, %v96, 0
  %107 = vmatpush.msra.mxu0 0.0
  %108 = vmatpush.msra.mxu0 0.0
  %109 = vmatpush.msra.mxu0 0.0
  %110 = vmatpush.msra.mxu0 0.0
  %111 = vmatpush.msra.mxu0 0.0
  %112 = vmatpush.msra.mxu0 0.0
  %113 = vmatpush.msra.mxu0 0.0
  %114 = vmatpush.msra.mxu0 0.0
  %115 = vmatpush.msra.mxu0 0.0
  %116 = vmatpush.msra.mxu0 0.0
  %117 = vmatpush.msra.mxu0 0.0
  %118 = vmatpush.msra.mxu0 0.0
  %119 = vmatpush.msra.mxu0 %v95
  %120 = vmatpush.msra.mxu0 %v94
  %121 = vmatpush.msra.mxu0 %v93
  %122 = vmatpush.msra.mxu0 %v92
  %123 = vmatmul.f32.gmra.mxu0 %v105
  %v124 = vpop.f32.mrf.mxu0
  %v125 = vadd.f32 %v101, %v124
  %126 = vdwg.mxu0
  %127 = vst [vmem:[%s5] sm:$0x1f] %v125
  // Predicated region
  $region22: #{apply_model.9} parent=0 // pred_check
    _
  $region23: #{apply_model.9} parent=0 // pred_check_branch
    %129 = sbr.rel (0) target = $region25
  $region24: #{apply_model.9} parent=0 // pred_region
    _
  $region25: #{apply_model.9} parent=0 // pred_fallthru
    _
  // Predicated region
  $region26: #{apply_model.9} parent=0 // pred_check
    _
  $region27: #{apply_model.9} parent=0 // pred_check_branch
    %131 = sbr.rel (0) target = $region29
  $region28: #{apply_model.9} parent=0 // pred_region
    _
  $region29: #{apply_model.9} parent=0 // pred_fallthru
    _

// kernel: apply_model.8
$region0: #{apply_model.8}
  #allocation0 [shape = 'u32[]', space=smem, size = 0x4, offset = 0x4, fixed_abs, tag = 'smem constant byte address 0x4 - core index']
  #allocation1 [shape = 'u32[72,128]{1,0:T(1,128)}', space=vmem, size = 0x9000, scoped, tag = 'internal scratch']
  %s0 = inlined_call_operand.vmem [shape: f32[32,128], index: 0, kind: input, shape index: {}]
  %s1 = inlined_call_operand.vmem [shape: f32[16,128], index: 1, kind: input, shape index: {}]
  %s2 = inlined_call_operand.vmem [shape: f32[16,32], index: 2, kind: input, shape index: {}]
  %s3 = inlined_call_operand.vmem [shape: f32[16,16], index: 3, kind: input, shape index: {}]
  %s4 = inlined_call_operand.vmem [shape: f32[16,1], index: 4, kind: input, shape index: {}]
  %s5 = inlined_call_operand.vmem [shape: f32[16,128], index: 5, kind: output, shape index: {}]
  %s6 = sld [smem:[#allocation0]]
  $region30: #{apply_model.8} parent=0
    _
  %s8 = ssub.s32 1, %s6
  %s9 = scalar_select 0, %s8, %s6
  // Predicated region
  $region2: #{apply_model.8} parent=0 // pred_check
    _
  $region3: #{apply_model.8} parent=0 // pred_check_branch
    %11 = sbr.rel (0) target = $region5
  $region4: #{apply_model.8} parent=0 // pred_region
    _
  $region5: #{apply_model.8} parent=0 // pred_fallthru
    _
  // Predicated region
  $region6: #{apply_model.8} parent=0 // pred_check
    _
  $region7: #{apply_model.8} parent=0 // pred_check_branch
    %13 = sbr.rel (0) target = $region9
  $region8: #{apply_model.8} parent=0 // pred_region
    _
  $region9: #{apply_model.8} parent=0 // pred_fallthru
    _
  // Predicated region
  $region10: #{apply_model.8} parent=0 // pred_check
    _
  $region11: #{apply_model.8} parent=0 // pred_check_branch
    %15 = sbr.rel (0) target = $region13
  $region12: #{apply_model.8} parent=0 // pred_region
    _
  $region13: #{apply_model.8} parent=0 // pred_fallthru
    _
  // Predicated region
  $region14: #{apply_model.8} parent=0 // pred_check
    _
  $region15: #{apply_model.8} parent=0 // pred_check_branch
    %17 = sbr.rel (0) target = $region17
  $region16: #{apply_model.8} parent=0 // pred_region
    _
  $region17: #{apply_model.8} parent=0 // pred_fallthru
    _
  // Predicated region
  $region18: #{apply_model.8} parent=0 // pred_check
    _
  $region19: #{apply_model.8} parent=0 // pred_check_branch
    %19 = sbr.rel (0) target = $region21
  $region20: #{apply_model.8} parent=0 // pred_region
    _
  $region21: #{apply_model.8} parent=0 // pred_fallthru
    _
  %v20 = vld [vmem:[%s2] sm:$0xff]
  %v21 = vld [vmem:[%s2 + $0x8] sm:$0xff]
  %v22 = vld [vmem:[%s0] sm:$0xff]
  %v23 = vld [vmem:[%s0 + $0x8] sm:$0xff]
  %v24 = vld [vmem:[%s0 + $0x10] sm:$0xff]
  %v25 = vld [vmem:[%s0 + $0x18] sm:$0xff]
  %v26 = vld [vmem:[%s3] sm:$0xff]
  %v27 = vld [vmem:[%s3 + $0x8] sm:$0xff]
  %v28 = vld [vmem:[%s1] sm:$0xff]
  %v29 = vld [vmem:[%s1 + $0x8] sm:$0xff]
  %vm30 = vcmask 130048
  %v32 = vsel %vm30, %v26, 0
  %v35 = vsel %vm30, %v27, 0
  %37 = vmatpush.msra.mxu0 0.0
  %38 = vmatpush.msra.mxu0 0.0
  %39 = vmatpush.msra.mxu0 0.0
  %40 = vmatpush.msra.mxu0 0.0
  %41 = vmatpush.msra.mxu0 0.0
  %42 = vmatpush.msra.mxu0 0.0
  %43 = vmatpush.msra.mxu0 0.0
  %44 = vmatpush.msra.mxu0 0.0
  %45 = vmatpush.msra.mxu0 0.0
  %46 = vmatpush.msra.mxu0 0.0
  %47 = vmatpush.msra.mxu0 0.0
  %48 = vmatpush.msra.mxu0 0.0
  %49 = vmatpush.msra.mxu0 0.0
  %50 = vmatpush.msra.mxu0 0.0
  %51 = vmatpush.msra.mxu0 %v29
  %52 = vmatpush.msra.mxu0 %v28
  %53 = vmatmul.f32.gmra.mxu0 %v32
  %v54 = vpop.f32.mrf.mxu0
  %v55 = vadd.f32 0.0, %v54
  %56 = vmatmul.f32.gmra.mxu0 %v35
  %v57 = vpop.f32.mrf.mxu0
  %v58 = vadd.f32 0.0, %v57
  %59 = vdwg.mxu0
  %vm60 = vcmask 261120
  %v62 = vsel %vm60, %v20, 0
  %v65 = vsel %vm60, %v21, 0
  %67 = vmatpush.msra.mxu0 0.0
  %68 = vmatpush.msra.mxu0 0.0
  %69 = vmatpush.msra.mxu0 0.0
  %70 = vmatpush.msra.mxu0 0.0
  %71 = vmatpush.msra.mxu0 0.0
  %72 = vmatpush.msra.mxu0 0.0
  %73 = vmatpush.msra.mxu0 0.0
  %74 = vmatpush.msra.mxu0 0.0
  %75 = vmatpush.msra.mxu0 0.0
  %76 = vmatpush.msra.mxu0 0.0
  %77 = vmatpush.msra.mxu0 0.0
  %78 = vmatpush.msra.mxu0 0.0
  %79 = vmatpush.msra.mxu0 %v25
  %80 = vmatpush.msra.mxu0 %v24
  %81 = vmatpush.msra.mxu0 %v23
  %82 = vmatpush.msra.mxu0 %v22
  %83 = vmatmul.f32.gmra.mxu0 %v62
  %v84 = vpop.f32.mrf.mxu0
  %v85 = vadd.f32 %v55, %v84
  %86 = vmatmul.f32.gmra.mxu0 %v65
  %v87 = vpop.f32.mrf.mxu0
  %v88 = vadd.f32 %v58, %v87
  %89 = vdwg.mxu0
  %v90 = vld [vmem:[%s4] sm:$0xff]
  %v91 = vld [vmem:[%s4 + $0x8] sm:$0xff]
  %93 = vset.pattern.permute.xlu0 0
  %94 = vperm.xlu0 %93, %v90
  %v95 = vpop.permute.xlu0 %94
  %98 = vset.pattern.permute.xlu0 0
  %99 = vperm.xlu0 %98, %v91
  %v100 = vpop.permute.xlu0 %99
  %v102 = vadd.f32 %v85, %v95
  %v103 = vadd.f32 %v88, %v100
  %v104 = vmax.f32 %v102, 0.0
  %v105 = vmax.f32 %v103, 0.0
  %106 = vst [vmem:[%s5] sm:$0xff] %v104
  %107 = vst [vmem:[%s5 + $0x8] sm:$0xff] %v105
  // Predicated region
  $region22: #{apply_model.8} parent=0 // pred_check
    _
  $region23: #{apply_model.8} parent=0 // pred_check_branch
    %109 = sbr.rel (0) target = $region25
  $region24: #{apply_model.8} parent=0 // pred_region
    _
  $region25: #{apply_model.8} parent=0 // pred_fallthru
    _
  // Predicated region
  $region26: #{apply_model.8} parent=0 // pred_check
    _
  $region27: #{apply_model.8} parent=0 // pred_check_branch
    %111 = sbr.rel (0) target = $region29
  $region28: #{apply_model.8} parent=0 // pred_region
    _
  $region29: #{apply_model.8} parent=0 // pred_fallthru
    _

// kernel: apply_model.7
$region0: #{apply_model.7}
  #allocation0 [shape = 'u32[]', space=smem, size = 0x4, offset = 0x4, fixed_abs, tag = 'smem constant byte address 0x4 - core index']
  #allocation1 [shape = 'u32[72,128]{1,0:T(1,128)}', space=vmem, size = 0x9000, scoped, tag = 'internal scratch']
  %s0 = inlined_call_operand.vmem [shape: f32[16,32], index: 0, kind: input, shape index: {}]
  %s1 = inlined_call_operand.vmem [shape: bf16[5,32,32], index: 1, kind: input, shape index: {}]
  %s2 = inlined_call_operand.vmem [shape: f32[8,16], index: 2, kind: input, shape index: {}]
  %s3 = inlined_call_operand.vmem [shape: f32[8,1], index: 3, kind: input, shape index: {}]
  %s4 = inlined_call_operand.vmem [shape: f32[8,40], index: 4, kind: input, shape index: {}]
  %s5 = inlined_call_operand.vmem [shape: f32[8,1], index: 5, kind: input, shape index: {}]
  %s6 = inlined_call_operand.vmem [shape: f32[2,40], index: 6, kind: input, shape index: {}]
  %s7 = inlined_call_operand.vmem [shape: f32[2,1], index: 7, kind: input, shape index: {}]
  %s8 = inlined_call_operand.vmem [shape: f32[32,80], index: 8, kind: input, shape index: {}]
  %s9 = inlined_call_operand.vmem [shape: f32[32,1], index: 9, kind: input, shape index: {}]
  %s10 = inlined_call_operand.vmem [shape: f32[32,1], index: 10, kind: input, shape index: {}]
  %s11 = inlined_call_operand.vmem [shape: f32[32,1], index: 11, kind: input, shape index: {}]
  %s12 = inlined_call_operand.vmem [shape: f32[32,160], index: 12, kind: input, shape index: {}]
  %s13 = inlined_call_operand.vmem [shape: f32[32,1], index: 13, kind: input, shape index: {}]
  %s14 = inlined_call_operand.vmem [shape: f32[32,1], index: 14, kind: input, shape index: {}]
  %s15 = inlined_call_operand.vmem [shape: f32[32,1], index: 15, kind: input, shape index: {}]
  %s16 = inlined_call_operand.vmem [shape: f32[32,64], index: 16, kind: input, shape index: {}]
  %s17 = inlined_call_operand.vmem [shape: f32[32,1], index: 17, kind: input, shape index: {}]
  %s18 = inlined_call_operand.vmem [shape: f32[32,16], index: 18, kind: input, shape index: {}]
  %s19 = inlined_call_operand.vmem [shape: f32[32,1], index: 19, kind: input, shape index: {}]
  %s20 = inlined_call_operand.vmem [shape: f32[32,32], index: 20, kind: output, shape index: {}]
  %s21 = sld [smem:[#allocation0]]
  $region90: #{apply_model.7} parent=0
    _
  %s23 = ssub.s32 1, %s21
  %s24 = scalar_select 0, %s23, %s21
  // Predicated region
  $region2: #{apply_model.7} parent=0 // pred_check
    _
  $region3: #{apply_model.7} parent=0 // pred_check_branch
    %26 = sbr.rel (0) target = $region5
  $region4: #{apply_model.7} parent=0 // pred_region
    _
  $region5: #{apply_model.7} parent=0 // pred_fallthru
    _
  // Predicated region
  $region6: #{apply_model.7} parent=0 // pred_check
    _
  $region7: #{apply_model.7} parent=0 // pred_check_branch
    %28 = sbr.rel (0) target = $region9
  $region8: #{apply_model.7} parent=0 // pred_region
    _
  $region9: #{apply_model.7} parent=0 // pred_fallthru
    _
  // Predicated region
  $region10: #{apply_model.7} parent=0 // pred_check
    _
  $region11: #{apply_model.7} parent=0 // pred_check_branch
    %30 = sbr.rel (0) target = $region13
  $region12: #{apply_model.7} parent=0 // pred_region
    _
  $region13: #{apply_model.7} parent=0 // pred_fallthru
    _
  // Predicated region
  $region14: #{apply_model.7} parent=0 // pred_check
    _
  $region15: #{apply_model.7} parent=0 // pred_check_branch
    %32 = sbr.rel (0) target = $region17
  $region16: #{apply_model.7} parent=0 // pred_region
    _
  $region17: #{apply_model.7} parent=0 // pred_fallthru
    _
  // Predicated region
  $region18: #{apply_model.7} parent=0 // pred_check
    _
  $region19: #{apply_model.7} parent=0 // pred_check_branch
    %34 = sbr.rel (0) target = $region21
  $region20: #{apply_model.7} parent=0 // pred_region
    _
  $region21: #{apply_model.7} parent=0 // pred_fallthru
    _
  // Predicated region
  $region22: #{apply_model.7} parent=0 // pred_check
    _
  $region23: #{apply_model.7} parent=0 // pred_check_branch
    %36 = sbr.rel (0) target = $region25
  $region24: #{apply_model.7} parent=0 // pred_region
    _
  $region25: #{apply_model.7} parent=0 // pred_fallthru
    _
  // Predicated region
  $region26: #{apply_model.7} parent=0 // pred_check
    _
  $region27: #{apply_model.7} parent=0 // pred_check_branch
    %38 = sbr.rel (0) target = $region29
  $region28: #{apply_model.7} parent=0 // pred_region
    _
  $region29: #{apply_model.7} parent=0 // pred_fallthru
    _
  // Predicated region
  $region30: #{apply_model.7} parent=0 // pred_check
    _
  $region31: #{apply_model.7} parent=0 // pred_check_branch
    %40 = sbr.rel (0) target = $region33
  $region32: #{apply_model.7} parent=0 // pred_region
    _
  $region33: #{apply_model.7} parent=0 // pred_fallthru
    _
  // Predicated region
  $region34: #{apply_model.7} parent=0 // pred_check
    _
  $region35: #{apply_model.7} parent=0 // pred_check_branch
    %42 = sbr.rel (0) target = $region37
  $region36: #{apply_model.7} parent=0 // pred_region
    _
  $region37: #{apply_model.7} parent=0 // pred_fallthru
    _
  // Predicated region
  $region38: #{apply_model.7} parent=0 // pred_check
    _
  $region39: #{apply_model.7} parent=0 // pred_check_branch
    %44 = sbr.rel (0) target = $region41
  $region40: #{apply_model.7} parent=0 // pred_region
    _
  $region41: #{apply_model.7} parent=0 // pred_fallthru
    _
  // Predicated region
  $region42: #{apply_model.7} parent=0 // pred_check
    _
  $region43: #{apply_model.7} parent=0 // pred_check_branch
    %46 = sbr.rel (0) target = $region45
  $region44: #{apply_model.7} parent=0 // pred_region
    _
  $region45: #{apply_model.7} parent=0 // pred_fallthru
    _
  // Predicated region
  $region46: #{apply_model.7} parent=0 // pred_check
    _
  $region47: #{apply_model.7} parent=0 // pred_check_branch
    %48 = sbr.rel (0) target = $region49
  $region48: #{apply_model.7} parent=0 // pred_region
    _
  $region49: #{apply_model.7} parent=0 // pred_fallthru
    _
  // Predicated region
  $region50: #{apply_model.7} parent=0 // pred_check
    _
  $region51: #{apply_model.7} parent=0 // pred_check_branch
    %50 = sbr.rel (0) target = $region53
  $region52: #{apply_model.7} parent=0 // pred_region
    _
  $region53: #{apply_model.7} parent=0 // pred_fallthru
    _
  // Predicated region
  $region54: #{apply_model.7} parent=0 // pred_check
    _
  $region55: #{apply_model.7} parent=0 // pred_check_branch
    %52 = sbr.rel (0) target = $region57
  $region56: #{apply_model.7} parent=0 // pred_region
    _
  $region57: #{apply_model.7} parent=0 // pred_fallthru
    _
  // Predicated region
  $region58: #{apply_model.7} parent=0 // pred_check
    _
  $region59: #{apply_model.7} parent=0 // pred_check_branch
    %54 = sbr.rel (0) target = $region61
  $region60: #{apply_model.7} parent=0 // pred_region
    _
  $region61: #{apply_model.7} parent=0 // pred_fallthru
    _
  // Predicated region
  $region62: #{apply_model.7} parent=0 // pred_check
    _
  $region63: #{apply_model.7} parent=0 // pred_check_branch
    %56 = sbr.rel (0) target = $region65
  $region64: #{apply_model.7} parent=0 // pred_region
    _
  $region65: #{apply_model.7} parent=0 // pred_fallthru
    _
  // Predicated region
  $region66: #{apply_model.7} parent=0 // pred_check
    _
  $region67: #{apply_model.7} parent=0 // pred_check_branch
    %58 = sbr.rel (0) target = $region69
  $region68: #{apply_model.7} parent=0 // pred_region
    _
  $region69: #{apply_model.7} parent=0 // pred_fallthru
    _
  // Predicated region
  $region70: #{apply_model.7} parent=0 // pred_check
    _
  $region71: #{apply_model.7} parent=0 // pred_check_branch
    %60 = sbr.rel (0) target = $region73
  $region72: #{apply_model.7} parent=0 // pred_region
    _
  $region73: #{apply_model.7} parent=0 // pred_fallthru
    _
  // Predicated region
  $region74: #{apply_model.7} parent=0 // pred_check
    _
  $region75: #{apply_model.7} parent=0 // pred_check_branch
    %62 = sbr.rel (0) target = $region77
  $region76: #{apply_model.7} parent=0 // pred_region
    _
  $region77: #{apply_model.7} parent=0 // pred_fallthru
    _
  // Predicated region
  $region78: #{apply_model.7} parent=0 // pred_check
    _
  $region79: #{apply_model.7} parent=0 // pred_check_branch
    %64 = sbr.rel (0) target = $region81
  $region80: #{apply_model.7} parent=0 // pred_region
    _
  $region81: #{apply_model.7} parent=0 // pred_fallthru
    _
  %v66 = vld [vmem:[%s0] sm:$0xff]
  %v67 = vld [vmem:[%s0 + $0x8] sm:$0xff]
  %v68 = vld [vmem:[%s2] sm:$0xff]
  %v69 = vld [vmem:[%s3] sm:$0xff]
  %71 = vset.pattern.permute.xlu0 0
  %72 = vperm.xlu0 %71, %v69
  %v73 = vpop.permute.xlu0 %72
  %vm75 = vcmask 130048
  %v77 = vsel %vm75, %v68, 0
  %79 = vmatpush.msra.mxu0 0.0
  %80 = vmatpush.msra.mxu0 0.0
  %81 = vmatpush.msra.mxu0 0.0
  %82 = vmatpush.msra.mxu0 0.0
  %83 = vmatpush.msra.mxu0 0.0
  %84 = vmatpush.msra.mxu0 0.0
  %85 = vmatpush.msra.mxu0 0.0
  %86 = vmatpush.msra.mxu0 0.0
  %87 = vmatpush.msra.mxu0 0.0
  %88 = vmatpush.msra.mxu0 0.0
  %89 = vmatpush.msra.mxu0 0.0
  %90 = vmatpush.msra.mxu0 0.0
  %91 = vmatpush.msra.mxu0 0.0
  %92 = vmatpush.msra.mxu0 0.0
  %93 = vmatpush.msra.mxu0 %v67
  %94 = vmatpush.msra.mxu0 %v66
  %95 = vmatmul.f32.gmra.mxu0 %v77
  %v96 = vpop.f32.mrf.mxu0
  %v97 = vadd.f32 %v73, %v96
  %98 = vdwg.mxu0
  %v99 = vmax.f32 %v97, 0.0
  %v100 = vld [vmem:[%s4] sm:$0xff]
  %v101 = vpack.c.bf16 %v99, %v99
  %v102 = vld [vmem:[%s1] sm:$0xf]
  %v103 = vld [vmem:[%s1 + $0x4] sm:$0xf]
  %v104 = vld [vmem:[%s1 + $0x8] sm:$0xf]
  %v105 = vld [vmem:[%s1 + $0xc] sm:$0xf]
  %v110 = vunpack.c.l.b16 %v102
  %v111 = vunpack.c.l.b16 %v103
  %v112 = vunpack.c.l.b16 %v104
  %v113 = vunpack.c.l.b16 %v105
  %v114 = vpack.c.b16 %v111, %v110
  %v115 = vpack.c.b16 %v113, %v112
  %vm118 = vcmask 261120
  %v120 = vsel %vm118, %v101, 0
  %122 = vmatpush.bf16.msra.mxu0 0
  %123 = vmatpush.bf16.msra.mxu0 0
  %124 = vmatpush.bf16.msra.mxu0 0
  %125 = vmatpush.bf16.msra.mxu0 0
  %126 = vmatpush.bf16.msra.mxu0 0
  %127 = vmatpush.bf16.msra.mxu0 0
  %128 = vmatpush.bf16.msra.mxu0 %v115
  %129 = vmatpush.bf16.msra.mxu0 %v114
  %130 = vmatmul.bf16.gmra.mxu0 %v120
  %v131 = vpop.f32.mrf.mxu0
  %v132 = vadd.f32 0.0, %v131
  %v133 = vpop.f32.mrf.mxu0
  %134 = vdwg.mxu0
  %s135 = scalar_lea.vmem %s1, 16
  %v136 = vld [vmem:[%s135] sm:$0xf]
  %v137 = vld [vmem:[%s135 + $0x4] sm:$0xf]
  %v138 = vld [vmem:[%s135 + $0x8] sm:$0xf]
  %v139 = vld [vmem:[%s135 + $0xc] sm:$0xf]
  %v144 = vunpack.c.l.b16 %v136
  %v145 = vunpack.c.l.b16 %v137
  %v146 = vunpack.c.l.b16 %v138
  %v147 = vunpack.c.l.b16 %v139
  %v148 = vpack.c.b16 %v145, %v144
  %v149 = vpack.c.b16 %v147, %v146
  %152 = vmatpush.bf16.msra.mxu0 0
  %153 = vmatpush.bf16.msra.mxu0 0
  %154 = vmatpush.bf16.msra.mxu0 0
  %155 = vmatpush.bf16.msra.mxu0 0
  %156 = vmatpush.bf16.msra.mxu0 0
  %157 = vmatpush.bf16.msra.mxu0 0
  %158 = vmatpush.bf16.msra.mxu0 %v149
  %159 = vmatpush.bf16.msra.mxu0 %v148
  %160 = vmatmul.bf16.gmra.mxu0 %v120
  %v161 = vpop.f32.mrf.mxu0
  %v162 = vadd.f32 0.0, %v161
  %v163 = vpop.f32.mrf.mxu0
  %164 = vdwg.mxu0
  %s165 = scalar_lea.vmem %s1, 32
  %v166 = vld [vmem:[%s165] sm:$0xf]
  %v167 = vld [vmem:[%s165 + $0x4] sm:$0xf]
  %v168 = vld [vmem:[%s165 + $0x8] sm:$0xf]
  %v169 = vld [vmem:[%s165 + $0xc] sm:$0xf]
  %v174 = vunpack.c.l.b16 %v166
  %v175 = vunpack.c.l.b16 %v167
  %v176 = vunpack.c.l.b16 %v168
  %v177 = vunpack.c.l.b16 %v169
  %v178 = vpack.c.b16 %v175, %v174
  %v179 = vpack.c.b16 %v177, %v176
  %182 = vmatpush.bf16.msra.mxu0 0
  %183 = vmatpush.bf16.msra.mxu0 0
  %184 = vmatpush.bf16.msra.mxu0 0
  %185 = vmatpush.bf16.msra.mxu0 0
  %186 = vmatpush.bf16.msra.mxu0 0
  %187 = vmatpush.bf16.msra.mxu0 0
  %188 = vmatpush.bf16.msra.mxu0 %v179
  %189 = vmatpush.bf16.msra.mxu0 %v178
  %190 = vmatmul.bf16.gmra.mxu0 %v120
  %v191 = vpop.f32.mrf.mxu0
  %v192 = vadd.f32 0.0, %v191
  %v193 = vpop.f32.mrf.mxu0
  %194 = vdwg.mxu0
  %s195 = scalar_lea.vmem %s1, 48
  %v196 = vld [vmem:[%s195] sm:$0xf]
  %v197 = vld [vmem:[%s195 + $0x4] sm:$0xf]
  %v198 = vld [vmem:[%s195 + $0x8] sm:$0xf]
  %v199 = vld [vmem:[%s195 + $0xc] sm:$0xf]
  %v204 = vunpack.c.l.b16 %v196
  %v205 = vunpack.c.l.b16 %v197
  %v206 = vunpack.c.l.b16 %v198
  %v207 = vunpack.c.l.b16 %v199
  %v208 = vpack.c.b16 %v205, %v204
  %v209 = vpack.c.b16 %v207, %v206
  %212 = vmatpush.bf16.msra.mxu0 0
  %213 = vmatpush.bf16.msra.mxu0 0
  %214 = vmatpush.bf16.msra.mxu0 0
  %215 = vmatpush.bf16.msra.mxu0 0
  %216 = vmatpush.bf16.msra.mxu0 0
  %217 = vmatpush.bf16.msra.mxu0 0
  %218 = vmatpush.bf16.msra.mxu0 %v209
  %219 = vmatpush.bf16.msra.mxu0 %v208
  %220 = vmatmul.bf16.gmra.mxu0 %v120
  %v221 = vpop.f32.mrf.mxu0
  %v222 = vadd.f32 0.0, %v221
  %v223 = vpop.f32.mrf.mxu0
  %224 = vdwg.mxu0
  %s225 = scalar_lea.vmem %s1, 64
  %v226 = vld [vmem:[%s225] sm:$0xf]
  %v227 = vld [vmem:[%s225 + $0x4] sm:$0xf]
  %v228 = vld [vmem:[%s225 + $0x8] sm:$0xf]
  %v229 = vld [vmem:[%s225 + $0xc] sm:$0xf]
  %v234 = vunpack.c.l.b16 %v226
  %v235 = vunpack.c.l.b16 %v227
  %v236 = vunpack.c.l.b16 %v228
  %v237 = vunpack.c.l.b16 %v229
  %v238 = vpack.c.b16 %v235, %v234
  %v239 = vpack.c.b16 %v237, %v236
  %242 = vmatpush.bf16.msra.mxu0 0
  %243 = vmatpush.bf16.msra.mxu0 0
  %244 = vmatpush.bf16.msra.mxu0 0
  %245 = vmatpush.bf16.msra.mxu0 0
  %246 = vmatpush.bf16.msra.mxu0 0
  %247 = vmatpush.bf16.msra.mxu0 0
  %248 = vmatpush.bf16.msra.mxu0 %v239
  %249 = vmatpush.bf16.msra.mxu0 %v238
  %250 = vmatmul.bf16.gmra.mxu0 %v120
  %v251 = vpop.f32.mrf.mxu0
  %v252 = vadd.f32 0.0, %v251
  %v253 = vpop.f32.mrf.mxu0
  %254 = vdwg.mxu0
  %v255 = vld [vmem:[%s5] sm:$0xff]
  %257 = vset.pattern.permute.xlu0 0
  %258 = vperm.xlu0 %257, %v255
  %v259 = vpop.permute.xlu0 %258
  %vm261 = vcmask 326656
  %v263 = vsel %vm261, %v100, 0
  %265 = vmatpush.msra.mxu0 0.0
  %266 = vmatpush.msra.mxu0 0.0
  %267 = vmatpush.msra.mxu0 0.0
  %268 = vmatpush.msra.mxu0 0.0
  %269 = vmatpush.msra.mxu0 0.0
  %270 = vmatpush.msra.mxu0 0.0
  %271 = vmatpush.msra.mxu0 0.0
  %272 = vmatpush.msra.mxu0 0.0
  %273 = vmatpush.msra.mxu0 0.0
  %274 = vmatpush.msra.mxu0 0.0
  %275 = vmatpush.msra.mxu0 0.0
  %276 = vmatpush.msra.mxu0 %v252
  %277 = vmatpush.msra.mxu0 %v222
  %278 = vmatpush.msra.mxu0 %v192
  %279 = vmatpush.msra.mxu0 %v162
  %280 = vmatpush.msra.mxu0 %v132
  %281 = vmatmul.f32.gmra.mxu0 %v263
  %v282 = vpop.f32.mrf.mxu0
  %v283 = vadd.f32 %v259, %v282
  %284 = vdwg.mxu0
  %v285 = vmax.f32 %v283, 0.0
  %v286 = vld [vmem:[%s6] sm:$0x3]
  %v287 = vpack.c.bf16 %v285, %v285
  %v289 = vsel %vm118, %v287, 0
  %291 = vmatpush.bf16.msra.mxu0 0
  %292 = vmatpush.bf16.msra.mxu0 0
  %293 = vmatpush.bf16.msra.mxu0 0
  %294 = vmatpush.bf16.msra.mxu0 0
  %295 = vmatpush.bf16.msra.mxu0 0
  %296 = vmatpush.bf16.msra.mxu0 0
  %297 = vmatpush.bf16.msra.mxu0 %v115
  %298 = vmatpush.bf16.msra.mxu0 %v114
  %299 = vmatmul.bf16.gmra.mxu0 %v289
  %v300 = vpop.f32.mrf.mxu0
  %v301 = vadd.f32 0.0, %v300
  %v302 = vpop.f32.mrf.mxu0
  %303 = vdwg.mxu0
  %304 = vmatpush.bf16.msra.mxu0 0
  %305 = vmatpush.bf16.msra.mxu0 0
  %306 = vmatpush.bf16.msra.mxu0 0
  %307 = vmatpush.bf16.msra.mxu0 0
  %308 = vmatpush.bf16.msra.mxu0 0
  %309 = vmatpush.bf16.msra.mxu0 0
  %310 = vmatpush.bf16.msra.mxu0 %v149
  %311 = vmatpush.bf16.msra.mxu0 %v148
  %312 = vmatmul.bf16.gmra.mxu0 %v289
  %v313 = vpop.f32.mrf.mxu0
  %v314 = vadd.f32 0.0, %v313
  %v315 = vpop.f32.mrf.mxu0
  %316 = vdwg.mxu0
  %317 = vmatpush.bf16.msra.mxu0 0
  %318 = vmatpush.bf16.msra.mxu0 0
  %319 = vmatpush.bf16.msra.mxu0 0
  %320 = vmatpush.bf16.msra.mxu0 0
  %321 = vmatpush.bf16.msra.mxu0 0
  %322 = vmatpush.bf16.msra.mxu0 0
  %323 = vmatpush.bf16.msra.mxu0 %v179
  %324 = vmatpush.bf16.msra.mxu0 %v178
  %325 = vmatmul.bf16.gmra.mxu0 %v289
  %v326 = vpop.f32.mrf.mxu0
  %v327 = vadd.f32 0.0, %v326
  %v328 = vpop.f32.mrf.mxu0
  %329 = vdwg.mxu0
  %330 = vmatpush.bf16.msra.mxu0 0
  %331 = vmatpush.bf16.msra.mxu0 0
  %332 = vmatpush.bf16.msra.mxu0 0
  %333 = vmatpush.bf16.msra.mxu0 0
  %334 = vmatpush.bf16.msra.mxu0 0
  %335 = vmatpush.bf16.msra.mxu0 0
  %336 = vmatpush.bf16.msra.mxu0 %v209
  %337 = vmatpush.bf16.msra.mxu0 %v208
  %338 = vmatmul.bf16.gmra.mxu0 %v289
  %v339 = vpop.f32.mrf.mxu0
  %v340 = vadd.f32 0.0, %v339
  %v341 = vpop.f32.mrf.mxu0
  %342 = vdwg.mxu0
  %343 = vmatpush.bf16.msra.mxu0 0
  %344 = vmatpush.bf16.msra.mxu0 0
  %345 = vmatpush.bf16.msra.mxu0 0
  %346 = vmatpush.bf16.msra.mxu0 0
  %347 = vmatpush.bf16.msra.mxu0 0
  %348 = vmatpush.bf16.msra.mxu0 0
  %349 = vmatpush.bf16.msra.mxu0 %v239
  %350 = vmatpush.bf16.msra.mxu0 %v238
  %351 = vmatmul.bf16.gmra.mxu0 %v289
  %v352 = vpop.f32.mrf.mxu0
  %v353 = vadd.f32 0.0, %v352
  %v354 = vpop.f32.mrf.mxu0
  %355 = vdwg.mxu0
  %v356 = vld [vmem:[%s7] sm:$0x3]
  %358 = vset.pattern.permute.xlu0 0
  %359 = vperm.xlu0 %358, %v356
  %v360 = vpop.permute.xlu0 %359
  %v363 = vsel %vm261, %v286, 0
  %365 = vmatpush.msra.mxu0 0.0
  %366 = vmatpush.msra.mxu0 0.0
  %367 = vmatpush.msra.mxu0 0.0
  %368 = vmatpush.msra.mxu0 0.0
  %369 = vmatpush.msra.mxu0 0.0
  %370 = vmatpush.msra.mxu0 0.0
  %371 = vmatpush.msra.mxu0 0.0
  %372 = vmatpush.msra.mxu0 0.0
  %373 = vmatpush.msra.mxu0 0.0
  %374 = vmatpush.msra.mxu0 0.0
  %375 = vmatpush.msra.mxu0 0.0
  %376 = vmatpush.msra.mxu0 %v353
  %377 = vmatpush.msra.mxu0 %v340
  %378 = vmatpush.msra.mxu0 %v327
  %379 = vmatpush.msra.mxu0 %v314
  %380 = vmatpush.msra.mxu0 %v301
  %381 = vmatmul.f32.gmra.mxu0 %v363
  %v382 = vpop.f32.mrf.mxu0
  %v383 = vadd.f32 %v360, %v382
  %384 = vdwg.mxu0
  %v386 = vrot.slane %v383, 1
  %v388 = vsub.f32 %v383, %v386
  %v389 = vmul.f32 %v388, 1.442695
  %v390 = vpow.pop %v389
  %v391 = vadd.f32 %v390, 1.0
  %v392 = vrcp.pop %v391
  %v393 = vmul.f32 %v391, %v392
  %v394 = vsub.f32 1.0, %v393
  %v395 = vmul.f32 %v392, %v394
  %v396 = vadd.f32 %v392, %v395
  %vm397 = vweird.f32 %v391
  %vm398 = vweird.f32 %v392
  %vm399 = vmor %vm397, %vm398
  %v400 = vsel %vm399, %v392, %v396
  %v401 = vand.u32 2147483647, %v391
  %vm402 = vcmp.eq.f32.partialorder %v401, 8.507059e+37
  %v403 = vand.u32 %v391, 2147483648
  %v404 = vor.u32 1.1754944e-38, %v403
  %v405 = vsel %vm402, %v404, %v400
  %v406 = vmul.f32 1.0, %v405
  %v407 = vld [vmem:[%s8] sm:$0xff]
  %v408 = vld [vmem:[%s8 + $0x8] sm:$0xff]
  %v409 = vld [vmem:[%s8 + $0x10] sm:$0xff]
  %v410 = vld [vmem:[%s8 + $0x18] sm:$0xff]
  %v411 = vpack.c.bf16 %v67, %v66
  %v413 = vsel %vm118, %v411, 0
  %415 = vmatpush.bf16.msra.mxu0 0
  %416 = vmatpush.bf16.msra.mxu0 0
  %417 = vmatpush.bf16.msra.mxu0 0
  %418 = vmatpush.bf16.msra.mxu0 0
  %419 = vmatpush.bf16.msra.mxu0 0
  %420 = vmatpush.bf16.msra.mxu0 0
  %421 = vmatpush.bf16.msra.mxu0 %v115
  %422 = vmatpush.bf16.msra.mxu0 %v114
  %423 = vmatmul.bf16.gmra.mxu0 %v413
  %v424 = vpop.f32.mrf.mxu0
  %v425 = vadd.f32 0.0, %v424
  %v426 = vpop.f32.mrf.mxu0
  %v427 = vadd.f32 0.0, %v426
  %428 = vdwg.mxu0
  %429 = vmatpush.bf16.msra.mxu0 0
  %430 = vmatpush.bf16.msra.mxu0 0
  %431 = vmatpush.bf16.msra.mxu0 0
  %432 = vmatpush.bf16.msra.mxu0 0
  %433 = vmatpush.bf16.msra.mxu0 0
  %434 = vmatpush.bf16.msra.mxu0 0
  %435 = vmatpush.bf16.msra.mxu0 %v149
  %436 = vmatpush.bf16.msra.mxu0 %v148
  %437 = vmatmul.bf16.gmra.mxu0 %v413
  %v438 = vpop.f32.mrf.mxu0
  %v439 = vadd.f32 0.0, %v438
  %v440 = vpop.f32.mrf.mxu0
  %v441 = vadd.f32 0.0, %v440
  %442 = vdwg.mxu0
  %443 = vmatpush.bf16.msra.mxu0 0
  %444 = vmatpush.bf16.msra.mxu0 0
  %445 = vmatpush.bf16.msra.mxu0 0
  %446 = vmatpush.bf16.msra.mxu0 0
  %447 = vmatpush.bf16.msra.mxu0 0
  %448 = vmatpush.bf16.msra.mxu0 0
  %449 = vmatpush.bf16.msra.mxu0 %v179
  %450 = vmatpush.bf16.msra.mxu0 %v178
  %451 = vmatmul.bf16.gmra.mxu0 %v413
  %v452 = vpop.f32.mrf.mxu0
  %v453 = vadd.f32 0.0, %v452
  %v454 = vpop.f32.mrf.mxu0
  %v455 = vadd.f32 0.0, %v454
  %456 = vdwg.mxu0
  %457 = vmatpush.bf16.msra.mxu0 0
  %458 = vmatpush.bf16.msra.mxu0 0
  %459 = vmatpush.bf16.msra.mxu0 0
  %460 = vmatpush.bf16.msra.mxu0 0
  %461 = vmatpush.bf16.msra.mxu0 0
  %462 = vmatpush.bf16.msra.mxu0 0
  %463 = vmatpush.bf16.msra.mxu0 %v209
  %464 = vmatpush.bf16.msra.mxu0 %v208
  %465 = vmatmul.bf16.gmra.mxu0 %v413
  %v466 = vpop.f32.mrf.mxu0
  %v467 = vadd.f32 0.0, %v466
  %v468 = vpop.f32.mrf.mxu0
  %v469 = vadd.f32 0.0, %v468
  %470 = vdwg.mxu0
  %471 = vmatpush.bf16.msra.mxu0 0
  %472 = vmatpush.bf16.msra.mxu0 0
  %473 = vmatpush.bf16.msra.mxu0 0
  %474 = vmatpush.bf16.msra.mxu0 0
  %475 = vmatpush.bf16.msra.mxu0 0
  %476 = vmatpush.bf16.msra.mxu0 0
  %477 = vmatpush.bf16.msra.mxu0 %v239
  %478 = vmatpush.bf16.msra.mxu0 %v238
  %479 = vmatmul.bf16.gmra.mxu0 %v413
  %v480 = vpop.f32.mrf.mxu0
  %v481 = vadd.f32 0.0, %v480
  %v482 = vpop.f32.mrf.mxu0
  %v483 = vadd.f32 0.0, %v482
  %484 = vdwg.mxu0
  %v485 = vld [vmem:[%s9] sm:$0xff]
  %v486 = vld [vmem:[%s9 + $0x8] sm:$0xff]
  %v487 = vld [vmem:[%s9 + $0x10] sm:$0xff]
  %v488 = vld [vmem:[%s9 + $0x18] sm:$0xff]
  %490 = vset.pattern.permute.xlu0 0
  %491 = vperm.xlu0 %490, %v485
  %v492 = vpop.permute.xlu0 %491
  %495 = vset.pattern.permute.xlu0 0
  %496 = vperm.xlu0 %495, %v486
  %v497 = vpop.permute.xlu0 %496
  %500 = vset.pattern.permute.xlu0 0
  %501 = vperm.xlu0 %500, %v487
  %v502 = vpop.permute.xlu0 %501
  %505 = vset.pattern.permute.xlu0 0
  %506 = vperm.xlu0 %505, %v488
  %v507 = vpop.permute.xlu0 %506
  %vm509 = vcmask 654336
  %v511 = vsel %vm509, %v407, 0
  %v514 = vsel %vm509, %v408, 0
  %v517 = vsel %vm509, %v409, 0
  %v520 = vsel %vm509, %v410, 0
  %522 = vmatpush.msra.mxu0 0.0
  %523 = vmatpush.msra.mxu0 0.0
  %524 = vmatpush.msra.mxu0 0.0
  %525 = vmatpush.msra.mxu0 0.0
  %526 = vmatpush.msra.mxu0 0.0
  %527 = vmatpush.msra.mxu0 0.0
  %528 = vmatpush.msra.mxu0 %v483
  %529 = vmatpush.msra.mxu0 %v481
  %530 = vmatpush.msra.mxu0 %v469
  %531 = vmatpush.msra.mxu0 %v467
  %532 = vmatpush.msra.mxu0 %v455
  %533 = vmatpush.msra.mxu0 %v453
  %534 = vmatpush.msra.mxu0 %v441
  %535 = vmatpush.msra.mxu0 %v439
  %536 = vmatpush.msra.mxu0 %v427
  %537 = vmatpush.msra.mxu0 %v425
  %538 = vmatmul.f32.gmra.mxu0 %v511
  %v539 = vpop.f32.mrf.mxu0
  %v540 = vadd.f32 %v492, %v539
  %541 = vmatmul.f32.gmra.mxu0 %v514
  %v542 = vpop.f32.mrf.mxu0
  %v543 = vadd.f32 %v497, %v542
  %544 = vmatmul.f32.gmra.mxu0 %v517
  %v545 = vpop.f32.mrf.mxu0
  %v546 = vadd.f32 %v502, %v545
  %547 = vmatmul.f32.gmra.mxu0 %v520
  %v548 = vpop.f32.mrf.mxu0
  %v549 = vadd.f32 %v507, %v548
  %550 = vdwg.mxu0
  %v551 = vmax.f32 %v540, 0.0
  %v552 = vmax.f32 %v543, 0.0
  %v553 = vmax.f32 %v546, 0.0
  %v554 = vmax.f32 %v549, 0.0
  %v555 = vld [vmem:[%s10] sm:$0xff]
  %v556 = vld [vmem:[%s10 + $0x8] sm:$0xff]
  %v557 = vld [vmem:[%s10 + $0x10] sm:$0xff]
  %v558 = vld [vmem:[%s10 + $0x18] sm:$0xff]
  %560 = vset.pattern.permute.xlu0 0
  %561 = vperm.xlu0 %560, %v555
  %v562 = vpop.permute.xlu0 %561
  %565 = vset.pattern.permute.xlu0 0
  %566 = vperm.xlu0 %565, %v556
  %v567 = vpop.permute.xlu0 %566
  %570 = vset.pattern.permute.xlu0 0
  %571 = vperm.xlu0 %570, %v557
  %v572 = vpop.permute.xlu0 %571
  %575 = vset.pattern.permute.xlu0 0
  %576 = vperm.xlu0 %575, %v558
  %v577 = vpop.permute.xlu0 %576
  %v579 = vperm.slane %v406, 0
  %v580 = vmul.f32 %v562, %v579
  %v581 = vmul.f32 %v567, %v579
  %v582 = vmul.f32 %v572, %v579
  %v583 = vmul.f32 %v577, %v579
  %v584 = vld [vmem:[%s11] sm:$0xff]
  %v585 = vld [vmem:[%s11 + $0x8] sm:$0xff]
  %v586 = vld [vmem:[%s11 + $0x10] sm:$0xff]
  %v587 = vld [vmem:[%s11 + $0x18] sm:$0xff]
  %589 = vset.pattern.permute.xlu0 0
  %590 = vperm.xlu0 %589, %v584
  %v591 = vpop.permute.xlu0 %590
  %594 = vset.pattern.permute.xlu0 0
  %595 = vperm.xlu0 %594, %v585
  %v596 = vpop.permute.xlu0 %595
  %599 = vset.pattern.permute.xlu0 0
  %600 = vperm.xlu0 %599, %v586
  %v601 = vpop.permute.xlu0 %600
  %604 = vset.pattern.permute.xlu0 0
  %605 = vperm.xlu0 %604, %v587
  %v606 = vpop.permute.xlu0 %605
  %v608 = vadd.f32 %v580, %v591
  %v609 = vadd.f32 %v581, %v596
  %v610 = vadd.f32 %v582, %v601
  %v611 = vadd.f32 %v583, %v606
  %v612 = vmul.f32 %v551, %v608
  %v613 = vmul.f32 %v552, %v609
  %v614 = vmul.f32 %v553, %v610
  %v615 = vmul.f32 %v554, %v611
  %v616 = vld [vmem:[%s12] sm:$0xff]
  %v617 = vld [vmem:[%s12 + $0x8] sm:$0xff]
  %v618 = vld [vmem:[%s12 + $0x10] sm:$0xff]
  %v619 = vld [vmem:[%s12 + $0x18] sm:$0xff]
  %v620 = vld [vmem:[%s12 + $0x20] sm:$0xff]
  %v621 = vld [vmem:[%s12 + $0x28] sm:$0xff]
  %v622 = vld [vmem:[%s12 + $0x30] sm:$0xff]
  %v623 = vld [vmem:[%s12 + $0x38] sm:$0xff]
  %v624 = vpack.c.bf16 %v613, %v612
  %v625 = vpack.c.bf16 %v615, %v614
  %v627 = vsel %vm118, %v624, 0
  %v630 = vsel %vm118, %v625, 0
  %632 = vmatpush.bf16.msra.mxu0 0
  %633 = vmatpush.bf16.msra.mxu0 0
  %634 = vmatpush.bf16.msra.mxu0 0
  %635 = vmatpush.bf16.msra.mxu0 0
  %636 = vmatpush.bf16.msra.mxu0 0
  %637 = vmatpush.bf16.msra.mxu0 0
  %638 = vmatpush.bf16.msra.mxu0 %v115
  %639 = vmatpush.bf16.msra.mxu0 %v114
  %640 = vmatmul.bf16.gmra.mxu0 %v627
  %v641 = vpop.f32.mrf.mxu0
  %v642 = vadd.f32 0.0, %v641
  %v643 = vpop.f32.mrf.mxu0
  %v644 = vadd.f32 0.0, %v643
  %645 = vmatmul.bf16.gmra.mxu0 %v630
  %v646 = vpop.f32.mrf.mxu0
  %v647 = vadd.f32 0.0, %v646
  %v648 = vpop.f32.mrf.mxu0
  %v649 = vadd.f32 0.0, %v648
  %650 = vdwg.mxu0
  %651 = vmatpush.bf16.msra.mxu0 0
  %652 = vmatpush.bf16.msra.mxu0 0
  %653 = vmatpush.bf16.msra.mxu0 0
  %654 = vmatpush.bf16.msra.mxu0 0
  %655 = vmatpush.bf16.msra.mxu0 0
  %656 = vmatpush.bf16.msra.mxu0 0
  %657 = vmatpush.bf16.msra.mxu0 %v149
  %658 = vmatpush.bf16.msra.mxu0 %v148
  %659 = vmatmul.bf16.gmra.mxu0 %v627
  %v660 = vpop.f32.mrf.mxu0
  %v661 = vadd.f32 0.0, %v660
  %v662 = vpop.f32.mrf.mxu0
  %v663 = vadd.f32 0.0, %v662
  %664 = vmatmul.bf16.gmra.mxu0 %v630
  %v665 = vpop.f32.mrf.mxu0
  %v666 = vadd.f32 0.0, %v665
  %v667 = vpop.f32.mrf.mxu0
  %v668 = vadd.f32 0.0, %v667
  %669 = vdwg.mxu0
  %670 = vmatpush.bf16.msra.mxu0 0
  %671 = vmatpush.bf16.msra.mxu0 0
  %672 = vmatpush.bf16.msra.mxu0 0
  %673 = vmatpush.bf16.msra.mxu0 0
  %674 = vmatpush.bf16.msra.mxu0 0
  %675 = vmatpush.bf16.msra.mxu0 0
  %676 = vmatpush.bf16.msra.mxu0 %v179
  %677 = vmatpush.bf16.msra.mxu0 %v178
  %678 = vmatmul.bf16.gmra.mxu0 %v627
  %v679 = vpop.f32.mrf.mxu0
  %v680 = vadd.f32 0.0, %v679
  %v681 = vpop.f32.mrf.mxu0
  %v682 = vadd.f32 0.0, %v681
  %683 = vmatmul.bf16.gmra.mxu0 %v630
  %v684 = vpop.f32.mrf.mxu0
  %v685 = vadd.f32 0.0, %v684
  %v686 = vpop.f32.mrf.mxu0
  %v687 = vadd.f32 0.0, %v686
  %688 = vdwg.mxu0
  %689 = vmatpush.bf16.msra.mxu0 0
  %690 = vmatpush.bf16.msra.mxu0 0
  %691 = vmatpush.bf16.msra.mxu0 0
  %692 = vmatpush.bf16.msra.mxu0 0
  %693 = vmatpush.bf16.msra.mxu0 0
  %694 = vmatpush.bf16.msra.mxu0 0
  %695 = vmatpush.bf16.msra.mxu0 %v209
  %696 = vmatpush.bf16.msra.mxu0 %v208
  %697 = vmatmul.bf16.gmra.mxu0 %v627
  %v698 = vpop.f32.mrf.mxu0
  %v699 = vadd.f32 0.0, %v698
  %v700 = vpop.f32.mrf.mxu0
  %v701 = vadd.f32 0.0, %v700
  %702 = vmatmul.bf16.gmra.mxu0 %v630
  %v703 = vpop.f32.mrf.mxu0
  %v704 = vadd.f32 0.0, %v703
  %v705 = vpop.f32.mrf.mxu0
  %v706 = vadd.f32 0.0, %v705
  %707 = vdwg.mxu0
  %708 = vmatpush.bf16.msra.mxu0 0
  %709 = vmatpush.bf16.msra.mxu0 0
  %710 = vmatpush.bf16.msra.mxu0 0
  %711 = vmatpush.bf16.msra.mxu0 0
  %712 = vmatpush.bf16.msra.mxu0 0
  %713 = vmatpush.bf16.msra.mxu0 0
  %714 = vmatpush.bf16.msra.mxu0 %v239
  %715 = vmatpush.bf16.msra.mxu0 %v238
  %716 = vmatmul.bf16.gmra.mxu0 %v627
  %v717 = vpop.f32.mrf.mxu0
  %v718 = vadd.f32 0.0, %v717
  %v719 = vpop.f32.mrf.mxu0
  %v720 = vadd.f32 0.0, %v719
  %721 = vmatmul.bf16.gmra.mxu0 %v630
  %v722 = vpop.f32.mrf.mxu0
  %v723 = vadd.f32 0.0, %v722
  %v724 = vpop.f32.mrf.mxu0
  %v725 = vadd.f32 0.0, %v724
  %726 = vdwg.mxu0
  %v727 = vld [vmem:[%s13] sm:$0xff]
  %v728 = vld [vmem:[%s13 + $0x8] sm:$0xff]
  %v729 = vld [vmem:[%s13 + $0x10] sm:$0xff]
  %v730 = vld [vmem:[%s13 + $0x18] sm:$0xff]
  %732 = vset.pattern.permute.xlu0 0
  %733 = vperm.xlu0 %732, %v727
  %v734 = vpop.permute.xlu0 %733
  %737 = vset.pattern.permute.xlu0 0
  %738 = vperm.xlu0 %737, %v728
  %v739 = vpop.permute.xlu0 %738
  %742 = vset.pattern.permute.xlu0 0
  %743 = vperm.xlu0 %742, %v729
  %v744 = vpop.permute.xlu0 %743
  %747 = vset.pattern.permute.xlu0 0
  %748 = vperm.xlu0 %747, %v730
  %v749 = vpop.permute.xlu0 %748
  %v752 = vsel %vm118, %v617, 0
  %v755 = vsel %vm118, %v619, 0
  %v758 = vsel %vm118, %v621, 0
  %v761 = vsel %vm118, %v623, 0
  %763 = vmatpush.msra.mxu0 %v706
  %764 = vmatpush.msra.mxu0 %v704
  %765 = vmatpush.msra.mxu0 %v701
  %766 = vmatpush.msra.mxu0 %v699
  %767 = vmatpush.msra.mxu0 %v687
  %768 = vmatpush.msra.mxu0 %v685
  %769 = vmatpush.msra.mxu0 %v682
  %770 = vmatpush.msra.mxu0 %v680
  %771 = vmatpush.msra.mxu0 %v668
  %772 = vmatpush.msra.mxu0 %v666
  %773 = vmatpush.msra.mxu0 %v663
  %774 = vmatpush.msra.mxu0 %v661
  %775 = vmatpush.msra.mxu0 %v649
  %776 = vmatpush.msra.mxu0 %v647
  %777 = vmatpush.msra.mxu0 %v644
  %778 = vmatpush.msra.mxu0 %v642
  %779 = vmatmul.f32.gmra.mxu0 %v616
  %v780 = vpop.f32.mrf.mxu0
  %v781 = vadd.f32 %v734, %v780
  %782 = vmatmul.f32.gmra.mxu0 %v618
  %v783 = vpop.f32.mrf.mxu0
  %v784 = vadd.f32 %v739, %v783
  %785 = vmatmul.f32.gmra.mxu0 %v620
  %v786 = vpop.f32.mrf.mxu0
  %v787 = vadd.f32 %v744, %v786
  %788 = vmatmul.f32.gmra.mxu0 %v622
  %v789 = vpop.f32.mrf.mxu0
  %v790 = vadd.f32 %v749, %v789
  %791 = vdwg.mxu0
  %792 = vmatpush.msra.mxu0 0.0
  %793 = vmatpush.msra.mxu0 0.0
  %794 = vmatpush.msra.mxu0 0.0
  %795 = vmatpush.msra.mxu0 0.0
  %796 = vmatpush.msra.mxu0 0.0
  %797 = vmatpush.msra.mxu0 0.0
  %798 = vmatpush.msra.mxu0 0.0
  %799 = vmatpush.msra.mxu0 0.0
  %800 = vmatpush.msra.mxu0 0.0
  %801 = vmatpush.msra.mxu0 0.0
  %802 = vmatpush.msra.mxu0 0.0
  %803 = vmatpush.msra.mxu0 0.0
  %804 = vmatpush.msra.mxu0 %v725
  %805 = vmatpush.msra.mxu0 %v723
  %806 = vmatpush.msra.mxu0 %v720
  %807 = vmatpush.msra.mxu0 %v718
  %808 = vmatmul.f32.gmra.mxu0 %v752
  %v809 = vpop.f32.mrf.mxu0
  %v810 = vadd.f32 %v781, %v809
  %811 = vmatmul.f32.gmra.mxu0 %v755
  %v812 = vpop.f32.mrf.mxu0
  %v813 = vadd.f32 %v784, %v812
  %814 = vmatmul.f32.gmra.mxu0 %v758
  %v815 = vpop.f32.mrf.mxu0
  %v816 = vadd.f32 %v787, %v815
  %817 = vmatmul.f32.gmra.mxu0 %v761
  %v818 = vpop.f32.mrf.mxu0
  %v819 = vadd.f32 %v790, %v818
  %820 = vdwg.mxu0
  %v821 = vmax.f32 %v810, 0.0
  %v822 = vmax.f32 %v813, 0.0
  %v823 = vmax.f32 %v816, 0.0
  %v824 = vmax.f32 %v819, 0.0
  %v825 = vld [vmem:[%s14] sm:$0xff]
  %v826 = vld [vmem:[%s14 + $0x8] sm:$0xff]
  %v827 = vld [vmem:[%s14 + $0x10] sm:$0xff]
  %v828 = vld [vmem:[%s14 + $0x18] sm:$0xff]
  %830 = vset.pattern.permute.xlu0 0
  %831 = vperm.xlu0 %830, %v825
  %v832 = vpop.permute.xlu0 %831
  %835 = vset.pattern.permute.xlu0 0
  %836 = vperm.xlu0 %835, %v826
  %v837 = vpop.permute.xlu0 %836
  %840 = vset.pattern.permute.xlu0 0
  %841 = vperm.xlu0 %840, %v827
  %v842 = vpop.permute.xlu0 %841
  %845 = vset.pattern.permute.xlu0 0
  %846 = vperm.xlu0 %845, %v828
  %v847 = vpop.permute.xlu0 %846
  %v849 = vmul.f32 %v832, %v579
  %v850 = vmul.f32 %v837, %v579
  %v851 = vmul.f32 %v842, %v579
  %v852 = vmul.f32 %v847, %v579
  %v853 = vld [vmem:[%s15] sm:$0xff]
  %v854 = vld [vmem:[%s15 + $0x8] sm:$0xff]
  %v855 = vld [vmem:[%s15 + $0x10] sm:$0xff]
  %v856 = vld [vmem:[%s15 + $0x18] sm:$0xff]
  %858 = vset.pattern.permute.xlu0 0
  %859 = vperm.xlu0 %858, %v853
  %v860 = vpop.permute.xlu0 %859
  %863 = vset.pattern.permute.xlu0 0
  %864 = vperm.xlu0 %863, %v854
  %v865 = vpop.permute.xlu0 %864
  %868 = vset.pattern.permute.xlu0 0
  %869 = vperm.xlu0 %868, %v855
  %v870 = vpop.permute.xlu0 %869
  %873 = vset.pattern.permute.xlu0 0
  %874 = vperm.xlu0 %873, %v856
  %v875 = vpop.permute.xlu0 %874
  %v877 = vadd.f32 %v849, %v860
  %v878 = vadd.f32 %v850, %v865
  %v879 = vadd.f32 %v851, %v870
  %v880 = vadd.f32 %v852, %v875
  %v881 = vmul.f32 %v821, %v877
  %v882 = vmul.f32 %v822, %v878
  %v883 = vmul.f32 %v823, %v879
  %v884 = vmul.f32 %v824, %v880
  %v885 = vld [vmem:[%s16] sm:$0xff]
  %v886 = vld [vmem:[%s16 + $0x8] sm:$0xff]
  %v887 = vld [vmem:[%s16 + $0x10] sm:$0xff]
  %v888 = vld [vmem:[%s16 + $0x18] sm:$0xff]
  %v889 = vld [vmem:[%s17] sm:$0xff]
  %v890 = vld [vmem:[%s17 + $0x8] sm:$0xff]
  %v891 = vld [vmem:[%s17 + $0x10] sm:$0xff]
  %v892 = vld [vmem:[%s17 + $0x18] sm:$0xff]
  %894 = vset.pattern.permute.xlu0 0
  %895 = vperm.xlu0 %894, %v889
  %v896 = vpop.permute.xlu0 %895
  %899 = vset.pattern.permute.xlu0 0
  %900 = vperm.xlu0 %899, %v890
  %v901 = vpop.permute.xlu0 %900
  %904 = vset.pattern.permute.xlu0 0
  %905 = vperm.xlu0 %904, %v891
  %v906 = vpop.permute.xlu0 %905
  %909 = vset.pattern.permute.xlu0 0
  %910 = vperm.xlu0 %909, %v892
  %v911 = vpop.permute.xlu0 %910
  %vm913 = vcmask 523264
  %v915 = vsel %vm913, %v885, 0
  %v918 = vsel %vm913, %v886, 0
  %v921 = vsel %vm913, %v887, 0
  %v924 = vsel %vm913, %v888, 0
  %926 = vmatpush.msra.mxu0 0.0
  %927 = vmatpush.msra.mxu0 0.0
  %928 = vmatpush.msra.mxu0 0.0
  %929 = vmatpush.msra.mxu0 0.0
  %930 = vmatpush.msra.mxu0 0.0
  %931 = vmatpush.msra.mxu0 0.0
  %932 = vmatpush.msra.mxu0 0.0
  %933 = vmatpush.msra.mxu0 0.0
  %934 = vmatpush.msra.mxu0 %v884
  %935 = vmatpush.msra.mxu0 %v883
  %936 = vmatpush.msra.mxu0 %v882
  %937 = vmatpush.msra.mxu0 %v881
  %938 = vmatpush.msra.mxu0 %v615
  %939 = vmatpush.msra.mxu0 %v614
  %940 = vmatpush.msra.mxu0 %v613
  %941 = vmatpush.msra.mxu0 %v612
  %942 = vmatmul.f32.gmra.mxu0 %v915
  %v943 = vpop.f32.mrf.mxu0
  %v944 = vadd.f32 %v896, %v943
  %945 = vmatmul.f32.gmra.mxu0 %v918
  %v946 = vpop.f32.mrf.mxu0
  %v947 = vadd.f32 %v901, %v946
  %948 = vmatmul.f32.gmra.mxu0 %v921
  %v949 = vpop.f32.mrf.mxu0
  %v950 = vadd.f32 %v906, %v949
  %951 = vmatmul.f32.gmra.mxu0 %v924
  %v952 = vpop.f32.mrf.mxu0
  %v953 = vadd.f32 %v911, %v952
  %954 = vdwg.mxu0
  %v955 = vld [vmem:[%s18] sm:$0xff]
  %v956 = vld [vmem:[%s18 + $0x8] sm:$0xff]
  %v957 = vld [vmem:[%s18 + $0x10] sm:$0xff]
  %v958 = vld [vmem:[%s18 + $0x18] sm:$0xff]
  %v959 = vld [vmem:[%s19] sm:$0xff]
  %v960 = vld [vmem:[%s19 + $0x8] sm:$0xff]
  %v961 = vld [vmem:[%s19 + $0x10] sm:$0xff]
  %v962 = vld [vmem:[%s19 + $0x18] sm:$0xff]
  %964 = vset.pattern.permute.xlu0 0
  %965 = vperm.xlu0 %964, %v959
  %v966 = vpop.permute.xlu0 %965
  %969 = vset.pattern.permute.xlu0 0
  %970 = vperm.xlu0 %969, %v960
  %v971 = vpop.permute.xlu0 %970
  %974 = vset.pattern.permute.xlu0 0
  %975 = vperm.xlu0 %974, %v961
  %v976 = vpop.permute.xlu0 %975
  %979 = vset.pattern.permute.xlu0 0
  %980 = vperm.xlu0 %979, %v962
  %v981 = vpop.permute.xlu0 %980
  %v984 = vsel %vm75, %v955, 0
  %v987 = vsel %vm75, %v956, 0
  %v990 = vsel %vm75, %v957, 0
  %v993 = vsel %vm75, %v958, 0
  %995 = vmatpush.msra.mxu0 0.0
  %996 = vmatpush.msra.mxu0 0.0
  %997 = vmatpush.msra.mxu0 0.0
  %998 = vmatpush.msra.mxu0 0.0
  %999 = vmatpush.msra.mxu0 0.0
  %1000 = vmatpush.msra.mxu0 0.0
  %1001 = vmatpush.msra.mxu0 0.0
  %1002 = vmatpush.msra.mxu0 0.0
  %1003 = vmatpush.msra.mxu0 0.0
  %1004 = vmatpush.msra.mxu0 0.0
  %1005 = vmatpush.msra.mxu0 0.0
  %1006 = vmatpush.msra.mxu0 0.0
  %1007 = vmatpush.msra.mxu0 0.0
  %1008 = vmatpush.msra.mxu0 0.0
  %1009 = vmatpush.msra.mxu0 %v67
  %1010 = vmatpush.msra.mxu0 %v66
  %1011 = vmatmul.f32.gmra.mxu0 %v984
  %v1012 = vpop.f32.mrf.mxu0
  %v1013 = vadd.f32 %v966, %v1012
  %1014 = vmatmul.f32.gmra.mxu0 %v987
  %v1015 = vpop.f32.mrf.mxu0
  %v1016 = vadd.f32 %v971, %v1015
  %1017 = vmatmul.f32.gmra.mxu0 %v990
  %v1018 = vpop.f32.mrf.mxu0
  %v1019 = vadd.f32 %v976, %v1018
  %1020 = vmatmul.f32.gmra.mxu0 %v993
  %v1021 = vpop.f32.mrf.mxu0
  %v1022 = vadd.f32 %v981, %v1021
  %1023 = vdwg.mxu0
  %v1024 = vadd.f32 %v944, %v1013
  %v1025 = vadd.f32 %v947, %v1016
  %v1026 = vadd.f32 %v950, %v1019
  %v1027 = vadd.f32 %v953, %v1022
  %v1028 = vmax.f32 %v1024, 0.0
  %v1029 = vmax.f32 %v1025, 0.0
  %v1030 = vmax.f32 %v1026, 0.0
  %v1031 = vmax.f32 %v1027, 0.0
  %1032 = vst.msk [vmem:[%s20] sm:$0xff] %vm118, %v1028
  %1033 = vst.msk [vmem:[%s20 + $0x8] sm:$0xff] %vm118, %v1029
  %1034 = vst.msk [vmem:[%s20 + $0x10] sm:$0xff] %vm118, %v1030
  %1035 = vst.msk [vmem:[%s20 + $0x18] sm:$0xff] %vm118, %v1031
  // Predicated region
  $region82: #{apply_model.7} parent=0 // pred_check
    _
  $region83: #{apply_model.7} parent=0 // pred_check_branch
    %1037 = sbr.rel (0) target = $region85
  $region84: #{apply_model.7} parent=0 // pred_region
    _
  $region85: #{apply_model.7} parent=0 // pred_fallthru
    _
  // Predicated region
  $region86: #{apply_model.7} parent=0 // pred_check
    _
  $region87: #{apply_model.7} parent=0 // pred_check_branch
    %1039 = sbr.rel (0) target = $region89
  $region88: #{apply_model.7} parent=0 // pred_region
    _
  $region89: #{apply_model.7} parent=0 // pred_fallthru
    _

</llo_original>
